<compile_context>
chip_gen: v6e
topology: v6e:2x2x1
jax: 0.10.0
libtpu: 0.0.40
codegen_flags: <defaults>
</compile_context>

<pallas_src>
import jax
import jax.numpy as jnp
from jax.experimental import pallas as pl
from jax.experimental.pallas import tpu as pltpu

INPUT_DIM = 773
HIDDEN_DIM = 400
LATENT_DIM = 50

LANE = 128


def _round_up(n, m):
    return ((n + m - 1) // m) * m


# Lane-padded feature dims.
IN_P = _round_up(INPUT_DIM, LANE)     # 896
HID_P = _round_up(HIDDEN_DIM, LANE)   # 512
LAT_P = _round_up(LATENT_DIM, LANE)   # 128


def autoencoder_kernel(x_ref,
                       w1_ref, b1_ref,
                       w2_ref, b2_ref,
                       w3_ref, b3_ref,
                       w4_ref, b4_ref,
                       dec_ref, enc_ref):
    """One batch tile per grid step; weights stay VMEM-resident across steps."""
    cdt = w1_ref.dtype  # compute dtype fed to the MXU (bf16)

    x = x_ref[...]

    # encoder: Linear(input -> 400) + ReLU
    h1 = jnp.dot(x, w1_ref[...], preferred_element_type=jnp.float32) + b1_ref[...]
    h1 = jnp.maximum(h1, 0.0)

    # encoder: Linear(400 -> latent) + ReLU
    z = jnp.dot(h1.astype(cdt), w2_ref[...],
                preferred_element_type=jnp.float32) + b2_ref[...]
    z = jnp.maximum(z, 0.0)

    # decoder: Linear(latent -> 400) + ReLU
    h2 = jnp.dot(z.astype(cdt), w3_ref[...],
                 preferred_element_type=jnp.float32) + b3_ref[...]
    h2 = jnp.maximum(h2, 0.0)

    # decoder: Linear(400 -> input) + Sigmoid (EUP path)
    y = jnp.dot(h2.astype(cdt), w4_ref[...],
                preferred_element_type=jnp.float32) + b4_ref[...]
    y = jax.nn.sigmoid(y)

    dec_ref[...] = y.astype(dec_ref.dtype)
    enc_ref[...] = z.astype(enc_ref.dtype)


def _pad_to(a, shape):
    pads = [(0, t - s) for s, t in zip(a.shape, shape)]
    return jnp.pad(a, pads)


def autoencoder_forward(x, params, *, compute_dtype=jnp.bfloat16, block_batch=256):
    """params = (w1, b1, w2, b2, w3, b3, w4, b4); weights are (in, out),
    biases are (1, out). Returns (decoded[B, 773], encoded[B, 50])."""
    w1, b1, w2, b2, w3, b3, w4, b4 = params
    B = x.shape[0]

    # Batch tile: multiple of the sublane packing (16 for bf16, 8 for f32);
    # tiny batches are padded up to one tile.
    sub = 16 if compute_dtype == jnp.bfloat16 else 8
    TB = min(block_batch, _round_up(B, sub))
    Bp = _round_up(B, TB)

    # Zero-pad to lane-aligned shapes; weights/activations go to the MXU in
    # bf16, biases stay f32 (added onto the f32 accumulators).
    xp = _pad_to(x, (Bp, IN_P)).astype(compute_dtype)
    w1p = _pad_to(w1, (IN_P, HID_P)).astype(compute_dtype)
    w2p = _pad_to(w2, (HID_P, LAT_P)).astype(compute_dtype)
    w3p = _pad_to(w3, (LAT_P, HID_P)).astype(compute_dtype)
    w4p = _pad_to(w4, (HID_P, IN_P)).astype(compute_dtype)
    b1p = _pad_to(b1, (1, HID_P)).astype(jnp.float32)
    b2p = _pad_to(b2, (1, LAT_P)).astype(jnp.float32)
    b3p = _pad_to(b3, (1, HID_P)).astype(jnp.float32)
    b4p = _pad_to(b4, (1, IN_P)).astype(jnp.float32)

    grid = (Bp // TB,)

    def resident(shape):
        # Full-array block, constant index map -> DMA'd once, stays in VMEM.
        return pl.BlockSpec(shape, lambda i, _s=shape: (0,) * len(_s))

    in_specs = [
        pl.BlockSpec((TB, IN_P), lambda i: (i, 0)),   # x: tiled over batch
        resident((IN_P, HID_P)), resident((1, HID_P)),
        resident((HID_P, LAT_P)), resident((1, LAT_P)),
        resident((LAT_P, HID_P)), resident((1, HID_P)),
        resident((HID_P, IN_P)), resident((1, IN_P)),
    ]
    out_specs = (
        pl.BlockSpec((TB, IN_P), lambda i: (i, 0)),
        pl.BlockSpec((TB, LAT_P), lambda i: (i, 0)),
    )
    out_shapes = (
        jax.ShapeDtypeStruct((Bp, IN_P), jnp.float32),   # decoded (padded)
        jax.ShapeDtypeStruct((Bp, LAT_P), jnp.float32),  # encoded (padded)
    )

    dec_p, enc_p = pl.pallas_call(
        autoencoder_kernel,
        out_shape=out_shapes,
        grid=grid,
        in_specs=in_specs,
        out_specs=out_specs,
        compiler_params=pltpu.CompilerParams(
            dimension_semantics=("parallel",),   # shard batch tiles across TCs (v7x)
            vmem_limit_bytes=32 << 20,           # ~2 MB weights + double-buffered tiles
        ),
    )(xp, w1p, b1p, w2p, b2p, w3p, b3p, w4p, b4p)

    # Slice back to the logical (unpadded) shapes.
    return dec_p[:B, :INPUT_DIM], enc_p[:B, :LATENT_DIM]


def init_params(key):
    """Deterministic synthetic parameters (PyTorch Linear init, transposed to (in, out))."""
    keys = jax.random.split(key, 8)

    def linear(kw, kb, fan_in, fan_out):
        bound = 1.0 / jnp.sqrt(fan_in)
        w = jax.random.uniform(kw, (fan_in, fan_out), jnp.float32, -bound, bound)
        b = jax.random.uniform(kb, (1, fan_out), jnp.float32, -bound, bound)
        return w, b

    w1, b1 = linear(keys[0], keys[1], INPUT_DIM, HIDDEN_DIM)
    w2, b2 = linear(keys[2], keys[3], HIDDEN_DIM, LATENT_DIM)
    w3, b3 = linear(keys[4], keys[5], LATENT_DIM, HIDDEN_DIM)
    w4, b4 = linear(keys[6], keys[7], HIDDEN_DIM, INPUT_DIM)
    return (w1, b1, w2, b2, w3, b3, w4, b4)


def reference_forward(x, params, compute_dtype=jnp.float32):
    """Pure-JAX reference; compute_dtype mirrors the kernel's MXU input dtype."""
    w1, b1, w2, b2, w3, b3, w4, b4 = params

    def lin(a, w, b):
        return jnp.dot(a.astype(compute_dtype), w.astype(compute_dtype),
                       preferred_element_type=jnp.float32) + b

    h1 = jnp.maximum(lin(x, w1, b1), 0.0)
    z = jnp.maximum(lin(h1, w2, b2), 0.0)
    h2 = jnp.maximum(lin(z, w3, b3), 0.0)
    y = jax.nn.sigmoid(lin(h2, w4, b4))
    return y, z


if __name__ == "__main__":
    key = jax.random.PRNGKey(0)
    k_x, k_p = jax.random.split(key)

    batch = 2
    x = jax.random.uniform(k_x, (batch, INPUT_DIM), jnp.float32)  # bitboard-like input
    params = init_params(k_p)

    decoded, encoded = jax.block_until_ready(autoencoder_forward(x, params))

    assert decoded.shape == (batch, INPUT_DIM) and encoded.shape == (batch, LATENT_DIM)

    # Reference with the same bf16-in / f32-accumulate recipe as the kernel.
    dec_bf, enc_bf = reference_forward(x, params, compute_dtype=jnp.bfloat16)
    assert jnp.allclose(decoded, dec_bf, atol=2e-3, rtol=2e-3), "decoded mismatch (bf16 ref)"
    assert jnp.allclose(encoded, enc_bf, atol=2e-3, rtol=2e-3), "encoded mismatch (bf16 ref)"

    # Sanity check vs full-f32 math (bf16 quantization is the only delta).
    dec_f32, enc_f32 = reference_forward(x, params, compute_dtype=jnp.float32)
    assert jnp.allclose(decoded, dec_f32, atol=5e-2, rtol=5e-2)
    assert jnp.allclose(encoded, enc_f32, atol=5e-2, rtol=5e-2)

    print("KERNEL_OK")
</pallas_src>

<mosaic_0001>
module attributes {stable_mosaic.version = 11 : i64} {
  func.func @autoencoder_kernel(%arg0: i32, %arg1: memref<16x896xbf16, #tpu.memory_space<vmem>>, %arg2: memref<896x512xbf16, #tpu.memory_space<vmem>>, %arg3: memref<1x512xf32, #tpu.memory_space<vmem>>, %arg4: memref<512x128xbf16, #tpu.memory_space<vmem>>, %arg5: memref<1x128xf32, #tpu.memory_space<vmem>>, %arg6: memref<128x512xbf16, #tpu.memory_space<vmem>>, %arg7: memref<1x512xf32, #tpu.memory_space<vmem>>, %arg8: memref<512x896xbf16, #tpu.memory_space<vmem>>, %arg9: memref<1x896xf32, #tpu.memory_space<vmem>>, %arg10: memref<16x896xf32, #tpu.memory_space<vmem>>, %arg11: memref<16x128xf32, #tpu.memory_space<vmem>>) attributes {dimension_semantics = [#tpu.dimension_semantics<parallel>], iteration_bounds = array<i64: 1>, scalar_prefetch = 0 : i64, scratch_operands = 0 : i64, tpu.core_type = #tpu.core_type<tc>, window_params = [{transform_indices = @transform_0, window_bounds = array<i64: 16, 896>}, {pipeline_mode = #tpu.pipeline_mode<synchronous>, transform_indices = @transform_1, window_bounds = array<i64: 896, 512>}, {pipeline_mode = #tpu.pipeline_mode<synchronous>, transform_indices = @transform_2, window_bounds = array<i64: 1, 512>}, {pipeline_mode = #tpu.pipeline_mode<synchronous>, transform_indices = @transform_3, window_bounds = array<i64: 512, 128>}, {pipeline_mode = #tpu.pipeline_mode<synchronous>, transform_indices = @transform_4, window_bounds = array<i64: 1, 128>}, {pipeline_mode = #tpu.pipeline_mode<synchronous>, transform_indices = @transform_5, window_bounds = array<i64: 128, 512>}, {pipeline_mode = #tpu.pipeline_mode<synchronous>, transform_indices = @transform_6, window_bounds = array<i64: 1, 512>}, {pipeline_mode = #tpu.pipeline_mode<synchronous>, transform_indices = @transform_7, window_bounds = array<i64: 512, 896>}, {pipeline_mode = #tpu.pipeline_mode<synchronous>, transform_indices = @transform_8, window_bounds = array<i64: 1, 896>}, {transform_indices = @transform_9, window_bounds = array<i64: 16, 896>}, {transform_indices = @transform_10, window_bounds = array<i64: 16, 128>}]} {
    %c0 = arith.constant 0 : index
    %c0_0 = arith.constant 0 : index
    %0 = vector.load %arg1[%c0, %c0_0] : memref<16x896xbf16, #tpu.memory_space<vmem>>, vector<16x896xbf16>
    %c0_1 = arith.constant 0 : index
    %c0_2 = arith.constant 0 : index
    %1 = vector.load %arg2[%c0_1, %c0_2] : memref<896x512xbf16, #tpu.memory_space<vmem>>, vector<896x512xbf16>
    %cst = arith.constant dense<0.000000e+00> : vector<16x512xf32>
    %2 = tpu.matmul %0, %1, %cst {dimension_numbers = #tpu.dot_dimension_numbers<[1], [0], [0], [1], [0, 0, 1, 1], [], []>} : vector<16x896xbf16>, vector<896x512xbf16>, vector<16x512xf32> -> vector<16x512xf32>
    %c0_3 = arith.constant 0 : index
    %c0_4 = arith.constant 0 : index
    %3 = vector.load %arg3[%c0_3, %c0_4] : memref<1x512xf32, #tpu.memory_space<vmem>>, vector<1x512xf32>
    %4 = vector.broadcast %3 : vector<1x512xf32> to vector<16x512xf32>
    %5 = arith.addf %2, %4 : vector<16x512xf32>
    %cst_5 = arith.constant 0.000000e+00 : f32
    %6 = vector.broadcast %cst_5 : f32 to vector<16x512xf32>
    %7 = arith.maximumf %5, %6 : vector<16x512xf32>
    %8 = arith.truncf %7 : vector<16x512xf32> to vector<16x512xbf16>
    %c0_6 = arith.constant 0 : index
    %c0_7 = arith.constant 0 : index
    %9 = vector.load %arg4[%c0_6, %c0_7] : memref<512x128xbf16, #tpu.memory_space<vmem>>, vector<512x128xbf16>
    %cst_8 = arith.constant dense<0.000000e+00> : vector<16x128xf32>
    %10 = tpu.matmul %8, %9, %cst_8 {dimension_numbers = #tpu.dot_dimension_numbers<[1], [0], [0], [1], [0, 0, 1, 1], [], []>} : vector<16x512xbf16>, vector<512x128xbf16>, vector<16x128xf32> -> vector<16x128xf32>
    %c0_9 = arith.constant 0 : index
    %c0_10 = arith.constant 0 : index
    %11 = vector.load %arg5[%c0_9, %c0_10] : memref<1x128xf32, #tpu.memory_space<vmem>>, vector<1x128xf32>
    %12 = vector.broadcast %11 : vector<1x128xf32> to vector<16x128xf32>
    %13 = arith.addf %10, %12 : vector<16x128xf32>
    %cst_11 = arith.constant 0.000000e+00 : f32
    %14 = vector.broadcast %cst_11 : f32 to vector<16x128xf32>
    %15 = arith.maximumf %13, %14 : vector<16x128xf32>
    %16 = arith.truncf %15 : vector<16x128xf32> to vector<16x128xbf16>
    %c0_12 = arith.constant 0 : index
    %c0_13 = arith.constant 0 : index
    %17 = vector.load %arg6[%c0_12, %c0_13] : memref<128x512xbf16, #tpu.memory_space<vmem>>, vector<128x512xbf16>
    %cst_14 = arith.constant dense<0.000000e+00> : vector<16x512xf32>
    %18 = tpu.matmul %16, %17, %cst_14 {dimension_numbers = #tpu.dot_dimension_numbers<[1], [0], [0], [1], [0, 0, 1, 1], [], []>} : vector<16x128xbf16>, vector<128x512xbf16>, vector<16x512xf32> -> vector<16x512xf32>
    %c0_15 = arith.constant 0 : index
    %c0_16 = arith.constant 0 : index
    %19 = vector.load %arg7[%c0_15, %c0_16] : memref<1x512xf32, #tpu.memory_space<vmem>>, vector<1x512xf32>
    %20 = vector.broadcast %19 : vector<1x512xf32> to vector<16x512xf32>
    %21 = arith.addf %18, %20 : vector<16x512xf32>
    %cst_17 = arith.constant 0.000000e+00 : f32
    %22 = vector.broadcast %cst_17 : f32 to vector<16x512xf32>
    %23 = arith.maximumf %21, %22 : vector<16x512xf32>
    %24 = arith.truncf %23 : vector<16x512xf32> to vector<16x512xbf16>
    %c0_18 = arith.constant 0 : index
    %c0_19 = arith.constant 0 : index
    %25 = vector.load %arg8[%c0_18, %c0_19] : memref<512x896xbf16, #tpu.memory_space<vmem>>, vector<512x896xbf16>
    %cst_20 = arith.constant dense<0.000000e+00> : vector<16x896xf32>
    %26 = tpu.matmul %24, %25, %cst_20 {dimension_numbers = #tpu.dot_dimension_numbers<[1], [0], [0], [1], [0, 0, 1, 1], [], []>} : vector<16x512xbf16>, vector<512x896xbf16>, vector<16x896xf32> -> vector<16x896xf32>
    %c0_21 = arith.constant 0 : index
    %c0_22 = arith.constant 0 : index
    %27 = vector.load %arg9[%c0_21, %c0_22] : memref<1x896xf32, #tpu.memory_space<vmem>>, vector<1x896xf32>
    %28 = vector.broadcast %27 : vector<1x896xf32> to vector<16x896xf32>
    %29 = arith.addf %26, %28 : vector<16x896xf32>
    %30 = arith.negf %29 : vector<16x896xf32>
    %31 = math.exp %30 : vector<16x896xf32>
    %cst_23 = arith.constant 1.000000e+00 : f32
    %32 = vector.broadcast %cst_23 : f32 to vector<16x896xf32>
    %33 = arith.addf %32, %31 : vector<16x896xf32>
    %34 = arith.divf %32, %33 : vector<16x896xf32>
    %c0_24 = arith.constant 0 : index
    %c0_25 = arith.constant 0 : index
    %35 = vector.load %arg10[%c0_24, %c0_25] : memref<16x896xf32, #tpu.memory_space<vmem>>, vector<16x896xf32>
    tpu.vector_store %arg10[%c0_24, %c0_25], %34 {strides = array<i32>} : memref<16x896xf32, #tpu.memory_space<vmem>>, vector<16x896xf32>,
    %c0_26 = arith.constant 0 : index
    %c0_27 = arith.constant 0 : index
    %36 = vector.load %arg11[%c0_26, %c0_27] : memref<16x128xf32, #tpu.memory_space<vmem>>, vector<16x128xf32>
    tpu.vector_store %arg11[%c0_26, %c0_27], %15 {strides = array<i32>} : memref<16x128xf32, #tpu.memory_space<vmem>>, vector<16x128xf32>,
    return
  }
  func.func @transform_0(%arg0: i32) -> (i32, i32) {
    %c0_i32 = arith.constant 0 : i32
    %c0_i32_0 = arith.constant 0 : i32
    return %arg0, %c0_i32 : i32, i32
  }
  func.func @transform_1(%arg0: i32) -> (i32, i32) {
    %c0_i32 = arith.constant 0 : i32
    %c0_i32_0 = arith.constant 0 : i32
    %c0_i32_1 = arith.constant 0 : i32
    return %c0_i32, %c0_i32_0 : i32, i32
  }
  func.func @transform_2(%arg0: i32) -> (i32, i32) {
    %c0_i32 = arith.constant 0 : i32
    %c0_i32_0 = arith.constant 0 : i32
    %c0_i32_1 = arith.constant 0 : i32
    return %c0_i32, %c0_i32_0 : i32, i32
  }
  func.func @transform_3(%arg0: i32) -> (i32, i32) {
    %c0_i32 = arith.constant 0 : i32
    %c0_i32_0 = arith.constant 0 : i32
    %c0_i32_1 = arith.constant 0 : i32
    return %c0_i32, %c0_i32_0 : i32, i32
  }
  func.func @transform_4(%arg0: i32) -> (i32, i32) {
    %c0_i32 = arith.constant 0 : i32
    %c0_i32_0 = arith.constant 0 : i32
    %c0_i32_1 = arith.constant 0 : i32
    return %c0_i32, %c0_i32_0 : i32, i32
  }
  func.func @transform_5(%arg0: i32) -> (i32, i32) {
    %c0_i32 = arith.constant 0 : i32
    %c0_i32_0 = arith.constant 0 : i32
    %c0_i32_1 = arith.constant 0 : i32
    return %c0_i32, %c0_i32_0 : i32, i32
  }
  func.func @transform_6(%arg0: i32) -> (i32, i32) {
    %c0_i32 = arith.constant 0 : i32
    %c0_i32_0 = arith.constant 0 : i32
    %c0_i32_1 = arith.constant 0 : i32
    return %c0_i32, %c0_i32_0 : i32, i32
  }
  func.func @transform_7(%arg0: i32) -> (i32, i32) {
    %c0_i32 = arith.constant 0 : i32
    %c0_i32_0 = arith.constant 0 : i32
    %c0_i32_1 = arith.constant 0 : i32
    return %c0_i32, %c0_i32_0 : i32, i32
  }
  func.func @transform_8(%arg0: i32) -> (i32, i32) {
    %c0_i32 = arith.constant 0 : i32
    %c0_i32_0 = arith.constant 0 : i32
    %c0_i32_1 = arith.constant 0 : i32
    return %c0_i32, %c0_i32_0 : i32, i32
  }
  func.func @transform_9(%arg0: i32) -> (i32, i32) {
    %c0_i32 = arith.constant 0 : i32
    %c0_i32_0 = arith.constant 0 : i32
    return %arg0, %c0_i32 : i32, i32
  }
  func.func @transform_10(%arg0: i32) -> (i32, i32) {
    %c0_i32 = arith.constant 0 : i32
    %c0_i32_0 = arith.constant 0 : i32
    return %arg0, %c0_i32 : i32, i32
  }
}

</mosaic_0001>

<llo_original>
// kernel: tpu_custom_call.1
$region0: #{tpu_custom_call.1}
  #allocation0 [shape = 'u32[]', space=smem, size = 0x4, offset = 0x4, fixed_abs, tag = 'smem constant byte address 0x4 - core index']
  #allocation1 [shape = 'u32[144,128]{1,0:T(1,128)}', space=vmem, size = 0x12000, scoped, tag = 'internal scratch']
  %s0 = inlined_call_operand.hbm [shape: bf16[16,896], index: 0, kind: input, shape index: {}]
  %s1 = inlined_call_operand.hbm [shape: bf16[896,512], index: 1, kind: input, shape index: {}]
  %s2 = inlined_call_operand.hbm [shape: f32[1,512], index: 2, kind: input, shape index: {}]
  %s3 = inlined_call_operand.hbm [shape: bf16[512,128], index: 3, kind: input, shape index: {}]
  %s4 = inlined_call_operand.vmem [shape: f32[1,128], index: 4, kind: input, shape index: {}]
  %s5 = inlined_call_operand.hbm [shape: bf16[128,512], index: 5, kind: input, shape index: {}]
  %s6 = inlined_call_operand.vmem [shape: f32[1,512], index: 6, kind: input, shape index: {}]
  %s7 = inlined_call_operand.hbm [shape: bf16[512,896], index: 7, kind: input, shape index: {}]
  %s8 = inlined_call_operand.vmem [shape: f32[1,896], index: 8, kind: input, shape index: {}]
  %s9 = inlined_call_operand.hbm [shape: f32[16,896], index: 9, kind: output, shape index: {0}]
  %s10 = inlined_call_operand.hbm [shape: f32[16,128], index: 10, kind: output, shape index: {1}]
  %11 = xla_tuple %s9, %s10
  %s12 = sld [smem:[#allocation0]]
  $region78: #{tpu_custom_call.1} parent=0
    _
  %s14 = ssub.s32 1, %s12
  %s15 = scalar_select 0, %s14, %s12
  $region1: #{tpu_custom_call.1} parent=0
    #allocation2 [shape = 'u8[28672]{0}', space=vmem, size = 0x7000, scoped, tag = 'input window, operand 0, single buffered']
    #allocation3 [shape = 's32[1]{0}', space=sflag, size = 0x4, scoped, tag = 'scoped memory for tpu_custom_call.1']
    #allocation4 [shape = 's32[1]{0}', space=sflag, size = 0x4, scoped, tag = 'scoped memory for tpu_custom_call.1']
    #allocation5 [shape = 'u8[917504]{0}', space=vmem, size = 0xe0000, scoped, tag = 'input window, operand 1, single buffered']
    #allocation6 [shape = 's32[1]{0}', space=sflag, size = 0x4, scoped, tag = 'scoped memory for tpu_custom_call.1']
    #allocation7 [shape = 'u8[2048]{0}', space=vmem, size = 0x800, scoped, tag = 'input window, operand 2, single buffered']
    #allocation8 [shape = 'u8[131072]{0}', space=vmem, size = 0x20000, scoped, tag = 'input window, operand 3, single buffered']
    #allocation9 [shape = 's32[1]{0}', space=sflag, size = 0x4, scoped, tag = 'scoped memory for tpu_custom_call.1']
    #allocation10 [shape = 'u8[131072]{0}', space=vmem, size = 0x20000, scoped, tag = 'input window, operand 5, single buffered']
    #allocation11 [shape = 'u8[917504]{0}', space=vmem, size = 0xe0000, scoped, tag = 'input window, operand 7, single buffered']
    #allocation12 [shape = 's32[1]{0}', space=sflag, size = 0x4, scoped, tag = 'scoped memory for tpu_custom_call.1']
    #allocation13 [shape = 'u8[57344]{0}', space=vmem, size = 0xe000, scoped, tag = 'output window, operand 0, single buffered']
    #allocation14 [shape = 'u8[8192]{0}', space=vmem, size = 0x2000, scoped, tag = 'output window, operand 1, single buffered']
    #allocation15 [shape = 's32[1]{0}', space=sflag, size = 0x4, scoped, tag = 'scoped memory for tpu_custom_call.1']
    %16 = vsyncpa [#allocation3], 0
    %17 = vsyncpa [#allocation6], 0
    %18 = vsyncpa [#allocation9], 0
    %19 = vsyncpa [#allocation12], 0
    %20 = vsyncpa [#allocation4], 0
    %21 = vsyncpa [#allocation15], 0
    // Predicated region
    $region2: #{tpu_custom_call.1} parent=1 // pred_check
      _
    $region3: #{tpu_custom_call.1} parent=1 // pred_check_branch
      %23 = sbr.rel (0) target = $region5
    $region4: #{tpu_custom_call.1} parent=1 // pred_region
      %s25 = ssub.s32 896, 896
      %26 = vsyncadd [#allocation3], %s25
      %s27 = sshll.u32 [#allocation2], 4
      %s28 = int_to_ptr.vmem [resolvable:$true] %s27
      %33 = dma.hbm_to_vmem [thread:$0]  %s0, 896, %s28, [#allocation3], 448, 448, 28
    $region5: #{tpu_custom_call.1} parent=1 // pred_fallthru
      _
    // Predicated region
    $region6: #{tpu_custom_call.1} parent=1 // pred_check
      _
    $region7: #{tpu_custom_call.1} parent=1 // pred_check_branch
      %35 = sbr.rel (0) target = $region9
    $region8: #{tpu_custom_call.1} parent=1 // pred_region
      %s37 = ssub.s32 28672, 28672
      %38 = vsyncadd [#allocation6], %s37
      %s39 = sshll.u32 [#allocation5], 4
      %s40 = int_to_ptr.vmem [resolvable:$true] %s39
      %45 = dma.hbm_to_vmem [thread:$0]  %s1, 28672, %s40, [#allocation6], 256, 256, 16
    $region9: #{tpu_custom_call.1} parent=1 // pred_fallthru
      _
    // Predicated region
    $region10: #{tpu_custom_call.1} parent=1 // pred_check
      _
    $region11: #{tpu_custom_call.1} parent=1 // pred_check_branch
      %47 = sbr.rel (0) target = $region13
    $region12: #{tpu_custom_call.1} parent=1 // pred_region
      %s49 = ssub.s32 64, 64
      %50 = vsyncadd [#allocation6], %s49
      %s52 = sshll.u32 [#allocation7], 4
      %s53 = int_to_ptr.vmem [resolvable:$true] %s52
      %55 = dma.hbm_to_vmem [thread:$0]  %s2, 64, %s53, [#allocation6]
    $region13: #{tpu_custom_call.1} parent=1 // pred_fallthru
      _
    // Predicated region
    $region14: #{tpu_custom_call.1} parent=1 // pred_check
      _
    $region15: #{tpu_custom_call.1} parent=1 // pred_check_branch
      %57 = sbr.rel (0) target = $region17
    $region16: #{tpu_custom_call.1} parent=1 // pred_region
      %s59 = ssub.s32 4096, 4096
      %60 = vsyncadd [#allocation9], %s59
      %s61 = sshll.u32 [#allocation8], 4
      %s62 = int_to_ptr.vmem [resolvable:$true] %s61
      %67 = dma.hbm_to_vmem [thread:$0]  %s3, 4096, %s62, [#allocation9], 64, 64, 4
    $region17: #{tpu_custom_call.1} parent=1 // pred_fallthru
      _
    // Predicated region
    $region18: #{tpu_custom_call.1} parent=1 // pred_check
      _
    $region19: #{tpu_custom_call.1} parent=1 // pred_check_branch
      %69 = sbr.rel (0) target = $region21
    $region20: #{tpu_custom_call.1} parent=1 // pred_region
      _
    $region21: #{tpu_custom_call.1} parent=1 // pred_fallthru
      _
    // Predicated region
    $region22: #{tpu_custom_call.1} parent=1 // pred_check
      _
    $region23: #{tpu_custom_call.1} parent=1 // pred_check_branch
      %71 = sbr.rel (0) target = $region25
    $region24: #{tpu_custom_call.1} parent=1 // pred_region
      %s73 = ssub.s32 4096, 4096
      %74 = vsyncadd [#allocation9], %s73
      %s75 = sshll.u32 [#allocation10], 4
      %s76 = int_to_ptr.vmem [resolvable:$true] %s75
      %81 = dma.hbm_to_vmem [thread:$0]  %s5, 4096, %s76, [#allocation9], 256, 256, 16
    $region25: #{tpu_custom_call.1} parent=1 // pred_fallthru
      _
    // Predicated region
    $region26: #{tpu_custom_call.1} parent=1 // pred_check
      _
    $region27: #{tpu_custom_call.1} parent=1 // pred_check_branch
      %83 = sbr.rel (0) target = $region29
    $region28: #{tpu_custom_call.1} parent=1 // pred_region
      _
    $region29: #{tpu_custom_call.1} parent=1 // pred_fallthru
      _
    // Predicated region
    $region30: #{tpu_custom_call.1} parent=1 // pred_check
      _
    $region31: #{tpu_custom_call.1} parent=1 // pred_check_branch
      %85 = sbr.rel (0) target = $region33
    $region32: #{tpu_custom_call.1} parent=1 // pred_region
      %s87 = ssub.s32 28672, 28672
      %88 = vsyncadd [#allocation12], %s87
      %s89 = sshll.u32 [#allocation11], 4
      %s90 = int_to_ptr.vmem [resolvable:$true] %s89
      %95 = dma.hbm_to_vmem [thread:$0]  %s7, 28672, %s90, [#allocation12], 448, 448, 28
    $region33: #{tpu_custom_call.1} parent=1 // pred_fallthru
      _
    // Predicated region
    $region34: #{tpu_custom_call.1} parent=1 // pred_check
      _
    $region35: #{tpu_custom_call.1} parent=1 // pred_check_branch
      %97 = sbr.rel (0) target = $region37
    $region36: #{tpu_custom_call.1} parent=1 // pred_region
      _
    $region37: #{tpu_custom_call.1} parent=1 // pred_fallthru
      _
    // Predicated region
    $region38: #{tpu_custom_call.1} parent=1 // pred_check
      _
    $region39: #{tpu_custom_call.1} parent=1 // pred_check_branch
      %99 = sbr.rel (0) target = $region41
    $region40: #{tpu_custom_call.1} parent=1 // pred_region
      %100 = dma.done [#allocation3], 896
    $region41: #{tpu_custom_call.1} parent=1 // pred_fallthru
      _
    // Predicated region
    $region42: #{tpu_custom_call.1} parent=1 // pred_check
      _
    $region43: #{tpu_custom_call.1} parent=1 // pred_check_branch
      %102 = sbr.rel (0) target = $region45
    $region44: #{tpu_custom_call.1} parent=1 // pred_region
      %103 = dma.done [#allocation6], 28672
    $region45: #{tpu_custom_call.1} parent=1 // pred_fallthru
      _
    // Predicated region
    $region46: #{tpu_custom_call.1} parent=1 // pred_check
      _
    $region47: #{tpu_custom_call.1} parent=1 // pred_check_branch
      %105 = sbr.rel (0) target = $region49
    $region48: #{tpu_custom_call.1} parent=1 // pred_region
      %106 = dma.done [#allocation6], 64
    $region49: #{tpu_custom_call.1} parent=1 // pred_fallthru
      _
    // Predicated region
    $region50: #{tpu_custom_call.1} parent=1 // pred_check
      _
    $region51: #{tpu_custom_call.1} parent=1 // pred_check_branch
      %108 = sbr.rel (0) target = $region53
    $region52: #{tpu_custom_call.1} parent=1 // pred_region
      %109 = dma.done [#allocation9], 4096
    $region53: #{tpu_custom_call.1} parent=1 // pred_fallthru
      _
    // Predicated region
    $region54: #{tpu_custom_call.1} parent=1 // pred_check
      _
    $region55: #{tpu_custom_call.1} parent=1 // pred_check_branch
      %111 = sbr.rel (0) target = $region57
    $region56: #{tpu_custom_call.1} parent=1 // pred_region
      %112 = dma.done [#allocation9], 4096
    $region57: #{tpu_custom_call.1} parent=1 // pred_fallthru
      _
    // Predicated region
    $region58: #{tpu_custom_call.1} parent=1 // pred_check
      _
    $region59: #{tpu_custom_call.1} parent=1 // pred_check_branch
      %114 = sbr.rel (0) target = $region61
    $region60: #{tpu_custom_call.1} parent=1 // pred_region
      %115 = dma.done [#allocation12], 28672
    $region61: #{tpu_custom_call.1} parent=1 // pred_fallthru
      _
    %v117 = vld [vmem:[#allocation2] sm:$0xff]
    %v118 = vld [vmem:[#allocation2 + $0x8] sm:$0xff]
    %v119 = vld [vmem:[#allocation2 + $0x10] sm:$0xff]
    %v120 = vld [vmem:[#allocation2 + $0x18] sm:$0xf]
    %v121 = vld [vmem:[#allocation2 + $0x1c] sm:$0xff]
    %v122 = vld [vmem:[#allocation2 + $0x24] sm:$0xff]
    %v123 = vld [vmem:[#allocation2 + $0x2c] sm:$0xff]
    %v124 = vld [vmem:[#allocation2 + $0x34] sm:$0xf]
    %v125 = vld [vmem:[#allocation5] sm:$0xff]
    %v126 = vld [vmem:[#allocation5 + $0x8] sm:$0xff]
    %v127 = vld [vmem:[#allocation5 + $0x10] sm:$0xff]
    %v128 = vld [vmem:[#allocation5 + $0x18] sm:$0xff]
    %v129 = vld [vmem:[#allocation5 + $0x20] sm:$0xff]
    %v130 = vld [vmem:[#allocation5 + $0x28] sm:$0xff]
    %v131 = vld [vmem:[#allocation5 + $0x30] sm:$0xff]
    %v132 = vld [vmem:[#allocation5 + $0x38] sm:$0xff]
    %v133 = vld [vmem:[#allocation5 + $0x40] sm:$0xff]
    %v134 = vld [vmem:[#allocation5 + $0x48] sm:$0xff]
    %v135 = vld [vmem:[#allocation5 + $0x50] sm:$0xff]
    %v136 = vld [vmem:[#allocation5 + $0x58] sm:$0xff]
    %v137 = vld [vmem:[#allocation5 + $0x60] sm:$0xff]
    %v138 = vld [vmem:[#allocation5 + $0x68] sm:$0xff]
    %v139 = vld [vmem:[#allocation5 + $0x70] sm:$0xff]
    %v140 = vld [vmem:[#allocation5 + $0x78] sm:$0xff]
    %v141 = vld [vmem:[#allocation5 + $0x80] sm:$0xff]
    %v142 = vld [vmem:[#allocation5 + $0x88] sm:$0xff]
    %v143 = vld [vmem:[#allocation5 + $0x90] sm:$0xff]
    %v144 = vld [vmem:[#allocation5 + $0x98] sm:$0xff]
    %v145 = vld [vmem:[#allocation5 + $0xa0] sm:$0xff]
    %v146 = vld [vmem:[#allocation5 + $0xa8] sm:$0xff]
    %v147 = vld [vmem:[#allocation5 + $0xb0] sm:$0xff]
    %v148 = vld [vmem:[#allocation5 + $0xb8] sm:$0xff]
    %v149 = vld [vmem:[#allocation5 + $0xc0] sm:$0xff]
    %v150 = vld [vmem:[#allocation5 + $0xc8] sm:$0xff]
    %v151 = vld [vmem:[#allocation5 + $0xd0] sm:$0xff]
    %v152 = vld [vmem:[#allocation5 + $0xd8] sm:$0xff]
    %v153 = vld [vmem:[#allocation5 + $0xe0] sm:$0xff]
    %v154 = vld [vmem:[#allocation5 + $0xe8] sm:$0xff]
    %v155 = vld [vmem:[#allocation5 + $0xf0] sm:$0xff]
    %v156 = vld [vmem:[#allocation5 + $0xf8] sm:$0xff]
    %v157 = vld [vmem:[#allocation5 + $0x100] sm:$0xff]
    %v158 = vld [vmem:[#allocation5 + $0x108] sm:$0xff]
    %v159 = vld [vmem:[#allocation5 + $0x110] sm:$0xff]
    %v160 = vld [vmem:[#allocation5 + $0x118] sm:$0xff]
    %v161 = vld [vmem:[#allocation5 + $0x120] sm:$0xff]
    %v162 = vld [vmem:[#allocation5 + $0x128] sm:$0xff]
    %v163 = vld [vmem:[#allocation5 + $0x130] sm:$0xff]
    %v164 = vld [vmem:[#allocation5 + $0x138] sm:$0xff]
    %v165 = vld [vmem:[#allocation5 + $0x140] sm:$0xff]
    %v166 = vld [vmem:[#allocation5 + $0x148] sm:$0xff]
    %v167 = vld [vmem:[#allocation5 + $0x150] sm:$0xff]
    %v168 = vld [vmem:[#allocation5 + $0x158] sm:$0xff]
    %v169 = vld [vmem:[#allocation5 + $0x160] sm:$0xff]
    %v170 = vld [vmem:[#allocation5 + $0x168] sm:$0xff]
    %v171 = vld [vmem:[#allocation5 + $0x170] sm:$0xff]
    %v172 = vld [vmem:[#allocation5 + $0x178] sm:$0xff]
    %v173 = vld [vmem:[#allocation5 + $0x180] sm:$0xff]
    %v174 = vld [vmem:[#allocation5 + $0x188] sm:$0xff]
    %v175 = vld [vmem:[#allocation5 + $0x190] sm:$0xff]
    %v176 = vld [vmem:[#allocation5 + $0x198] sm:$0xff]
    %v177 = vld [vmem:[#allocation5 + $0x1a0] sm:$0xff]
    %v178 = vld [vmem:[#allocation5 + $0x1a8] sm:$0xff]
    %v179 = vld [vmem:[#allocation5 + $0x1b0] sm:$0xff]
    %v180 = vld [vmem:[#allocation5 + $0x1b8] sm:$0xff]
    %v181 = vld [vmem:[#allocation5 + $0x1c0] sm:$0xff]
    %v182 = vld [vmem:[#allocation5 + $0x1c8] sm:$0xff]
    %v183 = vld [vmem:[#allocation5 + $0x1d0] sm:$0xff]
    %v184 = vld [vmem:[#allocation5 + $0x1d8] sm:$0xff]
    %v185 = vld [vmem:[#allocation5 + $0x1e0] sm:$0xff]
    %v186 = vld [vmem:[#allocation5 + $0x1e8] sm:$0xff]
    %v187 = vld [vmem:[#allocation5 + $0x1f0] sm:$0xff]
    %v188 = vld [vmem:[#allocation5 + $0x1f8] sm:$0xff]
    %v189 = vld [vmem:[#allocation5 + $0x200] sm:$0xff]
    %v190 = vld [vmem:[#allocation5 + $0x208] sm:$0xff]
    %v191 = vld [vmem:[#allocation5 + $0x210] sm:$0xff]
    %v192 = vld [vmem:[#allocation5 + $0x218] sm:$0xff]
    %v193 = vld [vmem:[#allocation5 + $0x220] sm:$0xff]
    %v194 = vld [vmem:[#allocation5 + $0x228] sm:$0xff]
    %v195 = vld [vmem:[#allocation5 + $0x230] sm:$0xff]
    %v196 = vld [vmem:[#allocation5 + $0x238] sm:$0xff]
    %v197 = vld [vmem:[#allocation5 + $0x240] sm:$0xff]
    %v198 = vld [vmem:[#allocation5 + $0x248] sm:$0xff]
    %v199 = vld [vmem:[#allocation5 + $0x250] sm:$0xff]
    %v200 = vld [vmem:[#allocation5 + $0x258] sm:$0xff]
    %v201 = vld [vmem:[#allocation5 + $0x260] sm:$0xff]
    %v202 = vld [vmem:[#allocation5 + $0x268] sm:$0xff]
    %v203 = vld [vmem:[#allocation5 + $0x270] sm:$0xff]
    %v204 = vld [vmem:[#allocation5 + $0x278] sm:$0xff]
    %v205 = vld [vmem:[#allocation5 + $0x280] sm:$0xff]
    %v206 = vld [vmem:[#allocation5 + $0x288] sm:$0xff]
    %v207 = vld [vmem:[#allocation5 + $0x290] sm:$0xff]
    %v208 = vld [vmem:[#allocation5 + $0x298] sm:$0xff]
    %v209 = vld [vmem:[#allocation5 + $0x2a0] sm:$0xff]
    %v210 = vld [vmem:[#allocation5 + $0x2a8] sm:$0xff]
    %v211 = vld [vmem:[#allocation5 + $0x2b0] sm:$0xff]
    %v212 = vld [vmem:[#allocation5 + $0x2b8] sm:$0xff]
    %v213 = vld [vmem:[#allocation5 + $0x2c0] sm:$0xff]
    %v214 = vld [vmem:[#allocation5 + $0x2c8] sm:$0xff]
    %v215 = vld [vmem:[#allocation5 + $0x2d0] sm:$0xff]
    %v216 = vld [vmem:[#allocation5 + $0x2d8] sm:$0xff]
    %v217 = vld [vmem:[#allocation5 + $0x2e0] sm:$0xff]
    %v218 = vld [vmem:[#allocation5 + $0x2e8] sm:$0xff]
    %v219 = vld [vmem:[#allocation5 + $0x2f0] sm:$0xff]
    %v220 = vld [vmem:[#allocation5 + $0x2f8] sm:$0xff]
    %v221 = vld [vmem:[#allocation5 + $0x300] sm:$0xff]
    %v222 = vld [vmem:[#allocation5 + $0x308] sm:$0xff]
    %v223 = vld [vmem:[#allocation5 + $0x310] sm:$0xff]
    %v224 = vld [vmem:[#allocation5 + $0x318] sm:$0xff]
    %v225 = vld [vmem:[#allocation5 + $0x320] sm:$0xff]
    %v226 = vld [vmem:[#allocation5 + $0x328] sm:$0xff]
    %v227 = vld [vmem:[#allocation5 + $0x330] sm:$0xff]
    %v228 = vld [vmem:[#allocation5 + $0x338] sm:$0xff]
    %v229 = vld [vmem:[#allocation5 + $0x340] sm:$0xff]
    %v230 = vld [vmem:[#allocation5 + $0x348] sm:$0xff]
    %v231 = vld [vmem:[#allocation5 + $0x350] sm:$0xff]
    %v232 = vld [vmem:[#allocation5 + $0x358] sm:$0xff]
    %v233 = vld [vmem:[#allocation5 + $0x360] sm:$0xff]
    %v234 = vld [vmem:[#allocation5 + $0x368] sm:$0xff]
    %v235 = vld [vmem:[#allocation5 + $0x370] sm:$0xff]
    %v236 = vld [vmem:[#allocation5 + $0x378] sm:$0xff]
    %v237 = vld [vmem:[#allocation5 + $0x380] sm:$0xff]
    %v238 = vld [vmem:[#allocation5 + $0x388] sm:$0xff]
    %v239 = vld [vmem:[#allocation5 + $0x390] sm:$0xff]
    %v240 = vld [vmem:[#allocation5 + $0x398] sm:$0xff]
    %v241 = vld [vmem:[#allocation5 + $0x3a0] sm:$0xff]
    %v242 = vld [vmem:[#allocation5 + $0x3a8] sm:$0xff]
    %v243 = vld [vmem:[#allocation5 + $0x3b0] sm:$0xff]
    %v244 = vld [vmem:[#allocation5 + $0x3b8] sm:$0xff]
    %v245 = vld [vmem:[#allocation5 + $0x3c0] sm:$0xff]
    %v246 = vld [vmem:[#allocation5 + $0x3c8] sm:$0xff]
    %v247 = vld [vmem:[#allocation5 + $0x3d0] sm:$0xff]
    %v248 = vld [vmem:[#allocation5 + $0x3d8] sm:$0xff]
    %v249 = vld [vmem:[#allocation5 + $0x3e0] sm:$0xff]
    %v250 = vld [vmem:[#allocation5 + $0x3e8] sm:$0xff]
    %v251 = vld [vmem:[#allocation5 + $0x3f0] sm:$0xff]
    %v252 = vld [vmem:[#allocation5 + $0x3f8] sm:$0xff]
    %v253 = vld [vmem:[#allocation5 + $0x400] sm:$0xff]
    %v254 = vld [vmem:[#allocation5 + $0x408] sm:$0xff]
    %v255 = vld [vmem:[#allocation5 + $0x410] sm:$0xff]
    %v256 = vld [vmem:[#allocation5 + $0x418] sm:$0xff]
    %v257 = vld [vmem:[#allocation5 + $0x420] sm:$0xff]
    %v258 = vld [vmem:[#allocation5 + $0x428] sm:$0xff]
    %v259 = vld [vmem:[#allocation5 + $0x430] sm:$0xff]
    %v260 = vld [vmem:[#allocation5 + $0x438] sm:$0xff]
    %v261 = vld [vmem:[#allocation5 + $0x440] sm:$0xff]
    %v262 = vld [vmem:[#allocation5 + $0x448] sm:$0xff]
    %v263 = vld [vmem:[#allocation5 + $0x450] sm:$0xff]
    %v264 = vld [vmem:[#allocation5 + $0x458] sm:$0xff]
    %v265 = vld [vmem:[#allocation5 + $0x460] sm:$0xff]
    %v266 = vld [vmem:[#allocation5 + $0x468] sm:$0xff]
    %v267 = vld [vmem:[#allocation5 + $0x470] sm:$0xff]
    %v268 = vld [vmem:[#allocation5 + $0x478] sm:$0xff]
    %v269 = vld [vmem:[#allocation5 + $0x480] sm:$0xff]
    %v270 = vld [vmem:[#allocation5 + $0x488] sm:$0xff]
    %v271 = vld [vmem:[#allocation5 + $0x490] sm:$0xff]
    %v272 = vld [vmem:[#allocation5 + $0x498] sm:$0xff]
    %v273 = vld [vmem:[#allocation5 + $0x4a0] sm:$0xff]
    %v274 = vld [vmem:[#allocation5 + $0x4a8] sm:$0xff]
    %v275 = vld [vmem:[#allocation5 + $0x4b0] sm:$0xff]
    %v276 = vld [vmem:[#allocation5 + $0x4b8] sm:$0xff]
    %v277 = vld [vmem:[#allocation5 + $0x4c0] sm:$0xff]
    %v278 = vld [vmem:[#allocation5 + $0x4c8] sm:$0xff]
    %v279 = vld [vmem:[#allocation5 + $0x4d0] sm:$0xff]
    %v280 = vld [vmem:[#allocation5 + $0x4d8] sm:$0xff]
    %v281 = vld [vmem:[#allocation5 + $0x4e0] sm:$0xff]
    %v282 = vld [vmem:[#allocation5 + $0x4e8] sm:$0xff]
    %v283 = vld [vmem:[#allocation5 + $0x4f0] sm:$0xff]
    %v284 = vld [vmem:[#allocation5 + $0x4f8] sm:$0xff]
    %v285 = vld [vmem:[#allocation5 + $0x500] sm:$0xff]
    %v286 = vld [vmem:[#allocation5 + $0x508] sm:$0xff]
    %v287 = vld [vmem:[#allocation5 + $0x510] sm:$0xff]
    %v288 = vld [vmem:[#allocation5 + $0x518] sm:$0xff]
    %v289 = vld [vmem:[#allocation5 + $0x520] sm:$0xff]
    %v290 = vld [vmem:[#allocation5 + $0x528] sm:$0xff]
    %v291 = vld [vmem:[#allocation5 + $0x530] sm:$0xff]
    %v292 = vld [vmem:[#allocation5 + $0x538] sm:$0xff]
    %v293 = vld [vmem:[#allocation5 + $0x540] sm:$0xff]
    %v294 = vld [vmem:[#allocation5 + $0x548] sm:$0xff]
    %v295 = vld [vmem:[#allocation5 + $0x550] sm:$0xff]
    %v296 = vld [vmem:[#allocation5 + $0x558] sm:$0xff]
    %v297 = vld [vmem:[#allocation5 + $0x560] sm:$0xff]
    %v298 = vld [vmem:[#allocation5 + $0x568] sm:$0xff]
    %v299 = vld [vmem:[#allocation5 + $0x570] sm:$0xff]
    %v300 = vld [vmem:[#allocation5 + $0x578] sm:$0xff]
    %v301 = vld [vmem:[#allocation5 + $0x580] sm:$0xff]
    %v302 = vld [vmem:[#allocation5 + $0x588] sm:$0xff]
    %v303 = vld [vmem:[#allocation5 + $0x590] sm:$0xff]
    %v304 = vld [vmem:[#allocation5 + $0x598] sm:$0xff]
    %v305 = vld [vmem:[#allocation5 + $0x5a0] sm:$0xff]
    %v306 = vld [vmem:[#allocation5 + $0x5a8] sm:$0xff]
    %v307 = vld [vmem:[#allocation5 + $0x5b0] sm:$0xff]
    %v308 = vld [vmem:[#allocation5 + $0x5b8] sm:$0xff]
    %v309 = vld [vmem:[#allocation5 + $0x5c0] sm:$0xff]
    %v310 = vld [vmem:[#allocation5 + $0x5c8] sm:$0xff]
    %v311 = vld [vmem:[#allocation5 + $0x5d0] sm:$0xff]
    %v312 = vld [vmem:[#allocation5 + $0x5d8] sm:$0xff]
    %v313 = vld [vmem:[#allocation5 + $0x5e0] sm:$0xff]
    %v314 = vld [vmem:[#allocation5 + $0x5e8] sm:$0xff]
    %v315 = vld [vmem:[#allocation5 + $0x5f0] sm:$0xff]
    %v316 = vld [vmem:[#allocation5 + $0x5f8] sm:$0xff]
    %v317 = vld [vmem:[#allocation5 + $0x600] sm:$0xff]
    %v318 = vld [vmem:[#allocation5 + $0x608] sm:$0xff]
    %v319 = vld [vmem:[#allocation5 + $0x610] sm:$0xff]
    %v320 = vld [vmem:[#allocation5 + $0x618] sm:$0xff]
    %v321 = vld [vmem:[#allocation5 + $0x620] sm:$0xff]
    %v322 = vld [vmem:[#allocation5 + $0x628] sm:$0xff]
    %v323 = vld [vmem:[#allocation5 + $0x630] sm:$0xff]
    %v324 = vld [vmem:[#allocation5 + $0x638] sm:$0xff]
    %v325 = vld [vmem:[#allocation5 + $0x640] sm:$0xff]
    %v326 = vld [vmem:[#allocation5 + $0x648] sm:$0xff]
    %v327 = vld [vmem:[#allocation5 + $0x650] sm:$0xff]
    %v328 = vld [vmem:[#allocation5 + $0x658] sm:$0xff]
    %v329 = vld [vmem:[#allocation5 + $0x660] sm:$0xff]
    %v330 = vld [vmem:[#allocation5 + $0x668] sm:$0xff]
    %v331 = vld [vmem:[#allocation5 + $0x670] sm:$0xff]
    %v332 = vld [vmem:[#allocation5 + $0x678] sm:$0xff]
    %v333 = vld [vmem:[#allocation5 + $0x680] sm:$0xff]
    %v334 = vld [vmem:[#allocation5 + $0x688] sm:$0xff]
    %v335 = vld [vmem:[#allocation5 + $0x690] sm:$0xff]
    %v336 = vld [vmem:[#allocation5 + $0x698] sm:$0xff]
    %v337 = vld [vmem:[#allocation5 + $0x6a0] sm:$0xff]
    %v338 = vld [vmem:[#allocation5 + $0x6a8] sm:$0xff]
    %v339 = vld [vmem:[#allocation5 + $0x6b0] sm:$0xff]
    %v340 = vld [vmem:[#allocation5 + $0x6b8] sm:$0xff]
    %v341 = vld [vmem:[#allocation5 + $0x6c0] sm:$0xff]
    %v342 = vld [vmem:[#allocation5 + $0x6c8] sm:$0xff]
    %v343 = vld [vmem:[#allocation5 + $0x6d0] sm:$0xff]
    %v344 = vld [vmem:[#allocation5 + $0x6d8] sm:$0xff]
    %v345 = vld [vmem:[#allocation5 + $0x6e0] sm:$0xff]
    %v346 = vld [vmem:[#allocation5 + $0x6e8] sm:$0xff]
    %v347 = vld [vmem:[#allocation5 + $0x6f0] sm:$0xff]
    %v348 = vld [vmem:[#allocation5 + $0x6f8] sm:$0xff]
    %v349 = vld [vmem:[#allocation7] sm:$0xf]
    %v351 = vlaneseq
    %v352 = vshrl.u32 %v351, 7
    %v353 = vsub.s32 0, %v352
    %v354 = vrot.slane %v349, %v353
    %v355 = vlaneseq
    %v356 = vshrl.u32 %v355, 7
    %v357 = vsub.s32 1, %v356
    %v358 = vrot.slane %v349, %v357
    %v359 = vlaneseq
    %v360 = vshrl.u32 %v359, 7
    %v361 = vsub.s32 2, %v360
    %v362 = vrot.slane %v349, %v361
    %v363 = vlaneseq
    %v364 = vshrl.u32 %v363, 7
    %v365 = vsub.s32 3, %v364
    %v366 = vrot.slane %v349, %v365
    %v379 = vunpack.c.l.b16 %v117
    %v380 = vunpack.c.h.b16 %v117
    %v381 = vunpack.c.l.b16 %v118
    %v382 = vunpack.c.h.b16 %v118
    %v383 = vunpack.c.l.b16 %v119
    %v384 = vunpack.c.h.b16 %v119
    %v385 = vunpack.c.l.b16 %v120
    %v386 = vunpack.c.l.b16 %v121
    %v387 = vunpack.c.h.b16 %v121
    %v388 = vunpack.c.l.b16 %v122
    %v389 = vunpack.c.h.b16 %v122
    %v390 = vunpack.c.l.b16 %v123
    %v391 = vunpack.c.h.b16 %v123
    %v392 = vunpack.c.l.b16 %v124
    %v393 = vpack.c.b16 %v386, %v379
    %v394 = vpack.c.b16 %v387, %v380
    %v395 = vpack.c.b16 %v388, %v381
    %v396 = vpack.c.b16 %v389, %v382
    %v397 = vpack.c.b16 %v390, %v383
    %v398 = vpack.c.b16 %v391, %v384
    %v399 = vpack.c.b16 %v392, %v385
    %v631 = vunpack.c.l.b16 %v125
    %v632 = vunpack.c.h.b16 %v125
    %v633 = vunpack.c.l.b16 %v126
    %v634 = vunpack.c.h.b16 %v126
    %v635 = vunpack.c.l.b16 %v127
    %v636 = vunpack.c.h.b16 %v127
    %v637 = vunpack.c.l.b16 %v128
    %v638 = vunpack.c.h.b16 %v128
    %v639 = vunpack.c.l.b16 %v129
    %v640 = vunpack.c.h.b16 %v129
    %v641 = vunpack.c.l.b16 %v130
    %v642 = vunpack.c.h.b16 %v130
    %v643 = vunpack.c.l.b16 %v131
    %v644 = vunpack.c.h.b16 %v131
    %v645 = vunpack.c.l.b16 %v132
    %v646 = vunpack.c.h.b16 %v132
    %v647 = vunpack.c.l.b16 %v133
    %v648 = vunpack.c.h.b16 %v133
    %v649 = vunpack.c.l.b16 %v134
    %v650 = vunpack.c.h.b16 %v134
    %v651 = vunpack.c.l.b16 %v135
    %v652 = vunpack.c.h.b16 %v135
    %v653 = vunpack.c.l.b16 %v136
    %v654 = vunpack.c.h.b16 %v136
    %v655 = vunpack.c.l.b16 %v137
    %v656 = vunpack.c.h.b16 %v137
    %v657 = vunpack.c.l.b16 %v138
    %v658 = vunpack.c.h.b16 %v138
    %v659 = vunpack.c.l.b16 %v139
    %v660 = vunpack.c.h.b16 %v139
    %v661 = vunpack.c.l.b16 %v140
    %v662 = vunpack.c.h.b16 %v140
    %v663 = vunpack.c.l.b16 %v141
    %v664 = vunpack.c.h.b16 %v141
    %v665 = vunpack.c.l.b16 %v142
    %v666 = vunpack.c.h.b16 %v142
    %v667 = vunpack.c.l.b16 %v143
    %v668 = vunpack.c.h.b16 %v143
    %v669 = vunpack.c.l.b16 %v144
    %v670 = vunpack.c.h.b16 %v144
    %v671 = vunpack.c.l.b16 %v145
    %v672 = vunpack.c.h.b16 %v145
    %v673 = vunpack.c.l.b16 %v146
    %v674 = vunpack.c.h.b16 %v146
    %v675 = vunpack.c.l.b16 %v147
    %v676 = vunpack.c.h.b16 %v147
    %v677 = vunpack.c.l.b16 %v148
    %v678 = vunpack.c.h.b16 %v148
    %v679 = vunpack.c.l.b16 %v149
    %v680 = vunpack.c.h.b16 %v149
    %v681 = vunpack.c.l.b16 %v150
    %v682 = vunpack.c.h.b16 %v150
    %v683 = vunpack.c.l.b16 %v151
    %v684 = vunpack.c.h.b16 %v151
    %v685 = vunpack.c.l.b16 %v152
    %v686 = vunpack.c.h.b16 %v152
    %v687 = vunpack.c.l.b16 %v153
    %v688 = vunpack.c.h.b16 %v153
    %v689 = vunpack.c.l.b16 %v154
    %v690 = vunpack.c.h.b16 %v154
    %v691 = vunpack.c.l.b16 %v155
    %v692 = vunpack.c.h.b16 %v155
    %v693 = vunpack.c.l.b16 %v156
    %v694 = vunpack.c.h.b16 %v156
    %v695 = vunpack.c.l.b16 %v157
    %v696 = vunpack.c.h.b16 %v157
    %v697 = vunpack.c.l.b16 %v158
    %v698 = vunpack.c.h.b16 %v158
    %v699 = vunpack.c.l.b16 %v159
    %v700 = vunpack.c.h.b16 %v159
    %v701 = vunpack.c.l.b16 %v160
    %v702 = vunpack.c.h.b16 %v160
    %v703 = vunpack.c.l.b16 %v161
    %v704 = vunpack.c.h.b16 %v161
    %v705 = vunpack.c.l.b16 %v162
    %v706 = vunpack.c.h.b16 %v162
    %v707 = vunpack.c.l.b16 %v163
    %v708 = vunpack.c.h.b16 %v163
    %v709 = vunpack.c.l.b16 %v164
    %v710 = vunpack.c.h.b16 %v164
    %v711 = vunpack.c.l.b16 %v165
    %v712 = vunpack.c.h.b16 %v165
    %v713 = vunpack.c.l.b16 %v166
    %v714 = vunpack.c.h.b16 %v166
    %v715 = vunpack.c.l.b16 %v167
    %v716 = vunpack.c.h.b16 %v167
    %v717 = vunpack.c.l.b16 %v168
    %v718 = vunpack.c.h.b16 %v168
    %v719 = vunpack.c.l.b16 %v169
    %v720 = vunpack.c.h.b16 %v169
    %v721 = vunpack.c.l.b16 %v170
    %v722 = vunpack.c.h.b16 %v170
    %v723 = vunpack.c.l.b16 %v171
    %v724 = vunpack.c.h.b16 %v171
    %v725 = vunpack.c.l.b16 %v172
    %v726 = vunpack.c.h.b16 %v172
    %v727 = vunpack.c.l.b16 %v173
    %v728 = vunpack.c.h.b16 %v173
    %v729 = vunpack.c.l.b16 %v174
    %v730 = vunpack.c.h.b16 %v174
    %v731 = vunpack.c.l.b16 %v175
    %v732 = vunpack.c.h.b16 %v175
    %v733 = vunpack.c.l.b16 %v176
    %v734 = vunpack.c.h.b16 %v176
    %v735 = vunpack.c.l.b16 %v177
    %v736 = vunpack.c.h.b16 %v177
    %v737 = vunpack.c.l.b16 %v178
    %v738 = vunpack.c.h.b16 %v178
    %v739 = vunpack.c.l.b16 %v179
    %v740 = vunpack.c.h.b16 %v179
    %v741 = vunpack.c.l.b16 %v180
    %v742 = vunpack.c.h.b16 %v180
    %v743 = vunpack.c.l.b16 %v181
    %v744 = vunpack.c.h.b16 %v181
    %v745 = vunpack.c.l.b16 %v182
    %v746 = vunpack.c.h.b16 %v182
    %v747 = vunpack.c.l.b16 %v183
    %v748 = vunpack.c.h.b16 %v183
    %v749 = vunpack.c.l.b16 %v184
    %v750 = vunpack.c.h.b16 %v184
    %v751 = vunpack.c.l.b16 %v185
    %v752 = vunpack.c.h.b16 %v185
    %v753 = vunpack.c.l.b16 %v186
    %v754 = vunpack.c.h.b16 %v186
    %v755 = vunpack.c.l.b16 %v187
    %v756 = vunpack.c.h.b16 %v187
    %v757 = vunpack.c.l.b16 %v188
    %v758 = vunpack.c.h.b16 %v188
    %v759 = vunpack.c.l.b16 %v189
    %v760 = vunpack.c.h.b16 %v189
    %v761 = vunpack.c.l.b16 %v190
    %v762 = vunpack.c.h.b16 %v190
    %v763 = vunpack.c.l.b16 %v191
    %v764 = vunpack.c.h.b16 %v191
    %v765 = vunpack.c.l.b16 %v192
    %v766 = vunpack.c.h.b16 %v192
    %v767 = vunpack.c.l.b16 %v193
    %v768 = vunpack.c.h.b16 %v193
    %v769 = vunpack.c.l.b16 %v194
    %v770 = vunpack.c.h.b16 %v194
    %v771 = vunpack.c.l.b16 %v195
    %v772 = vunpack.c.h.b16 %v195
    %v773 = vunpack.c.l.b16 %v196
    %v774 = vunpack.c.h.b16 %v196
    %v775 = vunpack.c.l.b16 %v197
    %v776 = vunpack.c.h.b16 %v197
    %v777 = vunpack.c.l.b16 %v198
    %v778 = vunpack.c.h.b16 %v198
    %v779 = vunpack.c.l.b16 %v199
    %v780 = vunpack.c.h.b16 %v199
    %v781 = vunpack.c.l.b16 %v200
    %v782 = vunpack.c.h.b16 %v200
    %v783 = vunpack.c.l.b16 %v201
    %v784 = vunpack.c.h.b16 %v201
    %v785 = vunpack.c.l.b16 %v202
    %v786 = vunpack.c.h.b16 %v202
    %v787 = vunpack.c.l.b16 %v203
    %v788 = vunpack.c.h.b16 %v203
    %v789 = vunpack.c.l.b16 %v204
    %v790 = vunpack.c.h.b16 %v204
    %v791 = vunpack.c.l.b16 %v205
    %v792 = vunpack.c.h.b16 %v205
    %v793 = vunpack.c.l.b16 %v206
    %v794 = vunpack.c.h.b16 %v206
    %v795 = vunpack.c.l.b16 %v207
    %v796 = vunpack.c.h.b16 %v207
    %v797 = vunpack.c.l.b16 %v208
    %v798 = vunpack.c.h.b16 %v208
    %v799 = vunpack.c.l.b16 %v209
    %v800 = vunpack.c.h.b16 %v209
    %v801 = vunpack.c.l.b16 %v210
    %v802 = vunpack.c.h.b16 %v210
    %v803 = vunpack.c.l.b16 %v211
    %v804 = vunpack.c.h.b16 %v211
    %v805 = vunpack.c.l.b16 %v212
    %v806 = vunpack.c.h.b16 %v212
    %v807 = vunpack.c.l.b16 %v213
    %v808 = vunpack.c.h.b16 %v213
    %v809 = vunpack.c.l.b16 %v214
    %v810 = vunpack.c.h.b16 %v214
    %v811 = vunpack.c.l.b16 %v215
    %v812 = vunpack.c.h.b16 %v215
    %v813 = vunpack.c.l.b16 %v216
    %v814 = vunpack.c.h.b16 %v216
    %v815 = vunpack.c.l.b16 %v217
    %v816 = vunpack.c.h.b16 %v217
    %v817 = vunpack.c.l.b16 %v218
    %v818 = vunpack.c.h.b16 %v218
    %v819 = vunpack.c.l.b16 %v219
    %v820 = vunpack.c.h.b16 %v219
    %v821 = vunpack.c.l.b16 %v220
    %v822 = vunpack.c.h.b16 %v220
    %v823 = vunpack.c.l.b16 %v221
    %v824 = vunpack.c.h.b16 %v221
    %v825 = vunpack.c.l.b16 %v222
    %v826 = vunpack.c.h.b16 %v222
    %v827 = vunpack.c.l.b16 %v223
    %v828 = vunpack.c.h.b16 %v223
    %v829 = vunpack.c.l.b16 %v224
    %v830 = vunpack.c.h.b16 %v224
    %v831 = vunpack.c.l.b16 %v225
    %v832 = vunpack.c.h.b16 %v225
    %v833 = vunpack.c.l.b16 %v226
    %v834 = vunpack.c.h.b16 %v226
    %v835 = vunpack.c.l.b16 %v227
    %v836 = vunpack.c.h.b16 %v227
    %v837 = vunpack.c.l.b16 %v228
    %v838 = vunpack.c.h.b16 %v228
    %v839 = vunpack.c.l.b16 %v229
    %v840 = vunpack.c.h.b16 %v229
    %v841 = vunpack.c.l.b16 %v230
    %v842 = vunpack.c.h.b16 %v230
    %v843 = vunpack.c.l.b16 %v231
    %v844 = vunpack.c.h.b16 %v231
    %v845 = vunpack.c.l.b16 %v232
    %v846 = vunpack.c.h.b16 %v232
    %v847 = vunpack.c.l.b16 %v233
    %v848 = vunpack.c.h.b16 %v233
    %v849 = vunpack.c.l.b16 %v234
    %v850 = vunpack.c.h.b16 %v234
    %v851 = vunpack.c.l.b16 %v235
    %v852 = vunpack.c.h.b16 %v235
    %v853 = vunpack.c.l.b16 %v236
    %v854 = vunpack.c.h.b16 %v236
    %v855 = vunpack.c.l.b16 %v237
    %v856 = vunpack.c.h.b16 %v237
    %v857 = vunpack.c.l.b16 %v238
    %v858 = vunpack.c.h.b16 %v238
    %v859 = vunpack.c.l.b16 %v239
    %v860 = vunpack.c.h.b16 %v239
    %v861 = vunpack.c.l.b16 %v240
    %v862 = vunpack.c.h.b16 %v240
    %v863 = vunpack.c.l.b16 %v241
    %v864 = vunpack.c.h.b16 %v241
    %v865 = vunpack.c.l.b16 %v242
    %v866 = vunpack.c.h.b16 %v242
    %v867 = vunpack.c.l.b16 %v243
    %v868 = vunpack.c.h.b16 %v243
    %v869 = vunpack.c.l.b16 %v244
    %v870 = vunpack.c.h.b16 %v244
    %v871 = vunpack.c.l.b16 %v245
    %v872 = vunpack.c.h.b16 %v245
    %v873 = vunpack.c.l.b16 %v246
    %v874 = vunpack.c.h.b16 %v246
    %v875 = vunpack.c.l.b16 %v247
    %v876 = vunpack.c.h.b16 %v247
    %v877 = vunpack.c.l.b16 %v248
    %v878 = vunpack.c.h.b16 %v248
    %v879 = vunpack.c.l.b16 %v249
    %v880 = vunpack.c.h.b16 %v249
    %v881 = vunpack.c.l.b16 %v250
    %v882 = vunpack.c.h.b16 %v250
    %v883 = vunpack.c.l.b16 %v251
    %v884 = vunpack.c.h.b16 %v251
    %v885 = vunpack.c.l.b16 %v252
    %v886 = vunpack.c.h.b16 %v252
    %v887 = vunpack.c.l.b16 %v253
    %v888 = vunpack.c.h.b16 %v253
    %v889 = vunpack.c.l.b16 %v254
    %v890 = vunpack.c.h.b16 %v254
    %v891 = vunpack.c.l.b16 %v255
    %v892 = vunpack.c.h.b16 %v255
    %v893 = vunpack.c.l.b16 %v256
    %v894 = vunpack.c.h.b16 %v256
    %v895 = vunpack.c.l.b16 %v257
    %v896 = vunpack.c.h.b16 %v257
    %v897 = vunpack.c.l.b16 %v258
    %v898 = vunpack.c.h.b16 %v258
    %v899 = vunpack.c.l.b16 %v259
    %v900 = vunpack.c.h.b16 %v259
    %v901 = vunpack.c.l.b16 %v260
    %v902 = vunpack.c.h.b16 %v260
    %v903 = vunpack.c.l.b16 %v261
    %v904 = vunpack.c.h.b16 %v261
    %v905 = vunpack.c.l.b16 %v262
    %v906 = vunpack.c.h.b16 %v262
    %v907 = vunpack.c.l.b16 %v263
    %v908 = vunpack.c.h.b16 %v263
    %v909 = vunpack.c.l.b16 %v264
    %v910 = vunpack.c.h.b16 %v264
    %v911 = vunpack.c.l.b16 %v265
    %v912 = vunpack.c.h.b16 %v265
    %v913 = vunpack.c.l.b16 %v266
    %v914 = vunpack.c.h.b16 %v266
    %v915 = vunpack.c.l.b16 %v267
    %v916 = vunpack.c.h.b16 %v267
    %v917 = vunpack.c.l.b16 %v268
    %v918 = vunpack.c.h.b16 %v268
    %v919 = vunpack.c.l.b16 %v269
    %v920 = vunpack.c.h.b16 %v269
    %v921 = vunpack.c.l.b16 %v270
    %v922 = vunpack.c.h.b16 %v270
    %v923 = vunpack.c.l.b16 %v271
    %v924 = vunpack.c.h.b16 %v271
    %v925 = vunpack.c.l.b16 %v272
    %v926 = vunpack.c.h.b16 %v272
    %v927 = vunpack.c.l.b16 %v273
    %v928 = vunpack.c.h.b16 %v273
    %v929 = vunpack.c.l.b16 %v274
    %v930 = vunpack.c.h.b16 %v274
    %v931 = vunpack.c.l.b16 %v275
    %v932 = vunpack.c.h.b16 %v275
    %v933 = vunpack.c.l.b16 %v276
    %v934 = vunpack.c.h.b16 %v276
    %v935 = vunpack.c.l.b16 %v277
    %v936 = vunpack.c.h.b16 %v277
    %v937 = vunpack.c.l.b16 %v278
    %v938 = vunpack.c.h.b16 %v278
    %v939 = vunpack.c.l.b16 %v279
    %v940 = vunpack.c.h.b16 %v279
    %v941 = vunpack.c.l.b16 %v280
    %v942 = vunpack.c.h.b16 %v280
    %v943 = vunpack.c.l.b16 %v281
    %v944 = vunpack.c.h.b16 %v281
    %v945 = vunpack.c.l.b16 %v282
    %v946 = vunpack.c.h.b16 %v282
    %v947 = vunpack.c.l.b16 %v283
    %v948 = vunpack.c.h.b16 %v283
    %v949 = vunpack.c.l.b16 %v284
    %v950 = vunpack.c.h.b16 %v284
    %v951 = vunpack.c.l.b16 %v285
    %v952 = vunpack.c.h.b16 %v285
    %v953 = vunpack.c.l.b16 %v286
    %v954 = vunpack.c.h.b16 %v286
    %v955 = vunpack.c.l.b16 %v287
    %v956 = vunpack.c.h.b16 %v287
    %v957 = vunpack.c.l.b16 %v288
    %v958 = vunpack.c.h.b16 %v288
    %v959 = vunpack.c.l.b16 %v289
    %v960 = vunpack.c.h.b16 %v289
    %v961 = vunpack.c.l.b16 %v290
    %v962 = vunpack.c.h.b16 %v290
    %v963 = vunpack.c.l.b16 %v291
    %v964 = vunpack.c.h.b16 %v291
    %v965 = vunpack.c.l.b16 %v292
    %v966 = vunpack.c.h.b16 %v292
    %v967 = vunpack.c.l.b16 %v293
    %v968 = vunpack.c.h.b16 %v293
    %v969 = vunpack.c.l.b16 %v294
    %v970 = vunpack.c.h.b16 %v294
    %v971 = vunpack.c.l.b16 %v295
    %v972 = vunpack.c.h.b16 %v295
    %v973 = vunpack.c.l.b16 %v296
    %v974 = vunpack.c.h.b16 %v296
    %v975 = vunpack.c.l.b16 %v297
    %v976 = vunpack.c.h.b16 %v297
    %v977 = vunpack.c.l.b16 %v298
    %v978 = vunpack.c.h.b16 %v298
    %v979 = vunpack.c.l.b16 %v299
    %v980 = vunpack.c.h.b16 %v299
    %v981 = vunpack.c.l.b16 %v300
    %v982 = vunpack.c.h.b16 %v300
    %v983 = vunpack.c.l.b16 %v301
    %v984 = vunpack.c.h.b16 %v301
    %v985 = vunpack.c.l.b16 %v302
    %v986 = vunpack.c.h.b16 %v302
    %v987 = vunpack.c.l.b16 %v303
    %v988 = vunpack.c.h.b16 %v303
    %v989 = vunpack.c.l.b16 %v304
    %v990 = vunpack.c.h.b16 %v304
    %v991 = vunpack.c.l.b16 %v305
    %v992 = vunpack.c.h.b16 %v305
    %v993 = vunpack.c.l.b16 %v306
    %v994 = vunpack.c.h.b16 %v306
    %v995 = vunpack.c.l.b16 %v307
    %v996 = vunpack.c.h.b16 %v307
    %v997 = vunpack.c.l.b16 %v308
    %v998 = vunpack.c.h.b16 %v308
    %v999 = vunpack.c.l.b16 %v309
    %v1000 = vunpack.c.h.b16 %v309
    %v1001 = vunpack.c.l.b16 %v310
    %v1002 = vunpack.c.h.b16 %v310
    %v1003 = vunpack.c.l.b16 %v311
    %v1004 = vunpack.c.h.b16 %v311
    %v1005 = vunpack.c.l.b16 %v312
    %v1006 = vunpack.c.h.b16 %v312
    %v1007 = vunpack.c.l.b16 %v313
    %v1008 = vunpack.c.h.b16 %v313
    %v1009 = vunpack.c.l.b16 %v314
    %v1010 = vunpack.c.h.b16 %v314
    %v1011 = vunpack.c.l.b16 %v315
    %v1012 = vunpack.c.h.b16 %v315
    %v1013 = vunpack.c.l.b16 %v316
    %v1014 = vunpack.c.h.b16 %v316
    %v1015 = vunpack.c.l.b16 %v317
    %v1016 = vunpack.c.h.b16 %v317
    %v1017 = vunpack.c.l.b16 %v318
    %v1018 = vunpack.c.h.b16 %v318
    %v1019 = vunpack.c.l.b16 %v319
    %v1020 = vunpack.c.h.b16 %v319
    %v1021 = vunpack.c.l.b16 %v320
    %v1022 = vunpack.c.h.b16 %v320
    %v1023 = vunpack.c.l.b16 %v321
    %v1024 = vunpack.c.h.b16 %v321
    %v1025 = vunpack.c.l.b16 %v322
    %v1026 = vunpack.c.h.b16 %v322
    %v1027 = vunpack.c.l.b16 %v323
    %v1028 = vunpack.c.h.b16 %v323
    %v1029 = vunpack.c.l.b16 %v324
    %v1030 = vunpack.c.h.b16 %v324
    %v1031 = vunpack.c.l.b16 %v325
    %v1032 = vunpack.c.h.b16 %v325
    %v1033 = vunpack.c.l.b16 %v326
    %v1034 = vunpack.c.h.b16 %v326
    %v1035 = vunpack.c.l.b16 %v327
    %v1036 = vunpack.c.h.b16 %v327
    %v1037 = vunpack.c.l.b16 %v328
    %v1038 = vunpack.c.h.b16 %v328
    %v1039 = vunpack.c.l.b16 %v329
    %v1040 = vunpack.c.h.b16 %v329
    %v1041 = vunpack.c.l.b16 %v330
    %v1042 = vunpack.c.h.b16 %v330
    %v1043 = vunpack.c.l.b16 %v331
    %v1044 = vunpack.c.h.b16 %v331
    %v1045 = vunpack.c.l.b16 %v332
    %v1046 = vunpack.c.h.b16 %v332
    %v1047 = vunpack.c.l.b16 %v333
    %v1048 = vunpack.c.h.b16 %v333
    %v1049 = vunpack.c.l.b16 %v334
    %v1050 = vunpack.c.h.b16 %v334
    %v1051 = vunpack.c.l.b16 %v335
    %v1052 = vunpack.c.h.b16 %v335
    %v1053 = vunpack.c.l.b16 %v336
    %v1054 = vunpack.c.h.b16 %v336
    %v1055 = vunpack.c.l.b16 %v337
    %v1056 = vunpack.c.h.b16 %v337
    %v1057 = vunpack.c.l.b16 %v338
    %v1058 = vunpack.c.h.b16 %v338
    %v1059 = vunpack.c.l.b16 %v339
    %v1060 = vunpack.c.h.b16 %v339
    %v1061 = vunpack.c.l.b16 %v340
    %v1062 = vunpack.c.h.b16 %v340
    %v1063 = vunpack.c.l.b16 %v341
    %v1064 = vunpack.c.h.b16 %v341
    %v1065 = vunpack.c.l.b16 %v342
    %v1066 = vunpack.c.h.b16 %v342
    %v1067 = vunpack.c.l.b16 %v343
    %v1068 = vunpack.c.h.b16 %v343
    %v1069 = vunpack.c.l.b16 %v344
    %v1070 = vunpack.c.h.b16 %v344
    %v1071 = vunpack.c.l.b16 %v345
    %v1072 = vunpack.c.h.b16 %v345
    %v1073 = vunpack.c.l.b16 %v346
    %v1074 = vunpack.c.h.b16 %v346
    %v1075 = vunpack.c.l.b16 %v347
    %v1076 = vunpack.c.h.b16 %v347
    %v1077 = vunpack.c.l.b16 %v348
    %v1078 = vunpack.c.h.b16 %v348
    %v1079 = vpack.c.b16 %v635, %v631
    %v1080 = vpack.c.b16 %v636, %v632
    %v1081 = vpack.c.b16 %v637, %v633
    %v1082 = vpack.c.b16 %v638, %v634
    %v1083 = vpack.c.b16 %v643, %v639
    %v1084 = vpack.c.b16 %v644, %v640
    %v1085 = vpack.c.b16 %v645, %v641
    %v1086 = vpack.c.b16 %v646, %v642
    %v1087 = vpack.c.b16 %v651, %v647
    %v1088 = vpack.c.b16 %v652, %v648
    %v1089 = vpack.c.b16 %v653, %v649
    %v1090 = vpack.c.b16 %v654, %v650
    %v1091 = vpack.c.b16 %v659, %v655
    %v1092 = vpack.c.b16 %v660, %v656
    %v1093 = vpack.c.b16 %v661, %v657
    %v1094 = vpack.c.b16 %v662, %v658
    %v1095 = vpack.c.b16 %v667, %v663
    %v1096 = vpack.c.b16 %v668, %v664
    %v1097 = vpack.c.b16 %v669, %v665
    %v1098 = vpack.c.b16 %v670, %v666
    %v1099 = vpack.c.b16 %v675, %v671
    %v1100 = vpack.c.b16 %v676, %v672
    %v1101 = vpack.c.b16 %v677, %v673
    %v1102 = vpack.c.b16 %v678, %v674
    %v1103 = vpack.c.b16 %v683, %v679
    %v1104 = vpack.c.b16 %v684, %v680
    %v1105 = vpack.c.b16 %v685, %v681
    %v1106 = vpack.c.b16 %v686, %v682
    %v1107 = vpack.c.b16 %v691, %v687
    %v1108 = vpack.c.b16 %v692, %v688
    %v1109 = vpack.c.b16 %v693, %v689
    %v1110 = vpack.c.b16 %v694, %v690
    %v1111 = vpack.c.b16 %v699, %v695
    %v1112 = vpack.c.b16 %v700, %v696
    %v1113 = vpack.c.b16 %v701, %v697
    %v1114 = vpack.c.b16 %v702, %v698
    %v1115 = vpack.c.b16 %v707, %v703
    %v1116 = vpack.c.b16 %v708, %v704
    %v1117 = vpack.c.b16 %v709, %v705
    %v1118 = vpack.c.b16 %v710, %v706
    %v1119 = vpack.c.b16 %v715, %v711
    %v1120 = vpack.c.b16 %v716, %v712
    %v1121 = vpack.c.b16 %v717, %v713
    %v1122 = vpack.c.b16 %v718, %v714
    %v1123 = vpack.c.b16 %v723, %v719
    %v1124 = vpack.c.b16 %v724, %v720
    %v1125 = vpack.c.b16 %v725, %v721
    %v1126 = vpack.c.b16 %v726, %v722
    %v1127 = vpack.c.b16 %v731, %v727
    %v1128 = vpack.c.b16 %v732, %v728
    %v1129 = vpack.c.b16 %v733, %v729
    %v1130 = vpack.c.b16 %v734, %v730
    %v1131 = vpack.c.b16 %v739, %v735
    %v1132 = vpack.c.b16 %v740, %v736
    %v1133 = vpack.c.b16 %v741, %v737
    %v1134 = vpack.c.b16 %v742, %v738
    %v1135 = vpack.c.b16 %v747, %v743
    %v1136 = vpack.c.b16 %v748, %v744
    %v1137 = vpack.c.b16 %v749, %v745
    %v1138 = vpack.c.b16 %v750, %v746
    %v1139 = vpack.c.b16 %v755, %v751
    %v1140 = vpack.c.b16 %v756, %v752
    %v1141 = vpack.c.b16 %v757, %v753
    %v1142 = vpack.c.b16 %v758, %v754
    %v1143 = vpack.c.b16 %v763, %v759
    %v1144 = vpack.c.b16 %v764, %v760
    %v1145 = vpack.c.b16 %v765, %v761
    %v1146 = vpack.c.b16 %v766, %v762
    %v1147 = vpack.c.b16 %v771, %v767
    %v1148 = vpack.c.b16 %v772, %v768
    %v1149 = vpack.c.b16 %v773, %v769
    %v1150 = vpack.c.b16 %v774, %v770
    %v1151 = vpack.c.b16 %v779, %v775
    %v1152 = vpack.c.b16 %v780, %v776
    %v1153 = vpack.c.b16 %v781, %v777
    %v1154 = vpack.c.b16 %v782, %v778
    %v1155 = vpack.c.b16 %v787, %v783
    %v1156 = vpack.c.b16 %v788, %v784
    %v1157 = vpack.c.b16 %v789, %v785
    %v1158 = vpack.c.b16 %v790, %v786
    %v1159 = vpack.c.b16 %v795, %v791
    %v1160 = vpack.c.b16 %v796, %v792
    %v1161 = vpack.c.b16 %v797, %v793
    %v1162 = vpack.c.b16 %v798, %v794
    %v1163 = vpack.c.b16 %v803, %v799
    %v1164 = vpack.c.b16 %v804, %v800
    %v1165 = vpack.c.b16 %v805, %v801
    %v1166 = vpack.c.b16 %v806, %v802
    %v1167 = vpack.c.b16 %v811, %v807
    %v1168 = vpack.c.b16 %v812, %v808
    %v1169 = vpack.c.b16 %v813, %v809
    %v1170 = vpack.c.b16 %v814, %v810
    %v1171 = vpack.c.b16 %v819, %v815
    %v1172 = vpack.c.b16 %v820, %v816
    %v1173 = vpack.c.b16 %v821, %v817
    %v1174 = vpack.c.b16 %v822, %v818
    %v1175 = vpack.c.b16 %v827, %v823
    %v1176 = vpack.c.b16 %v828, %v824
    %v1177 = vpack.c.b16 %v829, %v825
    %v1178 = vpack.c.b16 %v830, %v826
    %v1179 = vpack.c.b16 %v835, %v831
    %v1180 = vpack.c.b16 %v836, %v832
    %v1181 = vpack.c.b16 %v837, %v833
    %v1182 = vpack.c.b16 %v838, %v834
    %v1183 = vpack.c.b16 %v843, %v839
    %v1184 = vpack.c.b16 %v844, %v840
    %v1185 = vpack.c.b16 %v845, %v841
    %v1186 = vpack.c.b16 %v846, %v842
    %v1187 = vpack.c.b16 %v851, %v847
    %v1188 = vpack.c.b16 %v852, %v848
    %v1189 = vpack.c.b16 %v853, %v849
    %v1190 = vpack.c.b16 %v854, %v850
    %v1191 = vpack.c.b16 %v859, %v855
    %v1192 = vpack.c.b16 %v860, %v856
    %v1193 = vpack.c.b16 %v861, %v857
    %v1194 = vpack.c.b16 %v862, %v858
    %v1195 = vpack.c.b16 %v867, %v863
    %v1196 = vpack.c.b16 %v868, %v864
    %v1197 = vpack.c.b16 %v869, %v865
    %v1198 = vpack.c.b16 %v870, %v866
    %v1199 = vpack.c.b16 %v875, %v871
    %v1200 = vpack.c.b16 %v876, %v872
    %v1201 = vpack.c.b16 %v877, %v873
    %v1202 = vpack.c.b16 %v878, %v874
    %v1203 = vpack.c.b16 %v883, %v879
    %v1204 = vpack.c.b16 %v884, %v880
    %v1205 = vpack.c.b16 %v885, %v881
    %v1206 = vpack.c.b16 %v886, %v882
    %v1207 = vpack.c.b16 %v891, %v887
    %v1208 = vpack.c.b16 %v892, %v888
    %v1209 = vpack.c.b16 %v893, %v889
    %v1210 = vpack.c.b16 %v894, %v890
    %v1211 = vpack.c.b16 %v899, %v895
    %v1212 = vpack.c.b16 %v900, %v896
    %v1213 = vpack.c.b16 %v901, %v897
    %v1214 = vpack.c.b16 %v902, %v898
    %v1215 = vpack.c.b16 %v907, %v903
    %v1216 = vpack.c.b16 %v908, %v904
    %v1217 = vpack.c.b16 %v909, %v905
    %v1218 = vpack.c.b16 %v910, %v906
    %v1219 = vpack.c.b16 %v915, %v911
    %v1220 = vpack.c.b16 %v916, %v912
    %v1221 = vpack.c.b16 %v917, %v913
    %v1222 = vpack.c.b16 %v918, %v914
    %v1223 = vpack.c.b16 %v923, %v919
    %v1224 = vpack.c.b16 %v924, %v920
    %v1225 = vpack.c.b16 %v925, %v921
    %v1226 = vpack.c.b16 %v926, %v922
    %v1227 = vpack.c.b16 %v931, %v927
    %v1228 = vpack.c.b16 %v932, %v928
    %v1229 = vpack.c.b16 %v933, %v929
    %v1230 = vpack.c.b16 %v934, %v930
    %v1231 = vpack.c.b16 %v939, %v935
    %v1232 = vpack.c.b16 %v940, %v936
    %v1233 = vpack.c.b16 %v941, %v937
    %v1234 = vpack.c.b16 %v942, %v938
    %v1235 = vpack.c.b16 %v947, %v943
    %v1236 = vpack.c.b16 %v948, %v944
    %v1237 = vpack.c.b16 %v949, %v945
    %v1238 = vpack.c.b16 %v950, %v946
    %v1239 = vpack.c.b16 %v955, %v951
    %v1240 = vpack.c.b16 %v956, %v952
    %v1241 = vpack.c.b16 %v957, %v953
    %v1242 = vpack.c.b16 %v958, %v954
    %v1243 = vpack.c.b16 %v963, %v959
    %v1244 = vpack.c.b16 %v964, %v960
    %v1245 = vpack.c.b16 %v965, %v961
    %v1246 = vpack.c.b16 %v966, %v962
    %v1247 = vpack.c.b16 %v971, %v967
    %v1248 = vpack.c.b16 %v972, %v968
    %v1249 = vpack.c.b16 %v973, %v969
    %v1250 = vpack.c.b16 %v974, %v970
    %v1251 = vpack.c.b16 %v979, %v975
    %v1252 = vpack.c.b16 %v980, %v976
    %v1253 = vpack.c.b16 %v981, %v977
    %v1254 = vpack.c.b16 %v982, %v978
    %v1255 = vpack.c.b16 %v987, %v983
    %v1256 = vpack.c.b16 %v988, %v984
    %v1257 = vpack.c.b16 %v989, %v985
    %v1258 = vpack.c.b16 %v990, %v986
    %v1259 = vpack.c.b16 %v995, %v991
    %v1260 = vpack.c.b16 %v996, %v992
    %v1261 = vpack.c.b16 %v997, %v993
    %v1262 = vpack.c.b16 %v998, %v994
    %v1263 = vpack.c.b16 %v1003, %v999
    %v1264 = vpack.c.b16 %v1004, %v1000
    %v1265 = vpack.c.b16 %v1005, %v1001
    %v1266 = vpack.c.b16 %v1006, %v1002
    %v1267 = vpack.c.b16 %v1011, %v1007
    %v1268 = vpack.c.b16 %v1012, %v1008
    %v1269 = vpack.c.b16 %v1013, %v1009
    %v1270 = vpack.c.b16 %v1014, %v1010
    %v1271 = vpack.c.b16 %v1019, %v1015
    %v1272 = vpack.c.b16 %v1020, %v1016
    %v1273 = vpack.c.b16 %v1021, %v1017
    %v1274 = vpack.c.b16 %v1022, %v1018
    %v1275 = vpack.c.b16 %v1027, %v1023
    %v1276 = vpack.c.b16 %v1028, %v1024
    %v1277 = vpack.c.b16 %v1029, %v1025
    %v1278 = vpack.c.b16 %v1030, %v1026
    %v1279 = vpack.c.b16 %v1035, %v1031
    %v1280 = vpack.c.b16 %v1036, %v1032
    %v1281 = vpack.c.b16 %v1037, %v1033
    %v1282 = vpack.c.b16 %v1038, %v1034
    %v1283 = vpack.c.b16 %v1043, %v1039
    %v1284 = vpack.c.b16 %v1044, %v1040
    %v1285 = vpack.c.b16 %v1045, %v1041
    %v1286 = vpack.c.b16 %v1046, %v1042
    %v1287 = vpack.c.b16 %v1051, %v1047
    %v1288 = vpack.c.b16 %v1052, %v1048
    %v1289 = vpack.c.b16 %v1053, %v1049
    %v1290 = vpack.c.b16 %v1054, %v1050
    %v1291 = vpack.c.b16 %v1059, %v1055
    %v1292 = vpack.c.b16 %v1060, %v1056
    %v1293 = vpack.c.b16 %v1061, %v1057
    %v1294 = vpack.c.b16 %v1062, %v1058
    %v1295 = vpack.c.b16 %v1067, %v1063
    %v1296 = vpack.c.b16 %v1068, %v1064
    %v1297 = vpack.c.b16 %v1069, %v1065
    %v1298 = vpack.c.b16 %v1070, %v1066
    %v1299 = vpack.c.b16 %v1075, %v1071
    %v1300 = vpack.c.b16 %v1076, %v1072
    %v1301 = vpack.c.b16 %v1077, %v1073
    %v1302 = vpack.c.b16 %v1078, %v1074
    %1527 = vmatprep.subr.bf16.mxu0 %v1108
    %1528 = vmatpush1.bf16.msra.mxu0 %v1107
    %1529 = vmatprep.subr.bf16.mxu0 %v1104
    %1530 = vmatpush1.bf16.msra.mxu0 %v1103
    %1531 = vmatprep.subr.bf16.mxu0 %v1100
    %1532 = vmatpush1.bf16.msra.mxu0 %v1099
    %1533 = vmatprep.subr.bf16.mxu0 %v1096
    %1534 = vmatpush1.bf16.msra.mxu0 %v1095
    %1535 = vmatprep.subr.bf16.mxu0 %v1092
    %1536 = vmatpush1.bf16.msra.mxu0 %v1091
    %1537 = vmatprep.subr.bf16.mxu0 %v1088
    %1538 = vmatpush1.bf16.msra.mxu0 %v1087
    %1539 = vmatprep.subr.bf16.mxu0 %v1084
    %1540 = vmatpush1.bf16.msra.mxu0 %v1083
    %1541 = vmatprep.subr.bf16.mxu0 %v1080
    %1542 = vmatpush1.bf16.msra.mxu0 %v1079
    %1543 = vmatprep.subr.bf16.mxu0 %v1140
    %1544 = vmatpush2.bf16.msra.mxu0 %v1139
    %1545 = vmatprep.subr.bf16.mxu0 %v1136
    %1546 = vmatpush2.bf16.msra.mxu0 %v1135
    %1547 = vmatprep.subr.bf16.mxu0 %v1132
    %1548 = vmatpush2.bf16.msra.mxu0 %v1131
    %1549 = vmatprep.subr.bf16.mxu0 %v1128
    %1550 = vmatpush2.bf16.msra.mxu0 %v1127
    %1551 = vmatprep.subr.bf16.mxu0 %v1124
    %1552 = vmatpush2.bf16.msra.mxu0 %v1123
    %1553 = vmatprep.subr.bf16.mxu0 %v1120
    %1554 = vmatpush2.bf16.msra.mxu0 %v1119
    %1555 = vmatprep.subr.bf16.mxu0 %v1116
    %1556 = vmatpush2.bf16.msra.mxu0 %v1115
    %1557 = vmatprep.subr.bf16.mxu0 %v1112
    %1558 = vmatpush2.bf16.msra.mxu0 %v1111
    %1559 = vmatprep.mubr.bf16.mxu0 %v394
    %1560 = vmatmul.mubr.bf16.gmra.mxu0 %v393
    %v1561 = vpop.f32.mrf.mxu0
    %v1562 = vadd.f32 %v354, %v1561
    %v1563 = vpop.f32.mrf.mxu0
    %v1564 = vadd.f32 %v358, %v1563
    %v1565 = vpop.f32.mrf.mxu0
    %v1566 = vadd.f32 %v354, %v1565
    %v1567 = vpop.f32.mrf.mxu0
    %v1568 = vadd.f32 %v358, %v1567
    %1569 = vdwg.mxu0
    %1570 = vmatprep.subr.bf16.mxu0 %v1172
    %1571 = vmatpush1.bf16.msra.mxu0 %v1171
    %1572 = vmatprep.subr.bf16.mxu0 %v1168
    %1573 = vmatpush1.bf16.msra.mxu0 %v1167
    %1574 = vmatprep.subr.bf16.mxu0 %v1164
    %1575 = vmatpush1.bf16.msra.mxu0 %v1163
    %1576 = vmatprep.subr.bf16.mxu0 %v1160
    %1577 = vmatpush1.bf16.msra.mxu0 %v1159
    %1578 = vmatprep.subr.bf16.mxu0 %v1156
    %1579 = vmatpush1.bf16.msra.mxu0 %v1155
    %1580 = vmatprep.subr.bf16.mxu0 %v1152
    %1581 = vmatpush1.bf16.msra.mxu0 %v1151
    %1582 = vmatprep.subr.bf16.mxu0 %v1148
    %1583 = vmatpush1.bf16.msra.mxu0 %v1147
    %1584 = vmatprep.subr.bf16.mxu0 %v1144
    %1585 = vmatpush1.bf16.msra.mxu0 %v1143
    %1586 = vmatprep.subr.bf16.mxu0 %v1204
    %1587 = vmatpush2.bf16.msra.mxu0 %v1203
    %1588 = vmatprep.subr.bf16.mxu0 %v1200
    %1589 = vmatpush2.bf16.msra.mxu0 %v1199
    %1590 = vmatprep.subr.bf16.mxu0 %v1196
    %1591 = vmatpush2.bf16.msra.mxu0 %v1195
    %1592 = vmatprep.subr.bf16.mxu0 %v1192
    %1593 = vmatpush2.bf16.msra.mxu0 %v1191
    %1594 = vmatprep.subr.bf16.mxu0 %v1188
    %1595 = vmatpush2.bf16.msra.mxu0 %v1187
    %1596 = vmatprep.subr.bf16.mxu0 %v1184
    %1597 = vmatpush2.bf16.msra.mxu0 %v1183
    %1598 = vmatprep.subr.bf16.mxu0 %v1180
    %1599 = vmatpush2.bf16.msra.mxu0 %v1179
    %1600 = vmatprep.subr.bf16.mxu0 %v1176
    %1601 = vmatpush2.bf16.msra.mxu0 %v1175
    %1602 = vmatprep.mubr.bf16.mxu0 %v396
    %1603 = vmatmul.mubr.bf16.gmra.mxu0 %v395
    %v1604 = vpop.f32.mrf.mxu0
    %v1605 = vadd.f32 %v1562, %v1604
    %v1606 = vpop.f32.mrf.mxu0
    %v1607 = vadd.f32 %v1564, %v1606
    %v1608 = vpop.f32.mrf.mxu0
    %v1609 = vadd.f32 %v1566, %v1608
    %v1610 = vpop.f32.mrf.mxu0
    %v1611 = vadd.f32 %v1568, %v1610
    %1612 = vdwg.mxu0
    %1613 = vmatprep.subr.bf16.mxu0 %v1236
    %1614 = vmatpush1.bf16.msra.mxu0 %v1235
    %1615 = vmatprep.subr.bf16.mxu0 %v1232
    %1616 = vmatpush1.bf16.msra.mxu0 %v1231
    %1617 = vmatprep.subr.bf16.mxu0 %v1228
    %1618 = vmatpush1.bf16.msra.mxu0 %v1227
    %1619 = vmatprep.subr.bf16.mxu0 %v1224
    %1620 = vmatpush1.bf16.msra.mxu0 %v1223
    %1621 = vmatprep.subr.bf16.mxu0 %v1220
    %1622 = vmatpush1.bf16.msra.mxu0 %v1219
    %1623 = vmatprep.subr.bf16.mxu0 %v1216
    %1624 = vmatpush1.bf16.msra.mxu0 %v1215
    %1625 = vmatprep.subr.bf16.mxu0 %v1212
    %1626 = vmatpush1.bf16.msra.mxu0 %v1211
    %1627 = vmatprep.subr.bf16.mxu0 %v1208
    %1628 = vmatpush1.bf16.msra.mxu0 %v1207
    %1629 = vmatprep.subr.bf16.mxu0 %v1268
    %1630 = vmatpush2.bf16.msra.mxu0 %v1267
    %1631 = vmatprep.subr.bf16.mxu0 %v1264
    %1632 = vmatpush2.bf16.msra.mxu0 %v1263
    %1633 = vmatprep.subr.bf16.mxu0 %v1260
    %1634 = vmatpush2.bf16.msra.mxu0 %v1259
    %1635 = vmatprep.subr.bf16.mxu0 %v1256
    %1636 = vmatpush2.bf16.msra.mxu0 %v1255
    %1637 = vmatprep.subr.bf16.mxu0 %v1252
    %1638 = vmatpush2.bf16.msra.mxu0 %v1251
    %1639 = vmatprep.subr.bf16.mxu0 %v1248
    %1640 = vmatpush2.bf16.msra.mxu0 %v1247
    %1641 = vmatprep.subr.bf16.mxu0 %v1244
    %1642 = vmatpush2.bf16.msra.mxu0 %v1243
    %1643 = vmatprep.subr.bf16.mxu0 %v1240
    %1644 = vmatpush2.bf16.msra.mxu0 %v1239
    %1645 = vmatprep.mubr.bf16.mxu0 %v398
    %1646 = vmatmul.mubr.bf16.gmra.mxu0 %v397
    %v1647 = vpop.f32.mrf.mxu0
    %v1648 = vadd.f32 %v1605, %v1647
    %v1649 = vpop.f32.mrf.mxu0
    %v1650 = vadd.f32 %v1607, %v1649
    %v1651 = vpop.f32.mrf.mxu0
    %v1652 = vadd.f32 %v1609, %v1651
    %v1653 = vpop.f32.mrf.mxu0
    %v1654 = vadd.f32 %v1611, %v1653
    %1655 = vdwg.mxu0
    %1656 = vmatprep.subr.bf16.mxu0 %v1300
    %1657 = vmatpush1.bf16.msra.mxu0 %v1299
    %1658 = vmatprep.subr.bf16.mxu0 %v1296
    %1659 = vmatpush1.bf16.msra.mxu0 %v1295
    %1660 = vmatprep.subr.bf16.mxu0 %v1292
    %1661 = vmatpush1.bf16.msra.mxu0 %v1291
    %1662 = vmatprep.subr.bf16.mxu0 %v1288
    %1663 = vmatpush1.bf16.msra.mxu0 %v1287
    %1664 = vmatprep.subr.bf16.mxu0 %v1284
    %1665 = vmatpush1.bf16.msra.mxu0 %v1283
    %1666 = vmatprep.subr.bf16.mxu0 %v1280
    %1667 = vmatpush1.bf16.msra.mxu0 %v1279
    %1668 = vmatprep.subr.bf16.mxu0 %v1276
    %1669 = vmatpush1.bf16.msra.mxu0 %v1275
    %1670 = vmatprep.subr.bf16.mxu0 %v1272
    %1671 = vmatpush1.bf16.msra.mxu0 %v1271
    %1672 = vmatprep.subr.bf16.mxu0 0
    %1673 = vmatpush2.bf16.msra.mxu0 0
    %1674 = vmatprep.subr.bf16.mxu0 0
    %1675 = vmatpush2.bf16.msra.mxu0 0
    %1676 = vmatprep.subr.bf16.mxu0 0
    %1677 = vmatpush2.bf16.msra.mxu0 0
    %1678 = vmatprep.subr.bf16.mxu0 0
    %1679 = vmatpush2.bf16.msra.mxu0 0
    %1680 = vmatprep.subr.bf16.mxu0 0
    %1681 = vmatpush2.bf16.msra.mxu0 0
    %1682 = vmatprep.subr.bf16.mxu0 0
    %1683 = vmatpush2.bf16.msra.mxu0 0
    %1684 = vmatprep.subr.bf16.mxu0 0
    %1685 = vmatpush2.bf16.msra.mxu0 0
    %1686 = vmatprep.subr.bf16.mxu0 0
    %1687 = vmatpush2.bf16.msra.mxu0 0
    %1688 = vmatprep.mubr.bf16.mxu0 0
    %1689 = vmatmul.mubr.bf16.gmra.mxu0 %v399
    %v1690 = vpop.f32.mrf.mxu0
    %v1691 = vadd.f32 %v1648, %v1690
    %v1692 = vpop.f32.mrf.mxu0
    %v1693 = vadd.f32 %v1650, %v1692
    %v1694 = vpop.f32.mrf.mxu0
    %v1695 = vadd.f32 %v1652, %v1694
    %v1696 = vpop.f32.mrf.mxu0
    %v1697 = vadd.f32 %v1654, %v1696
    %1698 = vdwg.mxu0
    %1699 = vmatprep.subr.bf16.mxu0 %v1110
    %1700 = vmatpush1.bf16.msra.mxu0 %v1109
    %1701 = vmatprep.subr.bf16.mxu0 %v1106
    %1702 = vmatpush1.bf16.msra.mxu0 %v1105
    %1703 = vmatprep.subr.bf16.mxu0 %v1102
    %1704 = vmatpush1.bf16.msra.mxu0 %v1101
    %1705 = vmatprep.subr.bf16.mxu0 %v1098
    %1706 = vmatpush1.bf16.msra.mxu0 %v1097
    %1707 = vmatprep.subr.bf16.mxu0 %v1094
    %1708 = vmatpush1.bf16.msra.mxu0 %v1093
    %1709 = vmatprep.subr.bf16.mxu0 %v1090
    %1710 = vmatpush1.bf16.msra.mxu0 %v1089
    %1711 = vmatprep.subr.bf16.mxu0 %v1086
    %1712 = vmatpush1.bf16.msra.mxu0 %v1085
    %1713 = vmatprep.subr.bf16.mxu0 %v1082
    %1714 = vmatpush1.bf16.msra.mxu0 %v1081
    %1715 = vmatprep.subr.bf16.mxu0 %v1142
    %1716 = vmatpush2.bf16.msra.mxu0 %v1141
    %1717 = vmatprep.subr.bf16.mxu0 %v1138
    %1718 = vmatpush2.bf16.msra.mxu0 %v1137
    %1719 = vmatprep.subr.bf16.mxu0 %v1134
    %1720 = vmatpush2.bf16.msra.mxu0 %v1133
    %1721 = vmatprep.subr.bf16.mxu0 %v1130
    %1722 = vmatpush2.bf16.msra.mxu0 %v1129
    %1723 = vmatprep.subr.bf16.mxu0 %v1126
    %1724 = vmatpush2.bf16.msra.mxu0 %v1125
    %1725 = vmatprep.subr.bf16.mxu0 %v1122
    %1726 = vmatpush2.bf16.msra.mxu0 %v1121
    %1727 = vmatprep.subr.bf16.mxu0 %v1118
    %1728 = vmatpush2.bf16.msra.mxu0 %v1117
    %1729 = vmatprep.subr.bf16.mxu0 %v1114
    %1730 = vmatpush2.bf16.msra.mxu0 %v1113
    %1731 = vmatprep.mubr.bf16.mxu0 %v394
    %1732 = vmatmul.mubr.bf16.gmra.mxu0 %v393
    %v1733 = vpop.f32.mrf.mxu0
    %v1734 = vadd.f32 %v362, %v1733
    %v1735 = vpop.f32.mrf.mxu0
    %v1736 = vadd.f32 %v366, %v1735
    %v1737 = vpop.f32.mrf.mxu0
    %v1738 = vadd.f32 %v362, %v1737
    %v1739 = vpop.f32.mrf.mxu0
    %v1740 = vadd.f32 %v366, %v1739
    %1741 = vdwg.mxu0
    %1742 = vmatprep.subr.bf16.mxu0 %v1174
    %1743 = vmatpush1.bf16.msra.mxu0 %v1173
    %1744 = vmatprep.subr.bf16.mxu0 %v1170
    %1745 = vmatpush1.bf16.msra.mxu0 %v1169
    %1746 = vmatprep.subr.bf16.mxu0 %v1166
    %1747 = vmatpush1.bf16.msra.mxu0 %v1165
    %1748 = vmatprep.subr.bf16.mxu0 %v1162
    %1749 = vmatpush1.bf16.msra.mxu0 %v1161
    %1750 = vmatprep.subr.bf16.mxu0 %v1158
    %1751 = vmatpush1.bf16.msra.mxu0 %v1157
    %1752 = vmatprep.subr.bf16.mxu0 %v1154
    %1753 = vmatpush1.bf16.msra.mxu0 %v1153
    %1754 = vmatprep.subr.bf16.mxu0 %v1150
    %1755 = vmatpush1.bf16.msra.mxu0 %v1149
    %1756 = vmatprep.subr.bf16.mxu0 %v1146
    %1757 = vmatpush1.bf16.msra.mxu0 %v1145
    %1758 = vmatprep.subr.bf16.mxu0 %v1206
    %1759 = vmatpush2.bf16.msra.mxu0 %v1205
    %1760 = vmatprep.subr.bf16.mxu0 %v1202
    %1761 = vmatpush2.bf16.msra.mxu0 %v1201
    %1762 = vmatprep.subr.bf16.mxu0 %v1198
    %1763 = vmatpush2.bf16.msra.mxu0 %v1197
    %1764 = vmatprep.subr.bf16.mxu0 %v1194
    %1765 = vmatpush2.bf16.msra.mxu0 %v1193
    %1766 = vmatprep.subr.bf16.mxu0 %v1190
    %1767 = vmatpush2.bf16.msra.mxu0 %v1189
    %1768 = vmatprep.subr.bf16.mxu0 %v1186
    %1769 = vmatpush2.bf16.msra.mxu0 %v1185
    %1770 = vmatprep.subr.bf16.mxu0 %v1182
    %1771 = vmatpush2.bf16.msra.mxu0 %v1181
    %1772 = vmatprep.subr.bf16.mxu0 %v1178
    %1773 = vmatpush2.bf16.msra.mxu0 %v1177
    %1774 = vmatprep.mubr.bf16.mxu0 %v396
    %1775 = vmatmul.mubr.bf16.gmra.mxu0 %v395
    %v1776 = vpop.f32.mrf.mxu0
    %v1777 = vadd.f32 %v1734, %v1776
    %v1778 = vpop.f32.mrf.mxu0
    %v1779 = vadd.f32 %v1736, %v1778
    %v1780 = vpop.f32.mrf.mxu0
    %v1781 = vadd.f32 %v1738, %v1780
    %v1782 = vpop.f32.mrf.mxu0
    %v1783 = vadd.f32 %v1740, %v1782
    %1784 = vdwg.mxu0
    %1785 = vmatprep.subr.bf16.mxu0 %v1238
    %1786 = vmatpush1.bf16.msra.mxu0 %v1237
    %1787 = vmatprep.subr.bf16.mxu0 %v1234
    %1788 = vmatpush1.bf16.msra.mxu0 %v1233
    %1789 = vmatprep.subr.bf16.mxu0 %v1230
    %1790 = vmatpush1.bf16.msra.mxu0 %v1229
    %1791 = vmatprep.subr.bf16.mxu0 %v1226
    %1792 = vmatpush1.bf16.msra.mxu0 %v1225
    %1793 = vmatprep.subr.bf16.mxu0 %v1222
    %1794 = vmatpush1.bf16.msra.mxu0 %v1221
    %1795 = vmatprep.subr.bf16.mxu0 %v1218
    %1796 = vmatpush1.bf16.msra.mxu0 %v1217
    %1797 = vmatprep.subr.bf16.mxu0 %v1214
    %1798 = vmatpush1.bf16.msra.mxu0 %v1213
    %1799 = vmatprep.subr.bf16.mxu0 %v1210
    %1800 = vmatpush1.bf16.msra.mxu0 %v1209
    %1801 = vmatprep.subr.bf16.mxu0 %v1270
    %1802 = vmatpush2.bf16.msra.mxu0 %v1269
    %1803 = vmatprep.subr.bf16.mxu0 %v1266
    %1804 = vmatpush2.bf16.msra.mxu0 %v1265
    %1805 = vmatprep.subr.bf16.mxu0 %v1262
    %1806 = vmatpush2.bf16.msra.mxu0 %v1261
    %1807 = vmatprep.subr.bf16.mxu0 %v1258
    %1808 = vmatpush2.bf16.msra.mxu0 %v1257
    %1809 = vmatprep.subr.bf16.mxu0 %v1254
    %1810 = vmatpush2.bf16.msra.mxu0 %v1253
    %1811 = vmatprep.subr.bf16.mxu0 %v1250
    %1812 = vmatpush2.bf16.msra.mxu0 %v1249
    %1813 = vmatprep.subr.bf16.mxu0 %v1246
    %1814 = vmatpush2.bf16.msra.mxu0 %v1245
    %1815 = vmatprep.subr.bf16.mxu0 %v1242
    %1816 = vmatpush2.bf16.msra.mxu0 %v1241
    %1817 = vmatprep.mubr.bf16.mxu0 %v398
    %1818 = vmatmul.mubr.bf16.gmra.mxu0 %v397
    %v1819 = vpop.f32.mrf.mxu0
    %v1820 = vadd.f32 %v1777, %v1819
    %v1821 = vpop.f32.mrf.mxu0
    %v1822 = vadd.f32 %v1779, %v1821
    %v1823 = vpop.f32.mrf.mxu0
    %v1824 = vadd.f32 %v1781, %v1823
    %v1825 = vpop.f32.mrf.mxu0
    %v1826 = vadd.f32 %v1783, %v1825
    %1827 = vdwg.mxu0
    %1828 = vmatprep.subr.bf16.mxu0 %v1302
    %1829 = vmatpush1.bf16.msra.mxu0 %v1301
    %1830 = vmatprep.subr.bf16.mxu0 %v1298
    %1831 = vmatpush1.bf16.msra.mxu0 %v1297
    %1832 = vmatprep.subr.bf16.mxu0 %v1294
    %1833 = vmatpush1.bf16.msra.mxu0 %v1293
    %1834 = vmatprep.subr.bf16.mxu0 %v1290
    %1835 = vmatpush1.bf16.msra.mxu0 %v1289
    %1836 = vmatprep.subr.bf16.mxu0 %v1286
    %1837 = vmatpush1.bf16.msra.mxu0 %v1285
    %1838 = vmatprep.subr.bf16.mxu0 %v1282
    %1839 = vmatpush1.bf16.msra.mxu0 %v1281
    %1840 = vmatprep.subr.bf16.mxu0 %v1278
    %1841 = vmatpush1.bf16.msra.mxu0 %v1277
    %1842 = vmatprep.subr.bf16.mxu0 %v1274
    %1843 = vmatpush1.bf16.msra.mxu0 %v1273
    %1844 = vmatprep.subr.bf16.mxu0 0
    %1845 = vmatpush2.bf16.msra.mxu0 0
    %1846 = vmatprep.subr.bf16.mxu0 0
    %1847 = vmatpush2.bf16.msra.mxu0 0
    %1848 = vmatprep.subr.bf16.mxu0 0
    %1849 = vmatpush2.bf16.msra.mxu0 0
    %1850 = vmatprep.subr.bf16.mxu0 0
    %1851 = vmatpush2.bf16.msra.mxu0 0
    %1852 = vmatprep.subr.bf16.mxu0 0
    %1853 = vmatpush2.bf16.msra.mxu0 0
    %1854 = vmatprep.subr.bf16.mxu0 0
    %1855 = vmatpush2.bf16.msra.mxu0 0
    %1856 = vmatprep.subr.bf16.mxu0 0
    %1857 = vmatpush2.bf16.msra.mxu0 0
    %1858 = vmatprep.subr.bf16.mxu0 0
    %1859 = vmatpush2.bf16.msra.mxu0 0
    %1860 = vmatprep.mubr.bf16.mxu0 0
    %1861 = vmatmul.mubr.bf16.gmra.mxu0 %v399
    %v1862 = vpop.f32.mrf.mxu0
    %v1863 = vadd.f32 %v1820, %v1862
    %v1864 = vpop.f32.mrf.mxu0
    %v1865 = vadd.f32 %v1822, %v1864
    %v1866 = vpop.f32.mrf.mxu0
    %v1867 = vadd.f32 %v1824, %v1866
    %v1868 = vpop.f32.mrf.mxu0
    %v1869 = vadd.f32 %v1826, %v1868
    %1870 = vdwg.mxu0
    %v1871 = vmax.f32 %v1691, 0.0
    %v1872 = vmax.f32 %v1693, 0.0
    %v1873 = vmax.f32 %v1863, 0.0
    %v1874 = vmax.f32 %v1865, 0.0
    %v1875 = vmax.f32 %v1695, 0.0
    %v1876 = vmax.f32 %v1697, 0.0
    %v1877 = vmax.f32 %v1867, 0.0
    %v1878 = vmax.f32 %v1869, 0.0
    %v1879 = vpack.c.bf16 %v1875, %v1871
    %v1880 = vpack.c.bf16 %v1876, %v1872
    %v1881 = vpack.c.bf16 %v1877, %v1873
    %v1882 = vpack.c.bf16 %v1878, %v1874
    %v1883 = vld [vmem:[#allocation8] sm:$0xf]
    %v1884 = vld [vmem:[#allocation8 + $0x4] sm:$0xf]
    %v1885 = vld [vmem:[#allocation8 + $0x8] sm:$0xf]
    %v1886 = vld [vmem:[#allocation8 + $0xc] sm:$0xf]
    %v1887 = vld [vmem:[#allocation8 + $0x10] sm:$0xf]
    %v1888 = vld [vmem:[#allocation8 + $0x14] sm:$0xf]
    %v1889 = vld [vmem:[#allocation8 + $0x18] sm:$0xf]
    %v1890 = vld [vmem:[#allocation8 + $0x1c] sm:$0xf]
    %v1891 = vld [vmem:[#allocation8 + $0x20] sm:$0xf]
    %v1892 = vld [vmem:[#allocation8 + $0x24] sm:$0xf]
    %v1893 = vld [vmem:[#allocation8 + $0x28] sm:$0xf]
    %v1894 = vld [vmem:[#allocation8 + $0x2c] sm:$0xf]
    %v1895 = vld [vmem:[#allocation8 + $0x30] sm:$0xf]
    %v1896 = vld [vmem:[#allocation8 + $0x34] sm:$0xf]
    %v1897 = vld [vmem:[#allocation8 + $0x38] sm:$0xf]
    %v1898 = vld [vmem:[#allocation8 + $0x3c] sm:$0xf]
    %v1899 = vld [vmem:[#allocation8 + $0x40] sm:$0xf]
    %v1900 = vld [vmem:[#allocation8 + $0x44] sm:$0xf]
    %v1901 = vld [vmem:[#allocation8 + $0x48] sm:$0xf]
    %v1902 = vld [vmem:[#allocation8 + $0x4c] sm:$0xf]
    %v1903 = vld [vmem:[#allocation8 + $0x50] sm:$0xf]
    %v1904 = vld [vmem:[#allocation8 + $0x54] sm:$0xf]
    %v1905 = vld [vmem:[#allocation8 + $0x58] sm:$0xf]
    %v1906 = vld [vmem:[#allocation8 + $0x5c] sm:$0xf]
    %v1907 = vld [vmem:[#allocation8 + $0x60] sm:$0xf]
    %v1908 = vld [vmem:[#allocation8 + $0x64] sm:$0xf]
    %v1909 = vld [vmem:[#allocation8 + $0x68] sm:$0xf]
    %v1910 = vld [vmem:[#allocation8 + $0x6c] sm:$0xf]
    %v1911 = vld [vmem:[#allocation8 + $0x70] sm:$0xf]
    %v1912 = vld [vmem:[#allocation8 + $0x74] sm:$0xf]
    %v1913 = vld [vmem:[#allocation8 + $0x78] sm:$0xf]
    %v1914 = vld [vmem:[#allocation8 + $0x7c] sm:$0xf]
    %v1915 = vld [vmem:[#allocation8 + $0x80] sm:$0xf]
    %v1916 = vld [vmem:[#allocation8 + $0x84] sm:$0xf]
    %v1917 = vld [vmem:[#allocation8 + $0x88] sm:$0xf]
    %v1918 = vld [vmem:[#allocation8 + $0x8c] sm:$0xf]
    %v1919 = vld [vmem:[#allocation8 + $0x90] sm:$0xf]
    %v1920 = vld [vmem:[#allocation8 + $0x94] sm:$0xf]
    %v1921 = vld [vmem:[#allocation8 + $0x98] sm:$0xf]
    %v1922 = vld [vmem:[#allocation8 + $0x9c] sm:$0xf]
    %v1923 = vld [vmem:[#allocation8 + $0xa0] sm:$0xf]
    %v1924 = vld [vmem:[#allocation8 + $0xa4] sm:$0xf]
    %v1925 = vld [vmem:[#allocation8 + $0xa8] sm:$0xf]
    %v1926 = vld [vmem:[#allocation8 + $0xac] sm:$0xf]
    %v1927 = vld [vmem:[#allocation8 + $0xb0] sm:$0xf]
    %v1928 = vld [vmem:[#allocation8 + $0xb4] sm:$0xf]
    %v1929 = vld [vmem:[#allocation8 + $0xb8] sm:$0xf]
    %v1930 = vld [vmem:[#allocation8 + $0xbc] sm:$0xf]
    %v1931 = vld [vmem:[#allocation8 + $0xc0] sm:$0xf]
    %v1932 = vld [vmem:[#allocation8 + $0xc4] sm:$0xf]
    %v1933 = vld [vmem:[#allocation8 + $0xc8] sm:$0xf]
    %v1934 = vld [vmem:[#allocation8 + $0xcc] sm:$0xf]
    %v1935 = vld [vmem:[#allocation8 + $0xd0] sm:$0xf]
    %v1936 = vld [vmem:[#allocation8 + $0xd4] sm:$0xf]
    %v1937 = vld [vmem:[#allocation8 + $0xd8] sm:$0xf]
    %v1938 = vld [vmem:[#allocation8 + $0xdc] sm:$0xf]
    %v1939 = vld [vmem:[#allocation8 + $0xe0] sm:$0xf]
    %v1940 = vld [vmem:[#allocation8 + $0xe4] sm:$0xf]
    %v1941 = vld [vmem:[#allocation8 + $0xe8] sm:$0xf]
    %v1942 = vld [vmem:[#allocation8 + $0xec] sm:$0xf]
    %v1943 = vld [vmem:[#allocation8 + $0xf0] sm:$0xf]
    %v1944 = vld [vmem:[#allocation8 + $0xf4] sm:$0xf]
    %v1945 = vld [vmem:[#allocation8 + $0xf8] sm:$0xf]
    %v1946 = vld [vmem:[#allocation8 + $0xfc] sm:$0xf]
    %v1947 = vld [vmem:[%s4] sm:$0x1]
    %v1949 = vlaneseq
    %v1950 = vshrl.u32 %v1949, 7
    %v1951 = vsub.s32 0, %v1950
    %v1952 = vrot.slane %v1947, %v1951
    %v2018 = vunpack.c.l.b16 %v1883
    %v2019 = vunpack.c.l.b16 %v1884
    %v2020 = vunpack.c.l.b16 %v1885
    %v2021 = vunpack.c.l.b16 %v1886
    %v2022 = vunpack.c.l.b16 %v1887
    %v2023 = vunpack.c.l.b16 %v1888
    %v2024 = vunpack.c.l.b16 %v1889
    %v2025 = vunpack.c.l.b16 %v1890
    %v2026 = vunpack.c.l.b16 %v1891
    %v2027 = vunpack.c.l.b16 %v1892
    %v2028 = vunpack.c.l.b16 %v1893
    %v2029 = vunpack.c.l.b16 %v1894
    %v2030 = vunpack.c.l.b16 %v1895
    %v2031 = vunpack.c.l.b16 %v1896
    %v2032 = vunpack.c.l.b16 %v1897
    %v2033 = vunpack.c.l.b16 %v1898
    %v2034 = vunpack.c.l.b16 %v1899
    %v2035 = vunpack.c.l.b16 %v1900
    %v2036 = vunpack.c.l.b16 %v1901
    %v2037 = vunpack.c.l.b16 %v1902
    %v2038 = vunpack.c.l.b16 %v1903
    %v2039 = vunpack.c.l.b16 %v1904
    %v2040 = vunpack.c.l.b16 %v1905
    %v2041 = vunpack.c.l.b16 %v1906
    %v2042 = vunpack.c.l.b16 %v1907
    %v2043 = vunpack.c.l.b16 %v1908
    %v2044 = vunpack.c.l.b16 %v1909
    %v2045 = vunpack.c.l.b16 %v1910
    %v2046 = vunpack.c.l.b16 %v1911
    %v2047 = vunpack.c.l.b16 %v1912
    %v2048 = vunpack.c.l.b16 %v1913
    %v2049 = vunpack.c.l.b16 %v1914
    %v2050 = vunpack.c.l.b16 %v1915
    %v2051 = vunpack.c.l.b16 %v1916
    %v2052 = vunpack.c.l.b16 %v1917
    %v2053 = vunpack.c.l.b16 %v1918
    %v2054 = vunpack.c.l.b16 %v1919
    %v2055 = vunpack.c.l.b16 %v1920
    %v2056 = vunpack.c.l.b16 %v1921
    %v2057 = vunpack.c.l.b16 %v1922
    %v2058 = vunpack.c.l.b16 %v1923
    %v2059 = vunpack.c.l.b16 %v1924
    %v2060 = vunpack.c.l.b16 %v1925
    %v2061 = vunpack.c.l.b16 %v1926
    %v2062 = vunpack.c.l.b16 %v1927
    %v2063 = vunpack.c.l.b16 %v1928
    %v2064 = vunpack.c.l.b16 %v1929
    %v2065 = vunpack.c.l.b16 %v1930
    %v2066 = vunpack.c.l.b16 %v1931
    %v2067 = vunpack.c.l.b16 %v1932
    %v2068 = vunpack.c.l.b16 %v1933
    %v2069 = vunpack.c.l.b16 %v1934
    %v2070 = vunpack.c.l.b16 %v1935
    %v2071 = vunpack.c.l.b16 %v1936
    %v2072 = vunpack.c.l.b16 %v1937
    %v2073 = vunpack.c.l.b16 %v1938
    %v2074 = vunpack.c.l.b16 %v1939
    %v2075 = vunpack.c.l.b16 %v1940
    %v2076 = vunpack.c.l.b16 %v1941
    %v2077 = vunpack.c.l.b16 %v1942
    %v2078 = vunpack.c.l.b16 %v1943
    %v2079 = vunpack.c.l.b16 %v1944
    %v2080 = vunpack.c.l.b16 %v1945
    %v2081 = vunpack.c.l.b16 %v1946
    %v2082 = vpack.c.b16 %v2019, %v2018
    %v2083 = vpack.c.b16 %v2021, %v2020
    %v2084 = vpack.c.b16 %v2023, %v2022
    %v2085 = vpack.c.b16 %v2025, %v2024
    %v2086 = vpack.c.b16 %v2027, %v2026
    %v2087 = vpack.c.b16 %v2029, %v2028
    %v2088 = vpack.c.b16 %v2031, %v2030
    %v2089 = vpack.c.b16 %v2033, %v2032
    %v2090 = vpack.c.b16 %v2035, %v2034
    %v2091 = vpack.c.b16 %v2037, %v2036
    %v2092 = vpack.c.b16 %v2039, %v2038
    %v2093 = vpack.c.b16 %v2041, %v2040
    %v2094 = vpack.c.b16 %v2043, %v2042
    %v2095 = vpack.c.b16 %v2045, %v2044
    %v2096 = vpack.c.b16 %v2047, %v2046
    %v2097 = vpack.c.b16 %v2049, %v2048
    %v2098 = vpack.c.b16 %v2051, %v2050
    %v2099 = vpack.c.b16 %v2053, %v2052
    %v2100 = vpack.c.b16 %v2055, %v2054
    %v2101 = vpack.c.b16 %v2057, %v2056
    %v2102 = vpack.c.b16 %v2059, %v2058
    %v2103 = vpack.c.b16 %v2061, %v2060
    %v2104 = vpack.c.b16 %v2063, %v2062
    %v2105 = vpack.c.b16 %v2065, %v2064
    %v2106 = vpack.c.b16 %v2067, %v2066
    %v2107 = vpack.c.b16 %v2069, %v2068
    %v2108 = vpack.c.b16 %v2071, %v2070
    %v2109 = vpack.c.b16 %v2073, %v2072
    %v2110 = vpack.c.b16 %v2075, %v2074
    %v2111 = vpack.c.b16 %v2077, %v2076
    %v2112 = vpack.c.b16 %v2079, %v2078
    %v2113 = vpack.c.b16 %v2081, %v2080
    %2146 = vmatprep.subr.bf16.mxu0 0
    %2147 = vmatpush1.bf16.msra.mxu0 %v2089
    %2148 = vmatprep.subr.bf16.mxu0 0
    %2149 = vmatpush1.bf16.msra.mxu0 %v2088
    %2150 = vmatprep.subr.bf16.mxu0 0
    %2151 = vmatpush1.bf16.msra.mxu0 %v2087
    %2152 = vmatprep.subr.bf16.mxu0 0
    %2153 = vmatpush1.bf16.msra.mxu0 %v2086
    %2154 = vmatprep.subr.bf16.mxu0 0
    %2155 = vmatpush1.bf16.msra.mxu0 %v2085
    %2156 = vmatprep.subr.bf16.mxu0 0
    %2157 = vmatpush1.bf16.msra.mxu0 %v2084
    %2158 = vmatprep.subr.bf16.mxu0 0
    %2159 = vmatpush1.bf16.msra.mxu0 %v2083
    %2160 = vmatprep.subr.bf16.mxu0 0
    %2161 = vmatpush1.bf16.msra.mxu0 %v2082
    %2162 = vmatprep.subr.bf16.mxu0 0
    %2163 = vmatpush2.bf16.msra.mxu0 %v2097
    %2164 = vmatprep.subr.bf16.mxu0 0
    %2165 = vmatpush2.bf16.msra.mxu0 %v2096
    %2166 = vmatprep.subr.bf16.mxu0 0
    %2167 = vmatpush2.bf16.msra.mxu0 %v2095
    %2168 = vmatprep.subr.bf16.mxu0 0
    %2169 = vmatpush2.bf16.msra.mxu0 %v2094
    %2170 = vmatprep.subr.bf16.mxu0 0
    %2171 = vmatpush2.bf16.msra.mxu0 %v2093
    %2172 = vmatprep.subr.bf16.mxu0 0
    %2173 = vmatpush2.bf16.msra.mxu0 %v2092
    %2174 = vmatprep.subr.bf16.mxu0 0
    %2175 = vmatpush2.bf16.msra.mxu0 %v2091
    %2176 = vmatprep.subr.bf16.mxu0 0
    %2177 = vmatpush2.bf16.msra.mxu0 %v2090
    %2178 = vmatprep.mubr.bf16.mxu0 %v1880
    %2179 = vmatmul.mubr.bf16.gmra.mxu0 %v1879
    %v2180 = vpop.f32.mrf.mxu0
    %v2181 = vadd.f32 %v1952, %v2180
    %v2182 = vpop.f32.mrf.mxu0
    %v2183 = vpop.f32.mrf.mxu0
    %v2184 = vadd.f32 %v1952, %v2183
    %v2185 = vpop.f32.mrf.mxu0
    %2186 = vdwg.mxu0
    %2187 = vmatprep.subr.bf16.mxu0 0
    %2188 = vmatpush1.bf16.msra.mxu0 %v2105
    %2189 = vmatprep.subr.bf16.mxu0 0
    %2190 = vmatpush1.bf16.msra.mxu0 %v2104
    %2191 = vmatprep.subr.bf16.mxu0 0
    %2192 = vmatpush1.bf16.msra.mxu0 %v2103
    %2193 = vmatprep.subr.bf16.mxu0 0
    %2194 = vmatpush1.bf16.msra.mxu0 %v2102
    %2195 = vmatprep.subr.bf16.mxu0 0
    %2196 = vmatpush1.bf16.msra.mxu0 %v2101
    %2197 = vmatprep.subr.bf16.mxu0 0
    %2198 = vmatpush1.bf16.msra.mxu0 %v2100
    %2199 = vmatprep.subr.bf16.mxu0 0
    %2200 = vmatpush1.bf16.msra.mxu0 %v2099
    %2201 = vmatprep.subr.bf16.mxu0 0
    %2202 = vmatpush1.bf16.msra.mxu0 %v2098
    %2203 = vmatprep.subr.bf16.mxu0 0
    %2204 = vmatpush2.bf16.msra.mxu0 %v2113
    %2205 = vmatprep.subr.bf16.mxu0 0
    %2206 = vmatpush2.bf16.msra.mxu0 %v2112
    %2207 = vmatprep.subr.bf16.mxu0 0
    %2208 = vmatpush2.bf16.msra.mxu0 %v2111
    %2209 = vmatprep.subr.bf16.mxu0 0
    %2210 = vmatpush2.bf16.msra.mxu0 %v2110
    %2211 = vmatprep.subr.bf16.mxu0 0
    %2212 = vmatpush2.bf16.msra.mxu0 %v2109
    %2213 = vmatprep.subr.bf16.mxu0 0
    %2214 = vmatpush2.bf16.msra.mxu0 %v2108
    %2215 = vmatprep.subr.bf16.mxu0 0
    %2216 = vmatpush2.bf16.msra.mxu0 %v2107
    %2217 = vmatprep.subr.bf16.mxu0 0
    %2218 = vmatpush2.bf16.msra.mxu0 %v2106
    %2219 = vmatprep.mubr.bf16.mxu0 %v1882
    %2220 = vmatmul.mubr.bf16.gmra.mxu0 %v1881
    %v2221 = vpop.f32.mrf.mxu0
    %v2222 = vadd.f32 %v2181, %v2221
    %v2223 = vpop.f32.mrf.mxu0
    %v2224 = vpop.f32.mrf.mxu0
    %v2225 = vadd.f32 %v2184, %v2224
    %v2226 = vpop.f32.mrf.mxu0
    %2227 = vdwg.mxu0
    %v2228 = vmax.f32 %v2222, 0.0
    %v2229 = vmax.f32 %v2225, 0.0
    %v2230 = vpack.c.bf16 %v2229, %v2228
    %v2231 = vld [vmem:[#allocation10] sm:$0xff]
    %v2232 = vld [vmem:[#allocation10 + $0x8] sm:$0xff]
    %v2233 = vld [vmem:[#allocation10 + $0x10] sm:$0xff]
    %v2234 = vld [vmem:[#allocation10 + $0x18] sm:$0xff]
    %v2235 = vld [vmem:[#allocation10 + $0x20] sm:$0xff]
    %v2236 = vld [vmem:[#allocation10 + $0x28] sm:$0xff]
    %v2237 = vld [vmem:[#allocation10 + $0x30] sm:$0xff]
    %v2238 = vld [vmem:[#allocation10 + $0x38] sm:$0xff]
    %v2239 = vld [vmem:[#allocation10 + $0x40] sm:$0xff]
    %v2240 = vld [vmem:[#allocation10 + $0x48] sm:$0xff]
    %v2241 = vld [vmem:[#allocation10 + $0x50] sm:$0xff]
    %v2242 = vld [vmem:[#allocation10 + $0x58] sm:$0xff]
    %v2243 = vld [vmem:[#allocation10 + $0x60] sm:$0xff]
    %v2244 = vld [vmem:[#allocation10 + $0x68] sm:$0xff]
    %v2245 = vld [vmem:[#allocation10 + $0x70] sm:$0xff]
    %v2246 = vld [vmem:[#allocation10 + $0x78] sm:$0xff]
    %v2247 = vld [vmem:[#allocation10 + $0x80] sm:$0xff]
    %v2248 = vld [vmem:[#allocation10 + $0x88] sm:$0xff]
    %v2249 = vld [vmem:[#allocation10 + $0x90] sm:$0xff]
    %v2250 = vld [vmem:[#allocation10 + $0x98] sm:$0xff]
    %v2251 = vld [vmem:[#allocation10 + $0xa0] sm:$0xff]
    %v2252 = vld [vmem:[#allocation10 + $0xa8] sm:$0xff]
    %v2253 = vld [vmem:[#allocation10 + $0xb0] sm:$0xff]
    %v2254 = vld [vmem:[#allocation10 + $0xb8] sm:$0xff]
    %v2255 = vld [vmem:[#allocation10 + $0xc0] sm:$0xff]
    %v2256 = vld [vmem:[#allocation10 + $0xc8] sm:$0xff]
    %v2257 = vld [vmem:[#allocation10 + $0xd0] sm:$0xff]
    %v2258 = vld [vmem:[#allocation10 + $0xd8] sm:$0xff]
    %v2259 = vld [vmem:[#allocation10 + $0xe0] sm:$0xff]
    %v2260 = vld [vmem:[#allocation10 + $0xe8] sm:$0xff]
    %v2261 = vld [vmem:[#allocation10 + $0xf0] sm:$0xff]
    %v2262 = vld [vmem:[#allocation10 + $0xf8] sm:$0xff]
    %v2263 = vld [vmem:[%s6] sm:$0xf]
    %v2265 = vlaneseq
    %v2266 = vshrl.u32 %v2265, 7
    %v2267 = vsub.s32 0, %v2266
    %v2268 = vrot.slane %v2263, %v2267
    %v2269 = vlaneseq
    %v2270 = vshrl.u32 %v2269, 7
    %v2271 = vsub.s32 1, %v2270
    %v2272 = vrot.slane %v2263, %v2271
    %v2273 = vlaneseq
    %v2274 = vshrl.u32 %v2273, 7
    %v2275 = vsub.s32 2, %v2274
    %v2276 = vrot.slane %v2263, %v2275
    %v2277 = vlaneseq
    %v2278 = vshrl.u32 %v2277, 7
    %v2279 = vsub.s32 3, %v2278
    %v2280 = vrot.slane %v2263, %v2279
    %v2317 = vunpack.c.l.b16 %v2231
    %v2318 = vunpack.c.h.b16 %v2231
    %v2319 = vunpack.c.l.b16 %v2232
    %v2320 = vunpack.c.h.b16 %v2232
    %v2321 = vunpack.c.l.b16 %v2233
    %v2322 = vunpack.c.h.b16 %v2233
    %v2323 = vunpack.c.l.b16 %v2234
    %v2324 = vunpack.c.h.b16 %v2234
    %v2325 = vunpack.c.l.b16 %v2235
    %v2326 = vunpack.c.h.b16 %v2235
    %v2327 = vunpack.c.l.b16 %v2236
    %v2328 = vunpack.c.h.b16 %v2236
    %v2329 = vunpack.c.l.b16 %v2237
    %v2330 = vunpack.c.h.b16 %v2237
    %v2331 = vunpack.c.l.b16 %v2238
    %v2332 = vunpack.c.h.b16 %v2238
    %v2333 = vunpack.c.l.b16 %v2239
    %v2334 = vunpack.c.h.b16 %v2239
    %v2335 = vunpack.c.l.b16 %v2240
    %v2336 = vunpack.c.h.b16 %v2240
    %v2337 = vunpack.c.l.b16 %v2241
    %v2338 = vunpack.c.h.b16 %v2241
    %v2339 = vunpack.c.l.b16 %v2242
    %v2340 = vunpack.c.h.b16 %v2242
    %v2341 = vunpack.c.l.b16 %v2243
    %v2342 = vunpack.c.h.b16 %v2243
    %v2343 = vunpack.c.l.b16 %v2244
    %v2344 = vunpack.c.h.b16 %v2244
    %v2345 = vunpack.c.l.b16 %v2245
    %v2346 = vunpack.c.h.b16 %v2245
    %v2347 = vunpack.c.l.b16 %v2246
    %v2348 = vunpack.c.h.b16 %v2246
    %v2349 = vunpack.c.l.b16 %v2247
    %v2350 = vunpack.c.h.b16 %v2247
    %v2351 = vunpack.c.l.b16 %v2248
    %v2352 = vunpack.c.h.b16 %v2248
    %v2353 = vunpack.c.l.b16 %v2249
    %v2354 = vunpack.c.h.b16 %v2249
    %v2355 = vunpack.c.l.b16 %v2250
    %v2356 = vunpack.c.h.b16 %v2250
    %v2357 = vunpack.c.l.b16 %v2251
    %v2358 = vunpack.c.h.b16 %v2251
    %v2359 = vunpack.c.l.b16 %v2252
    %v2360 = vunpack.c.h.b16 %v2252
    %v2361 = vunpack.c.l.b16 %v2253
    %v2362 = vunpack.c.h.b16 %v2253
    %v2363 = vunpack.c.l.b16 %v2254
    %v2364 = vunpack.c.h.b16 %v2254
    %v2365 = vunpack.c.l.b16 %v2255
    %v2366 = vunpack.c.h.b16 %v2255
    %v2367 = vunpack.c.l.b16 %v2256
    %v2368 = vunpack.c.h.b16 %v2256
    %v2369 = vunpack.c.l.b16 %v2257
    %v2370 = vunpack.c.h.b16 %v2257
    %v2371 = vunpack.c.l.b16 %v2258
    %v2372 = vunpack.c.h.b16 %v2258
    %v2373 = vunpack.c.l.b16 %v2259
    %v2374 = vunpack.c.h.b16 %v2259
    %v2375 = vunpack.c.l.b16 %v2260
    %v2376 = vunpack.c.h.b16 %v2260
    %v2377 = vunpack.c.l.b16 %v2261
    %v2378 = vunpack.c.h.b16 %v2261
    %v2379 = vunpack.c.l.b16 %v2262
    %v2380 = vunpack.c.h.b16 %v2262
    %v2381 = vpack.c.b16 %v2321, %v2317
    %v2382 = vpack.c.b16 %v2322, %v2318
    %v2383 = vpack.c.b16 %v2323, %v2319
    %v2384 = vpack.c.b16 %v2324, %v2320
    %v2385 = vpack.c.b16 %v2329, %v2325
    %v2386 = vpack.c.b16 %v2330, %v2326
    %v2387 = vpack.c.b16 %v2331, %v2327
    %v2388 = vpack.c.b16 %v2332, %v2328
    %v2389 = vpack.c.b16 %v2337, %v2333
    %v2390 = vpack.c.b16 %v2338, %v2334
    %v2391 = vpack.c.b16 %v2339, %v2335
    %v2392 = vpack.c.b16 %v2340, %v2336
    %v2393 = vpack.c.b16 %v2345, %v2341
    %v2394 = vpack.c.b16 %v2346, %v2342
    %v2395 = vpack.c.b16 %v2347, %v2343
    %v2396 = vpack.c.b16 %v2348, %v2344
    %v2397 = vpack.c.b16 %v2353, %v2349
    %v2398 = vpack.c.b16 %v2354, %v2350
    %v2399 = vpack.c.b16 %v2355, %v2351
    %v2400 = vpack.c.b16 %v2356, %v2352
    %v2401 = vpack.c.b16 %v2361, %v2357
    %v2402 = vpack.c.b16 %v2362, %v2358
    %v2403 = vpack.c.b16 %v2363, %v2359
    %v2404 = vpack.c.b16 %v2364, %v2360
    %v2405 = vpack.c.b16 %v2369, %v2365
    %v2406 = vpack.c.b16 %v2370, %v2366
    %v2407 = vpack.c.b16 %v2371, %v2367
    %v2408 = vpack.c.b16 %v2372, %v2368
    %v2409 = vpack.c.b16 %v2377, %v2373
    %v2410 = vpack.c.b16 %v2378, %v2374
    %v2411 = vpack.c.b16 %v2379, %v2375
    %v2412 = vpack.c.b16 %v2380, %v2376
    %2445 = vmatprep.subr.bf16.mxu0 %v2410
    %2446 = vmatpush1.bf16.msra.mxu0 %v2409
    %2447 = vmatprep.subr.bf16.mxu0 %v2406
    %2448 = vmatpush1.bf16.msra.mxu0 %v2405
    %2449 = vmatprep.subr.bf16.mxu0 %v2402
    %2450 = vmatpush1.bf16.msra.mxu0 %v2401
    %2451 = vmatprep.subr.bf16.mxu0 %v2398
    %2452 = vmatpush1.bf16.msra.mxu0 %v2397
    %2453 = vmatprep.subr.bf16.mxu0 %v2394
    %2454 = vmatpush1.bf16.msra.mxu0 %v2393
    %2455 = vmatprep.subr.bf16.mxu0 %v2390
    %2456 = vmatpush1.bf16.msra.mxu0 %v2389
    %2457 = vmatprep.subr.bf16.mxu0 %v2386
    %2458 = vmatpush1.bf16.msra.mxu0 %v2385
    %2459 = vmatprep.subr.bf16.mxu0 %v2382
    %2460 = vmatpush1.bf16.msra.mxu0 %v2381
    %2461 = vmatprep.subr.bf16.mxu0 0
    %2462 = vmatpush2.bf16.msra.mxu0 0
    %2463 = vmatprep.subr.bf16.mxu0 0
    %2464 = vmatpush2.bf16.msra.mxu0 0
    %2465 = vmatprep.subr.bf16.mxu0 0
    %2466 = vmatpush2.bf16.msra.mxu0 0
    %2467 = vmatprep.subr.bf16.mxu0 0
    %2468 = vmatpush2.bf16.msra.mxu0 0
    %2469 = vmatprep.subr.bf16.mxu0 0
    %2470 = vmatpush2.bf16.msra.mxu0 0
    %2471 = vmatprep.subr.bf16.mxu0 0
    %2472 = vmatpush2.bf16.msra.mxu0 0
    %2473 = vmatprep.subr.bf16.mxu0 0
    %2474 = vmatpush2.bf16.msra.mxu0 0
    %2475 = vmatprep.subr.bf16.mxu0 0
    %2476 = vmatpush2.bf16.msra.mxu0 0
    %2477 = vmatprep.mubr.bf16.mxu0 0
    %2478 = vmatmul.mubr.bf16.gmra.mxu0 %v2230
    %v2479 = vpop.f32.mrf.mxu0
    %v2480 = vadd.f32 %v2268, %v2479
    %v2481 = vpop.f32.mrf.mxu0
    %v2482 = vadd.f32 %v2272, %v2481
    %v2483 = vpop.f32.mrf.mxu0
    %v2484 = vadd.f32 %v2268, %v2483
    %v2485 = vpop.f32.mrf.mxu0
    %v2486 = vadd.f32 %v2272, %v2485
    %2487 = vdwg.mxu0
    %2488 = vmatprep.subr.bf16.mxu0 %v2412
    %2489 = vmatpush1.bf16.msra.mxu0 %v2411
    %2490 = vmatprep.subr.bf16.mxu0 %v2408
    %2491 = vmatpush1.bf16.msra.mxu0 %v2407
    %2492 = vmatprep.subr.bf16.mxu0 %v2404
    %2493 = vmatpush1.bf16.msra.mxu0 %v2403
    %2494 = vmatprep.subr.bf16.mxu0 %v2400
    %2495 = vmatpush1.bf16.msra.mxu0 %v2399
    %2496 = vmatprep.subr.bf16.mxu0 %v2396
    %2497 = vmatpush1.bf16.msra.mxu0 %v2395
    %2498 = vmatprep.subr.bf16.mxu0 %v2392
    %2499 = vmatpush1.bf16.msra.mxu0 %v2391
    %2500 = vmatprep.subr.bf16.mxu0 %v2388
    %2501 = vmatpush1.bf16.msra.mxu0 %v2387
    %2502 = vmatprep.subr.bf16.mxu0 %v2384
    %2503 = vmatpush1.bf16.msra.mxu0 %v2383
    %2504 = vmatprep.subr.bf16.mxu0 0
    %2505 = vmatpush2.bf16.msra.mxu0 0
    %2506 = vmatprep.subr.bf16.mxu0 0
    %2507 = vmatpush2.bf16.msra.mxu0 0
    %2508 = vmatprep.subr.bf16.mxu0 0
    %2509 = vmatpush2.bf16.msra.mxu0 0
    %2510 = vmatprep.subr.bf16.mxu0 0
    %2511 = vmatpush2.bf16.msra.mxu0 0
    %2512 = vmatprep.subr.bf16.mxu0 0
    %2513 = vmatpush2.bf16.msra.mxu0 0
    %2514 = vmatprep.subr.bf16.mxu0 0
    %2515 = vmatpush2.bf16.msra.mxu0 0
    %2516 = vmatprep.subr.bf16.mxu0 0
    %2517 = vmatpush2.bf16.msra.mxu0 0
    %2518 = vmatprep.subr.bf16.mxu0 0
    %2519 = vmatpush2.bf16.msra.mxu0 0
    %2520 = vmatprep.mubr.bf16.mxu0 0
    %2521 = vmatmul.mubr.bf16.gmra.mxu0 %v2230
    %v2522 = vpop.f32.mrf.mxu0
    %v2523 = vadd.f32 %v2276, %v2522
    %v2524 = vpop.f32.mrf.mxu0
    %v2525 = vadd.f32 %v2280, %v2524
    %v2526 = vpop.f32.mrf.mxu0
    %v2527 = vadd.f32 %v2276, %v2526
    %v2528 = vpop.f32.mrf.mxu0
    %v2529 = vadd.f32 %v2280, %v2528
    %2530 = vdwg.mxu0
    %v2531 = vmax.f32 %v2480, 0.0
    %v2532 = vmax.f32 %v2482, 0.0
    %v2533 = vmax.f32 %v2523, 0.0
    %v2534 = vmax.f32 %v2525, 0.0
    %v2535 = vmax.f32 %v2484, 0.0
    %v2536 = vmax.f32 %v2486, 0.0
    %v2537 = vmax.f32 %v2527, 0.0
    %v2538 = vmax.f32 %v2529, 0.0
    %v2539 = vpack.c.bf16 %v2535, %v2531
    %v2540 = vpack.c.bf16 %v2536, %v2532
    %v2541 = vpack.c.bf16 %v2537, %v2533
    %v2542 = vpack.c.bf16 %v2538, %v2534
    %v2543 = vld [vmem:[#allocation11] sm:$0xff]
    %v2544 = vld [vmem:[#allocation11 + $0x8] sm:$0xff]
    %v2545 = vld [vmem:[#allocation11 + $0x10] sm:$0xff]
    %v2546 = vld [vmem:[#allocation11 + $0x18] sm:$0xf]
    %v2547 = vld [vmem:[#allocation11 + $0x1c] sm:$0xff]
    %v2548 = vld [vmem:[#allocation11 + $0x24] sm:$0xff]
    %v2549 = vld [vmem:[#allocation11 + $0x2c] sm:$0xff]
    %v2550 = vld [vmem:[#allocation11 + $0x34] sm:$0xf]
    %v2551 = vld [vmem:[#allocation11 + $0x38] sm:$0xff]
    %v2552 = vld [vmem:[#allocation11 + $0x40] sm:$0xff]
    %v2553 = vld [vmem:[#allocation11 + $0x48] sm:$0xff]
    %v2554 = vld [vmem:[#allocation11 + $0x50] sm:$0xf]
    %v2555 = vld [vmem:[#allocation11 + $0x54] sm:$0xff]
    %v2556 = vld [vmem:[#allocation11 + $0x5c] sm:$0xff]
    %v2557 = vld [vmem:[#allocation11 + $0x64] sm:$0xff]
    %v2558 = vld [vmem:[#allocation11 + $0x6c] sm:$0xf]
    %v2559 = vld [vmem:[#allocation11 + $0x70] sm:$0xff]
    %v2560 = vld [vmem:[#allocation11 + $0x78] sm:$0xff]
    %v2561 = vld [vmem:[#allocation11 + $0x80] sm:$0xff]
    %v2562 = vld [vmem:[#allocation11 + $0x88] sm:$0xf]
    %v2563 = vld [vmem:[#allocation11 + $0x8c] sm:$0xff]
    %v2564 = vld [vmem:[#allocation11 + $0x94] sm:$0xff]
    %v2565 = vld [vmem:[#allocation11 + $0x9c] sm:$0xff]
    %v2566 = vld [vmem:[#allocation11 + $0xa4] sm:$0xf]
    %v2567 = vld [vmem:[#allocation11 + $0xa8] sm:$0xff]
    %v2568 = vld [vmem:[#allocation11 + $0xb0] sm:$0xff]
    %v2569 = vld [vmem:[#allocation11 + $0xb8] sm:$0xff]
    %v2570 = vld [vmem:[#allocation11 + $0xc0] sm:$0xf]
    %v2571 = vld [vmem:[#allocation11 + $0xc4] sm:$0xff]
    %v2572 = vld [vmem:[#allocation11 + $0xcc] sm:$0xff]
    %v2573 = vld [vmem:[#allocation11 + $0xd4] sm:$0xff]
    %v2574 = vld [vmem:[#allocation11 + $0xdc] sm:$0xf]
    %v2575 = vld [vmem:[#allocation11 + $0xe0] sm:$0xff]
    %v2576 = vld [vmem:[#allocation11 + $0xe8] sm:$0xff]
    %v2577 = vld [vmem:[#allocation11 + $0xf0] sm:$0xff]
    %v2578 = vld [vmem:[#allocation11 + $0xf8] sm:$0xf]
    %v2579 = vld [vmem:[#allocation11 + $0xfc] sm:$0xff]
    %v2580 = vld [vmem:[#allocation11 + $0x104] sm:$0xff]
    %v2581 = vld [vmem:[#allocation11 + $0x10c] sm:$0xff]
    %v2582 = vld [vmem:[#allocation11 + $0x114] sm:$0xf]
    %v2583 = vld [vmem:[#allocation11 + $0x118] sm:$0xff]
    %v2584 = vld [vmem:[#allocation11 + $0x120] sm:$0xff]
    %v2585 = vld [vmem:[#allocation11 + $0x128] sm:$0xff]
    %v2586 = vld [vmem:[#allocation11 + $0x130] sm:$0xf]
    %v2587 = vld [vmem:[#allocation11 + $0x134] sm:$0xff]
    %v2588 = vld [vmem:[#allocation11 + $0x13c] sm:$0xff]
    %v2589 = vld [vmem:[#allocation11 + $0x144] sm:$0xff]
    %v2590 = vld [vmem:[#allocation11 + $0x14c] sm:$0xf]
    %v2591 = vld [vmem:[#allocation11 + $0x150] sm:$0xff]
    %v2592 = vld [vmem:[#allocation11 + $0x158] sm:$0xff]
    %v2593 = vld [vmem:[#allocation11 + $0x160] sm:$0xff]
    %v2594 = vld [vmem:[#allocation11 + $0x168] sm:$0xf]
    %v2595 = vld [vmem:[#allocation11 + $0x16c] sm:$0xff]
    %v2596 = vld [vmem:[#allocation11 + $0x174] sm:$0xff]
    %v2597 = vld [vmem:[#allocation11 + $0x17c] sm:$0xff]
    %v2598 = vld [vmem:[#allocation11 + $0x184] sm:$0xf]
    %v2599 = vld [vmem:[#allocation11 + $0x188] sm:$0xff]
    %v2600 = vld [vmem:[#allocation11 + $0x190] sm:$0xff]
    %v2601 = vld [vmem:[#allocation11 + $0x198] sm:$0xff]
    %v2602 = vld [vmem:[#allocation11 + $0x1a0] sm:$0xf]
    %v2603 = vld [vmem:[#allocation11 + $0x1a4] sm:$0xff]
    %v2604 = vld [vmem:[#allocation11 + $0x1ac] sm:$0xff]
    %v2605 = vld [vmem:[#allocation11 + $0x1b4] sm:$0xff]
    %v2606 = vld [vmem:[#allocation11 + $0x1bc] sm:$0xf]
    %v2607 = vld [vmem:[#allocation11 + $0x1c0] sm:$0xff]
    %v2608 = vld [vmem:[#allocation11 + $0x1c8] sm:$0xff]
    %v2609 = vld [vmem:[#allocation11 + $0x1d0] sm:$0xff]
    %v2610 = vld [vmem:[#allocation11 + $0x1d8] sm:$0xf]
    %v2611 = vld [vmem:[#allocation11 + $0x1dc] sm:$0xff]
    %v2612 = vld [vmem:[#allocation11 + $0x1e4] sm:$0xff]
    %v2613 = vld [vmem:[#allocation11 + $0x1ec] sm:$0xff]
    %v2614 = vld [vmem:[#allocation11 + $0x1f4] sm:$0xf]
    %v2615 = vld [vmem:[#allocation11 + $0x1f8] sm:$0xff]
    %v2616 = vld [vmem:[#allocation11 + $0x200] sm:$0xff]
    %v2617 = vld [vmem:[#allocation11 + $0x208] sm:$0xff]
    %v2618 = vld [vmem:[#allocation11 + $0x210] sm:$0xf]
    %v2619 = vld [vmem:[#allocation11 + $0x214] sm:$0xff]
    %v2620 = vld [vmem:[#allocation11 + $0x21c] sm:$0xff]
    %v2621 = vld [vmem:[#allocation11 + $0x224] sm:$0xff]
    %v2622 = vld [vmem:[#allocation11 + $0x22c] sm:$0xf]
    %v2623 = vld [vmem:[#allocation11 + $0x230] sm:$0xff]
    %v2624 = vld [vmem:[#allocation11 + $0x238] sm:$0xff]
    %v2625 = vld [vmem:[#allocation11 + $0x240] sm:$0xff]
    %v2626 = vld [vmem:[#allocation11 + $0x248] sm:$0xf]
    %v2627 = vld [vmem:[#allocation11 + $0x24c] sm:$0xff]
    %v2628 = vld [vmem:[#allocation11 + $0x254] sm:$0xff]
    %v2629 = vld [vmem:[#allocation11 + $0x25c] sm:$0xff]
    %v2630 = vld [vmem:[#allocation11 + $0x264] sm:$0xf]
    %v2631 = vld [vmem:[#allocation11 + $0x268] sm:$0xff]
    %v2632 = vld [vmem:[#allocation11 + $0x270] sm:$0xff]
    %v2633 = vld [vmem:[#allocation11 + $0x278] sm:$0xff]
    %v2634 = vld [vmem:[#allocation11 + $0x280] sm:$0xf]
    %v2635 = vld [vmem:[#allocation11 + $0x284] sm:$0xff]
    %v2636 = vld [vmem:[#allocation11 + $0x28c] sm:$0xff]
    %v2637 = vld [vmem:[#allocation11 + $0x294] sm:$0xff]
    %v2638 = vld [vmem:[#allocation11 + $0x29c] sm:$0xf]
    %v2639 = vld [vmem:[#allocation11 + $0x2a0] sm:$0xff]
    %v2640 = vld [vmem:[#allocation11 + $0x2a8] sm:$0xff]
    %v2641 = vld [vmem:[#allocation11 + $0x2b0] sm:$0xff]
    %v2642 = vld [vmem:[#allocation11 + $0x2b8] sm:$0xf]
    %v2643 = vld [vmem:[#allocation11 + $0x2bc] sm:$0xff]
    %v2644 = vld [vmem:[#allocation11 + $0x2c4] sm:$0xff]
    %v2645 = vld [vmem:[#allocation11 + $0x2cc] sm:$0xff]
    %v2646 = vld [vmem:[#allocation11 + $0x2d4] sm:$0xf]
    %v2647 = vld [vmem:[#allocation11 + $0x2d8] sm:$0xff]
    %v2648 = vld [vmem:[#allocation11 + $0x2e0] sm:$0xff]
    %v2649 = vld [vmem:[#allocation11 + $0x2e8] sm:$0xff]
    %v2650 = vld [vmem:[#allocation11 + $0x2f0] sm:$0xf]
    %v2651 = vld [vmem:[#allocation11 + $0x2f4] sm:$0xff]
    %v2652 = vld [vmem:[#allocation11 + $0x2fc] sm:$0xff]
    %v2653 = vld [vmem:[#allocation11 + $0x304] sm:$0xff]
    %v2654 = vld [vmem:[#allocation11 + $0x30c] sm:$0xf]
    %v2655 = vld [vmem:[#allocation11 + $0x310] sm:$0xff]
    %v2656 = vld [vmem:[#allocation11 + $0x318] sm:$0xff]
    %v2657 = vld [vmem:[#allocation11 + $0x320] sm:$0xff]
    %v2658 = vld [vmem:[#allocation11 + $0x328] sm:$0xf]
    %v2659 = vld [vmem:[#allocation11 + $0x32c] sm:$0xff]
    %v2660 = vld [vmem:[#allocation11 + $0x334] sm:$0xff]
    %v2661 = vld [vmem:[#allocation11 + $0x33c] sm:$0xff]
    %v2662 = vld [vmem:[#allocation11 + $0x344] sm:$0xf]
    %v2663 = vld [vmem:[#allocation11 + $0x348] sm:$0xff]
    %v2664 = vld [vmem:[#allocation11 + $0x350] sm:$0xff]
    %v2665 = vld [vmem:[#allocation11 + $0x358] sm:$0xff]
    %v2666 = vld [vmem:[#allocation11 + $0x360] sm:$0xf]
    %v2667 = vld [vmem:[#allocation11 + $0x364] sm:$0xff]
    %v2668 = vld [vmem:[#allocation11 + $0x36c] sm:$0xff]
    %v2669 = vld [vmem:[#allocation11 + $0x374] sm:$0xff]
    %v2670 = vld [vmem:[#allocation11 + $0x37c] sm:$0xf]
    %v2671 = vld [vmem:[#allocation11 + $0x380] sm:$0xff]
    %v2672 = vld [vmem:[#allocation11 + $0x388] sm:$0xff]
    %v2673 = vld [vmem:[#allocation11 + $0x390] sm:$0xff]
    %v2674 = vld [vmem:[#allocation11 + $0x398] sm:$0xf]
    %v2675 = vld [vmem:[#allocation11 + $0x39c] sm:$0xff]
    %v2676 = vld [vmem:[#allocation11 + $0x3a4] sm:$0xff]
    %v2677 = vld [vmem:[#allocation11 + $0x3ac] sm:$0xff]
    %v2678 = vld [vmem:[#allocation11 + $0x3b4] sm:$0xf]
    %v2679 = vld [vmem:[#allocation11 + $0x3b8] sm:$0xff]
    %v2680 = vld [vmem:[#allocation11 + $0x3c0] sm:$0xff]
    %v2681 = vld [vmem:[#allocation11 + $0x3c8] sm:$0xff]
    %v2682 = vld [vmem:[#allocation11 + $0x3d0] sm:$0xf]
    %v2683 = vld [vmem:[#allocation11 + $0x3d4] sm:$0xff]
    %v2684 = vld [vmem:[#allocation11 + $0x3dc] sm:$0xff]
    %v2685 = vld [vmem:[#allocation11 + $0x3e4] sm:$0xff]
    %v2686 = vld [vmem:[#allocation11 + $0x3ec] sm:$0xf]
    %v2687 = vld [vmem:[#allocation11 + $0x3f0] sm:$0xff]
    %v2688 = vld [vmem:[#allocation11 + $0x3f8] sm:$0xff]
    %v2689 = vld [vmem:[#allocation11 + $0x400] sm:$0xff]
    %v2690 = vld [vmem:[#allocation11 + $0x408] sm:$0xf]
    %v2691 = vld [vmem:[#allocation11 + $0x40c] sm:$0xff]
    %v2692 = vld [vmem:[#allocation11 + $0x414] sm:$0xff]
    %v2693 = vld [vmem:[#allocation11 + $0x41c] sm:$0xff]
    %v2694 = vld [vmem:[#allocation11 + $0x424] sm:$0xf]
    %v2695 = vld [vmem:[#allocation11 + $0x428] sm:$0xff]
    %v2696 = vld [vmem:[#allocation11 + $0x430] sm:$0xff]
    %v2697 = vld [vmem:[#allocation11 + $0x438] sm:$0xff]
    %v2698 = vld [vmem:[#allocation11 + $0x440] sm:$0xf]
    %v2699 = vld [vmem:[#allocation11 + $0x444] sm:$0xff]
    %v2700 = vld [vmem:[#allocation11 + $0x44c] sm:$0xff]
    %v2701 = vld [vmem:[#allocation11 + $0x454] sm:$0xff]
    %v2702 = vld [vmem:[#allocation11 + $0x45c] sm:$0xf]
    %v2703 = vld [vmem:[#allocation11 + $0x460] sm:$0xff]
    %v2704 = vld [vmem:[#allocation11 + $0x468] sm:$0xff]
    %v2705 = vld [vmem:[#allocation11 + $0x470] sm:$0xff]
    %v2706 = vld [vmem:[#allocation11 + $0x478] sm:$0xf]
    %v2707 = vld [vmem:[#allocation11 + $0x47c] sm:$0xff]
    %v2708 = vld [vmem:[#allocation11 + $0x484] sm:$0xff]
    %v2709 = vld [vmem:[#allocation11 + $0x48c] sm:$0xff]
    %v2710 = vld [vmem:[#allocation11 + $0x494] sm:$0xf]
    %v2711 = vld [vmem:[#allocation11 + $0x498] sm:$0xff]
    %v2712 = vld [vmem:[#allocation11 + $0x4a0] sm:$0xff]
    %v2713 = vld [vmem:[#allocation11 + $0x4a8] sm:$0xff]
    %v2714 = vld [vmem:[#allocation11 + $0x4b0] sm:$0xf]
    %v2715 = vld [vmem:[#allocation11 + $0x4b4] sm:$0xff]
    %v2716 = vld [vmem:[#allocation11 + $0x4bc] sm:$0xff]
    %v2717 = vld [vmem:[#allocation11 + $0x4c4] sm:$0xff]
    %v2718 = vld [vmem:[#allocation11 + $0x4cc] sm:$0xf]
    %v2719 = vld [vmem:[#allocation11 + $0x4d0] sm:$0xff]
    %v2720 = vld [vmem:[#allocation11 + $0x4d8] sm:$0xff]
    %v2721 = vld [vmem:[#allocation11 + $0x4e0] sm:$0xff]
    %v2722 = vld [vmem:[#allocation11 + $0x4e8] sm:$0xf]
    %v2723 = vld [vmem:[#allocation11 + $0x4ec] sm:$0xff]
    %v2724 = vld [vmem:[#allocation11 + $0x4f4] sm:$0xff]
    %v2725 = vld [vmem:[#allocation11 + $0x4fc] sm:$0xff]
    %v2726 = vld [vmem:[#allocation11 + $0x504] sm:$0xf]
    %v2727 = vld [vmem:[#allocation11 + $0x508] sm:$0xff]
    %v2728 = vld [vmem:[#allocation11 + $0x510] sm:$0xff]
    %v2729 = vld [vmem:[#allocation11 + $0x518] sm:$0xff]
    %v2730 = vld [vmem:[#allocation11 + $0x520] sm:$0xf]
    %v2731 = vld [vmem:[#allocation11 + $0x524] sm:$0xff]
    %v2732 = vld [vmem:[#allocation11 + $0x52c] sm:$0xff]
    %v2733 = vld [vmem:[#allocation11 + $0x534] sm:$0xff]
    %v2734 = vld [vmem:[#allocation11 + $0x53c] sm:$0xf]
    %v2735 = vld [vmem:[#allocation11 + $0x540] sm:$0xff]
    %v2736 = vld [vmem:[#allocation11 + $0x548] sm:$0xff]
    %v2737 = vld [vmem:[#allocation11 + $0x550] sm:$0xff]
    %v2738 = vld [vmem:[#allocation11 + $0x558] sm:$0xf]
    %v2739 = vld [vmem:[#allocation11 + $0x55c] sm:$0xff]
    %v2740 = vld [vmem:[#allocation11 + $0x564] sm:$0xff]
    %v2741 = vld [vmem:[#allocation11 + $0x56c] sm:$0xff]
    %v2742 = vld [vmem:[#allocation11 + $0x574] sm:$0xf]
    %v2743 = vld [vmem:[#allocation11 + $0x578] sm:$0xff]
    %v2744 = vld [vmem:[#allocation11 + $0x580] sm:$0xff]
    %v2745 = vld [vmem:[#allocation11 + $0x588] sm:$0xff]
    %v2746 = vld [vmem:[#allocation11 + $0x590] sm:$0xf]
    %v2747 = vld [vmem:[#allocation11 + $0x594] sm:$0xff]
    %v2748 = vld [vmem:[#allocation11 + $0x59c] sm:$0xff]
    %v2749 = vld [vmem:[#allocation11 + $0x5a4] sm:$0xff]
    %v2750 = vld [vmem:[#allocation11 + $0x5ac] sm:$0xf]
    %v2751 = vld [vmem:[#allocation11 + $0x5b0] sm:$0xff]
    %v2752 = vld [vmem:[#allocation11 + $0x5b8] sm:$0xff]
    %v2753 = vld [vmem:[#allocation11 + $0x5c0] sm:$0xff]
    %v2754 = vld [vmem:[#allocation11 + $0x5c8] sm:$0xf]
    %v2755 = vld [vmem:[#allocation11 + $0x5cc] sm:$0xff]
    %v2756 = vld [vmem:[#allocation11 + $0x5d4] sm:$0xff]
    %v2757 = vld [vmem:[#allocation11 + $0x5dc] sm:$0xff]
    %v2758 = vld [vmem:[#allocation11 + $0x5e4] sm:$0xf]
    %v2759 = vld [vmem:[#allocation11 + $0x5e8] sm:$0xff]
    %v2760 = vld [vmem:[#allocation11 + $0x5f0] sm:$0xff]
    %v2761 = vld [vmem:[#allocation11 + $0x5f8] sm:$0xff]
    %v2762 = vld [vmem:[#allocation11 + $0x600] sm:$0xf]
    %v2763 = vld [vmem:[#allocation11 + $0x604] sm:$0xff]
    %v2764 = vld [vmem:[#allocation11 + $0x60c] sm:$0xff]
    %v2765 = vld [vmem:[#allocation11 + $0x614] sm:$0xff]
    %v2766 = vld [vmem:[#allocation11 + $0x61c] sm:$0xf]
    %v2767 = vld [vmem:[#allocation11 + $0x620] sm:$0xff]
    %v2768 = vld [vmem:[#allocation11 + $0x628] sm:$0xff]
    %v2769 = vld [vmem:[#allocation11 + $0x630] sm:$0xff]
    %v2770 = vld [vmem:[#allocation11 + $0x638] sm:$0xf]
    %v2771 = vld [vmem:[#allocation11 + $0x63c] sm:$0xff]
    %v2772 = vld [vmem:[#allocation11 + $0x644] sm:$0xff]
    %v2773 = vld [vmem:[#allocation11 + $0x64c] sm:$0xff]
    %v2774 = vld [vmem:[#allocation11 + $0x654] sm:$0xf]
    %v2775 = vld [vmem:[#allocation11 + $0x658] sm:$0xff]
    %v2776 = vld [vmem:[#allocation11 + $0x660] sm:$0xff]
    %v2777 = vld [vmem:[#allocation11 + $0x668] sm:$0xff]
    %v2778 = vld [vmem:[#allocation11 + $0x670] sm:$0xf]
    %v2779 = vld [vmem:[#allocation11 + $0x674] sm:$0xff]
    %v2780 = vld [vmem:[#allocation11 + $0x67c] sm:$0xff]
    %v2781 = vld [vmem:[#allocation11 + $0x684] sm:$0xff]
    %v2782 = vld [vmem:[#allocation11 + $0x68c] sm:$0xf]
    %v2783 = vld [vmem:[#allocation11 + $0x690] sm:$0xff]
    %v2784 = vld [vmem:[#allocation11 + $0x698] sm:$0xff]
    %v2785 = vld [vmem:[#allocation11 + $0x6a0] sm:$0xff]
    %v2786 = vld [vmem:[#allocation11 + $0x6a8] sm:$0xf]
    %v2787 = vld [vmem:[#allocation11 + $0x6ac] sm:$0xff]
    %v2788 = vld [vmem:[#allocation11 + $0x6b4] sm:$0xff]
    %v2789 = vld [vmem:[#allocation11 + $0x6bc] sm:$0xff]
    %v2790 = vld [vmem:[#allocation11 + $0x6c4] sm:$0xf]
    %v2791 = vld [vmem:[#allocation11 + $0x6c8] sm:$0xff]
    %v2792 = vld [vmem:[#allocation11 + $0x6d0] sm:$0xff]
    %v2793 = vld [vmem:[#allocation11 + $0x6d8] sm:$0xff]
    %v2794 = vld [vmem:[#allocation11 + $0x6e0] sm:$0xf]
    %v2795 = vld [vmem:[#allocation11 + $0x6e4] sm:$0xff]
    %v2796 = vld [vmem:[#allocation11 + $0x6ec] sm:$0xff]
    %v2797 = vld [vmem:[#allocation11 + $0x6f4] sm:$0xff]
    %v2798 = vld [vmem:[#allocation11 + $0x6fc] sm:$0xf]
    %v2799 = vld [vmem:[%s8] sm:$0xff]
    %v2801 = vlaneseq
    %v2802 = vshrl.u32 %v2801, 7
    %v2803 = vsub.s32 0, %v2802
    %v2804 = vrot.slane %v2799, %v2803
    %v2805 = vlaneseq
    %v2806 = vshrl.u32 %v2805, 7
    %v2807 = vsub.s32 1, %v2806
    %v2808 = vrot.slane %v2799, %v2807
    %v2809 = vlaneseq
    %v2810 = vshrl.u32 %v2809, 7
    %v2811 = vsub.s32 2, %v2810
    %v2812 = vrot.slane %v2799, %v2811
    %v2813 = vlaneseq
    %v2814 = vshrl.u32 %v2813, 7
    %v2815 = vsub.s32 3, %v2814
    %v2816 = vrot.slane %v2799, %v2815
    %v2817 = vlaneseq
    %v2818 = vshrl.u32 %v2817, 7
    %v2819 = vsub.s32 4, %v2818
    %v2820 = vrot.slane %v2799, %v2819
    %v2821 = vlaneseq
    %v2822 = vshrl.u32 %v2821, 7
    %v2823 = vsub.s32 5, %v2822
    %v2824 = vrot.slane %v2799, %v2823
    %v2825 = vlaneseq
    %v2826 = vshrl.u32 %v2825, 7
    %v2827 = vsub.s32 6, %v2826
    %v2828 = vrot.slane %v2799, %v2827
    %v3092 = vunpack.c.l.b16 %v2543
    %v3093 = vunpack.c.h.b16 %v2543
    %v3094 = vunpack.c.l.b16 %v2544
    %v3095 = vunpack.c.h.b16 %v2544
    %v3096 = vunpack.c.l.b16 %v2545
    %v3097 = vunpack.c.h.b16 %v2545
    %v3098 = vunpack.c.l.b16 %v2546
    %v3099 = vunpack.c.l.b16 %v2547
    %v3100 = vunpack.c.h.b16 %v2547
    %v3101 = vunpack.c.l.b16 %v2548
    %v3102 = vunpack.c.h.b16 %v2548
    %v3103 = vunpack.c.l.b16 %v2549
    %v3104 = vunpack.c.h.b16 %v2549
    %v3105 = vunpack.c.l.b16 %v2550
    %v3106 = vunpack.c.l.b16 %v2551
    %v3107 = vunpack.c.h.b16 %v2551
    %v3108 = vunpack.c.l.b16 %v2552
    %v3109 = vunpack.c.h.b16 %v2552
    %v3110 = vunpack.c.l.b16 %v2553
    %v3111 = vunpack.c.h.b16 %v2553
    %v3112 = vunpack.c.l.b16 %v2554
    %v3113 = vunpack.c.l.b16 %v2555
    %v3114 = vunpack.c.h.b16 %v2555
    %v3115 = vunpack.c.l.b16 %v2556
    %v3116 = vunpack.c.h.b16 %v2556
    %v3117 = vunpack.c.l.b16 %v2557
    %v3118 = vunpack.c.h.b16 %v2557
    %v3119 = vunpack.c.l.b16 %v2558
    %v3120 = vunpack.c.l.b16 %v2559
    %v3121 = vunpack.c.h.b16 %v2559
    %v3122 = vunpack.c.l.b16 %v2560
    %v3123 = vunpack.c.h.b16 %v2560
    %v3124 = vunpack.c.l.b16 %v2561
    %v3125 = vunpack.c.h.b16 %v2561
    %v3126 = vunpack.c.l.b16 %v2562
    %v3127 = vunpack.c.l.b16 %v2563
    %v3128 = vunpack.c.h.b16 %v2563
    %v3129 = vunpack.c.l.b16 %v2564
    %v3130 = vunpack.c.h.b16 %v2564
    %v3131 = vunpack.c.l.b16 %v2565
    %v3132 = vunpack.c.h.b16 %v2565
    %v3133 = vunpack.c.l.b16 %v2566
    %v3134 = vunpack.c.l.b16 %v2567
    %v3135 = vunpack.c.h.b16 %v2567
    %v3136 = vunpack.c.l.b16 %v2568
    %v3137 = vunpack.c.h.b16 %v2568
    %v3138 = vunpack.c.l.b16 %v2569
    %v3139 = vunpack.c.h.b16 %v2569
    %v3140 = vunpack.c.l.b16 %v2570
    %v3141 = vunpack.c.l.b16 %v2571
    %v3142 = vunpack.c.h.b16 %v2571
    %v3143 = vunpack.c.l.b16 %v2572
    %v3144 = vunpack.c.h.b16 %v2572
    %v3145 = vunpack.c.l.b16 %v2573
    %v3146 = vunpack.c.h.b16 %v2573
    %v3147 = vunpack.c.l.b16 %v2574
    %v3148 = vunpack.c.l.b16 %v2575
    %v3149 = vunpack.c.h.b16 %v2575
    %v3150 = vunpack.c.l.b16 %v2576
    %v3151 = vunpack.c.h.b16 %v2576
    %v3152 = vunpack.c.l.b16 %v2577
    %v3153 = vunpack.c.h.b16 %v2577
    %v3154 = vunpack.c.l.b16 %v2578
    %v3155 = vunpack.c.l.b16 %v2579
    %v3156 = vunpack.c.h.b16 %v2579
    %v3157 = vunpack.c.l.b16 %v2580
    %v3158 = vunpack.c.h.b16 %v2580
    %v3159 = vunpack.c.l.b16 %v2581
    %v3160 = vunpack.c.h.b16 %v2581
    %v3161 = vunpack.c.l.b16 %v2582
    %v3162 = vunpack.c.l.b16 %v2583
    %v3163 = vunpack.c.h.b16 %v2583
    %v3164 = vunpack.c.l.b16 %v2584
    %v3165 = vunpack.c.h.b16 %v2584
    %v3166 = vunpack.c.l.b16 %v2585
    %v3167 = vunpack.c.h.b16 %v2585
    %v3168 = vunpack.c.l.b16 %v2586
    %v3169 = vunpack.c.l.b16 %v2587
    %v3170 = vunpack.c.h.b16 %v2587
    %v3171 = vunpack.c.l.b16 %v2588
    %v3172 = vunpack.c.h.b16 %v2588
    %v3173 = vunpack.c.l.b16 %v2589
    %v3174 = vunpack.c.h.b16 %v2589
    %v3175 = vunpack.c.l.b16 %v2590
    %v3176 = vunpack.c.l.b16 %v2591
    %v3177 = vunpack.c.h.b16 %v2591
    %v3178 = vunpack.c.l.b16 %v2592
    %v3179 = vunpack.c.h.b16 %v2592
    %v3180 = vunpack.c.l.b16 %v2593
    %v3181 = vunpack.c.h.b16 %v2593
    %v3182 = vunpack.c.l.b16 %v2594
    %v3183 = vunpack.c.l.b16 %v2595
    %v3184 = vunpack.c.h.b16 %v2595
    %v3185 = vunpack.c.l.b16 %v2596
    %v3186 = vunpack.c.h.b16 %v2596
    %v3187 = vunpack.c.l.b16 %v2597
    %v3188 = vunpack.c.h.b16 %v2597
    %v3189 = vunpack.c.l.b16 %v2598
    %v3190 = vunpack.c.l.b16 %v2599
    %v3191 = vunpack.c.h.b16 %v2599
    %v3192 = vunpack.c.l.b16 %v2600
    %v3193 = vunpack.c.h.b16 %v2600
    %v3194 = vunpack.c.l.b16 %v2601
    %v3195 = vunpack.c.h.b16 %v2601
    %v3196 = vunpack.c.l.b16 %v2602
    %v3197 = vunpack.c.l.b16 %v2603
    %v3198 = vunpack.c.h.b16 %v2603
    %v3199 = vunpack.c.l.b16 %v2604
    %v3200 = vunpack.c.h.b16 %v2604
    %v3201 = vunpack.c.l.b16 %v2605
    %v3202 = vunpack.c.h.b16 %v2605
    %v3203 = vunpack.c.l.b16 %v2606
    %v3204 = vunpack.c.l.b16 %v2607
    %v3205 = vunpack.c.h.b16 %v2607
    %v3206 = vunpack.c.l.b16 %v2608
    %v3207 = vunpack.c.h.b16 %v2608
    %v3208 = vunpack.c.l.b16 %v2609
    %v3209 = vunpack.c.h.b16 %v2609
    %v3210 = vunpack.c.l.b16 %v2610
    %v3211 = vunpack.c.l.b16 %v2611
    %v3212 = vunpack.c.h.b16 %v2611
    %v3213 = vunpack.c.l.b16 %v2612
    %v3214 = vunpack.c.h.b16 %v2612
    %v3215 = vunpack.c.l.b16 %v2613
    %v3216 = vunpack.c.h.b16 %v2613
    %v3217 = vunpack.c.l.b16 %v2614
    %v3218 = vunpack.c.l.b16 %v2615
    %v3219 = vunpack.c.h.b16 %v2615
    %v3220 = vunpack.c.l.b16 %v2616
    %v3221 = vunpack.c.h.b16 %v2616
    %v3222 = vunpack.c.l.b16 %v2617
    %v3223 = vunpack.c.h.b16 %v2617
    %v3224 = vunpack.c.l.b16 %v2618
    %v3225 = vunpack.c.l.b16 %v2619
    %v3226 = vunpack.c.h.b16 %v2619
    %v3227 = vunpack.c.l.b16 %v2620
    %v3228 = vunpack.c.h.b16 %v2620
    %v3229 = vunpack.c.l.b16 %v2621
    %v3230 = vunpack.c.h.b16 %v2621
    %v3231 = vunpack.c.l.b16 %v2622
    %v3232 = vunpack.c.l.b16 %v2623
    %v3233 = vunpack.c.h.b16 %v2623
    %v3234 = vunpack.c.l.b16 %v2624
    %v3235 = vunpack.c.h.b16 %v2624
    %v3236 = vunpack.c.l.b16 %v2625
    %v3237 = vunpack.c.h.b16 %v2625
    %v3238 = vunpack.c.l.b16 %v2626
    %v3239 = vunpack.c.l.b16 %v2627
    %v3240 = vunpack.c.h.b16 %v2627
    %v3241 = vunpack.c.l.b16 %v2628
    %v3242 = vunpack.c.h.b16 %v2628
    %v3243 = vunpack.c.l.b16 %v2629
    %v3244 = vunpack.c.h.b16 %v2629
    %v3245 = vunpack.c.l.b16 %v2630
    %v3246 = vunpack.c.l.b16 %v2631
    %v3247 = vunpack.c.h.b16 %v2631
    %v3248 = vunpack.c.l.b16 %v2632
    %v3249 = vunpack.c.h.b16 %v2632
    %v3250 = vunpack.c.l.b16 %v2633
    %v3251 = vunpack.c.h.b16 %v2633
    %v3252 = vunpack.c.l.b16 %v2634
    %v3253 = vunpack.c.l.b16 %v2635
    %v3254 = vunpack.c.h.b16 %v2635
    %v3255 = vunpack.c.l.b16 %v2636
    %v3256 = vunpack.c.h.b16 %v2636
    %v3257 = vunpack.c.l.b16 %v2637
    %v3258 = vunpack.c.h.b16 %v2637
    %v3259 = vunpack.c.l.b16 %v2638
    %v3260 = vunpack.c.l.b16 %v2639
    %v3261 = vunpack.c.h.b16 %v2639
    %v3262 = vunpack.c.l.b16 %v2640
    %v3263 = vunpack.c.h.b16 %v2640
    %v3264 = vunpack.c.l.b16 %v2641
    %v3265 = vunpack.c.h.b16 %v2641
    %v3266 = vunpack.c.l.b16 %v2642
    %v3267 = vunpack.c.l.b16 %v2643
    %v3268 = vunpack.c.h.b16 %v2643
    %v3269 = vunpack.c.l.b16 %v2644
    %v3270 = vunpack.c.h.b16 %v2644
    %v3271 = vunpack.c.l.b16 %v2645
    %v3272 = vunpack.c.h.b16 %v2645
    %v3273 = vunpack.c.l.b16 %v2646
    %v3274 = vunpack.c.l.b16 %v2647
    %v3275 = vunpack.c.h.b16 %v2647
    %v3276 = vunpack.c.l.b16 %v2648
    %v3277 = vunpack.c.h.b16 %v2648
    %v3278 = vunpack.c.l.b16 %v2649
    %v3279 = vunpack.c.h.b16 %v2649
    %v3280 = vunpack.c.l.b16 %v2650
    %v3281 = vunpack.c.l.b16 %v2651
    %v3282 = vunpack.c.h.b16 %v2651
    %v3283 = vunpack.c.l.b16 %v2652
    %v3284 = vunpack.c.h.b16 %v2652
    %v3285 = vunpack.c.l.b16 %v2653
    %v3286 = vunpack.c.h.b16 %v2653
    %v3287 = vunpack.c.l.b16 %v2654
    %v3288 = vunpack.c.l.b16 %v2655
    %v3289 = vunpack.c.h.b16 %v2655
    %v3290 = vunpack.c.l.b16 %v2656
    %v3291 = vunpack.c.h.b16 %v2656
    %v3292 = vunpack.c.l.b16 %v2657
    %v3293 = vunpack.c.h.b16 %v2657
    %v3294 = vunpack.c.l.b16 %v2658
    %v3295 = vunpack.c.l.b16 %v2659
    %v3296 = vunpack.c.h.b16 %v2659
    %v3297 = vunpack.c.l.b16 %v2660
    %v3298 = vunpack.c.h.b16 %v2660
    %v3299 = vunpack.c.l.b16 %v2661
    %v3300 = vunpack.c.h.b16 %v2661
    %v3301 = vunpack.c.l.b16 %v2662
    %v3302 = vunpack.c.l.b16 %v2663
    %v3303 = vunpack.c.h.b16 %v2663
    %v3304 = vunpack.c.l.b16 %v2664
    %v3305 = vunpack.c.h.b16 %v2664
    %v3306 = vunpack.c.l.b16 %v2665
    %v3307 = vunpack.c.h.b16 %v2665
    %v3308 = vunpack.c.l.b16 %v2666
    %v3309 = vunpack.c.l.b16 %v2667
    %v3310 = vunpack.c.h.b16 %v2667
    %v3311 = vunpack.c.l.b16 %v2668
    %v3312 = vunpack.c.h.b16 %v2668
    %v3313 = vunpack.c.l.b16 %v2669
    %v3314 = vunpack.c.h.b16 %v2669
    %v3315 = vunpack.c.l.b16 %v2670
    %v3316 = vunpack.c.l.b16 %v2671
    %v3317 = vunpack.c.h.b16 %v2671
    %v3318 = vunpack.c.l.b16 %v2672
    %v3319 = vunpack.c.h.b16 %v2672
    %v3320 = vunpack.c.l.b16 %v2673
    %v3321 = vunpack.c.h.b16 %v2673
    %v3322 = vunpack.c.l.b16 %v2674
    %v3323 = vunpack.c.l.b16 %v2675
    %v3324 = vunpack.c.h.b16 %v2675
    %v3325 = vunpack.c.l.b16 %v2676
    %v3326 = vunpack.c.h.b16 %v2676
    %v3327 = vunpack.c.l.b16 %v2677
    %v3328 = vunpack.c.h.b16 %v2677
    %v3329 = vunpack.c.l.b16 %v2678
    %v3330 = vunpack.c.l.b16 %v2679
    %v3331 = vunpack.c.h.b16 %v2679
    %v3332 = vunpack.c.l.b16 %v2680
    %v3333 = vunpack.c.h.b16 %v2680
    %v3334 = vunpack.c.l.b16 %v2681
    %v3335 = vunpack.c.h.b16 %v2681
    %v3336 = vunpack.c.l.b16 %v2682
    %v3337 = vunpack.c.l.b16 %v2683
    %v3338 = vunpack.c.h.b16 %v2683
    %v3339 = vunpack.c.l.b16 %v2684
    %v3340 = vunpack.c.h.b16 %v2684
    %v3341 = vunpack.c.l.b16 %v2685
    %v3342 = vunpack.c.h.b16 %v2685
    %v3343 = vunpack.c.l.b16 %v2686
    %v3344 = vunpack.c.l.b16 %v2687
    %v3345 = vunpack.c.h.b16 %v2687
    %v3346 = vunpack.c.l.b16 %v2688
    %v3347 = vunpack.c.h.b16 %v2688
    %v3348 = vunpack.c.l.b16 %v2689
    %v3349 = vunpack.c.h.b16 %v2689
    %v3350 = vunpack.c.l.b16 %v2690
    %v3351 = vunpack.c.l.b16 %v2691
    %v3352 = vunpack.c.h.b16 %v2691
    %v3353 = vunpack.c.l.b16 %v2692
    %v3354 = vunpack.c.h.b16 %v2692
    %v3355 = vunpack.c.l.b16 %v2693
    %v3356 = vunpack.c.h.b16 %v2693
    %v3357 = vunpack.c.l.b16 %v2694
    %v3358 = vunpack.c.l.b16 %v2695
    %v3359 = vunpack.c.h.b16 %v2695
    %v3360 = vunpack.c.l.b16 %v2696
    %v3361 = vunpack.c.h.b16 %v2696
    %v3362 = vunpack.c.l.b16 %v2697
    %v3363 = vunpack.c.h.b16 %v2697
    %v3364 = vunpack.c.l.b16 %v2698
    %v3365 = vunpack.c.l.b16 %v2699
    %v3366 = vunpack.c.h.b16 %v2699
    %v3367 = vunpack.c.l.b16 %v2700
    %v3368 = vunpack.c.h.b16 %v2700
    %v3369 = vunpack.c.l.b16 %v2701
    %v3370 = vunpack.c.h.b16 %v2701
    %v3371 = vunpack.c.l.b16 %v2702
    %v3372 = vunpack.c.l.b16 %v2703
    %v3373 = vunpack.c.h.b16 %v2703
    %v3374 = vunpack.c.l.b16 %v2704
    %v3375 = vunpack.c.h.b16 %v2704
    %v3376 = vunpack.c.l.b16 %v2705
    %v3377 = vunpack.c.h.b16 %v2705
    %v3378 = vunpack.c.l.b16 %v2706
    %v3379 = vunpack.c.l.b16 %v2707
    %v3380 = vunpack.c.h.b16 %v2707
    %v3381 = vunpack.c.l.b16 %v2708
    %v3382 = vunpack.c.h.b16 %v2708
    %v3383 = vunpack.c.l.b16 %v2709
    %v3384 = vunpack.c.h.b16 %v2709
    %v3385 = vunpack.c.l.b16 %v2710
    %v3386 = vunpack.c.l.b16 %v2711
    %v3387 = vunpack.c.h.b16 %v2711
    %v3388 = vunpack.c.l.b16 %v2712
    %v3389 = vunpack.c.h.b16 %v2712
    %v3390 = vunpack.c.l.b16 %v2713
    %v3391 = vunpack.c.h.b16 %v2713
    %v3392 = vunpack.c.l.b16 %v2714
    %v3393 = vunpack.c.l.b16 %v2715
    %v3394 = vunpack.c.h.b16 %v2715
    %v3395 = vunpack.c.l.b16 %v2716
    %v3396 = vunpack.c.h.b16 %v2716
    %v3397 = vunpack.c.l.b16 %v2717
    %v3398 = vunpack.c.h.b16 %v2717
    %v3399 = vunpack.c.l.b16 %v2718
    %v3400 = vunpack.c.l.b16 %v2719
    %v3401 = vunpack.c.h.b16 %v2719
    %v3402 = vunpack.c.l.b16 %v2720
    %v3403 = vunpack.c.h.b16 %v2720
    %v3404 = vunpack.c.l.b16 %v2721
    %v3405 = vunpack.c.h.b16 %v2721
    %v3406 = vunpack.c.l.b16 %v2722
    %v3407 = vunpack.c.l.b16 %v2723
    %v3408 = vunpack.c.h.b16 %v2723
    %v3409 = vunpack.c.l.b16 %v2724
    %v3410 = vunpack.c.h.b16 %v2724
    %v3411 = vunpack.c.l.b16 %v2725
    %v3412 = vunpack.c.h.b16 %v2725
    %v3413 = vunpack.c.l.b16 %v2726
    %v3414 = vunpack.c.l.b16 %v2727
    %v3415 = vunpack.c.h.b16 %v2727
    %v3416 = vunpack.c.l.b16 %v2728
    %v3417 = vunpack.c.h.b16 %v2728
    %v3418 = vunpack.c.l.b16 %v2729
    %v3419 = vunpack.c.h.b16 %v2729
    %v3420 = vunpack.c.l.b16 %v2730
    %v3421 = vunpack.c.l.b16 %v2731
    %v3422 = vunpack.c.h.b16 %v2731
    %v3423 = vunpack.c.l.b16 %v2732
    %v3424 = vunpack.c.h.b16 %v2732
    %v3425 = vunpack.c.l.b16 %v2733
    %v3426 = vunpack.c.h.b16 %v2733
    %v3427 = vunpack.c.l.b16 %v2734
    %v3428 = vunpack.c.l.b16 %v2735
    %v3429 = vunpack.c.h.b16 %v2735
    %v3430 = vunpack.c.l.b16 %v2736
    %v3431 = vunpack.c.h.b16 %v2736
    %v3432 = vunpack.c.l.b16 %v2737
    %v3433 = vunpack.c.h.b16 %v2737
    %v3434 = vunpack.c.l.b16 %v2738
    %v3435 = vunpack.c.l.b16 %v2739
    %v3436 = vunpack.c.h.b16 %v2739
    %v3437 = vunpack.c.l.b16 %v2740
    %v3438 = vunpack.c.h.b16 %v2740
    %v3439 = vunpack.c.l.b16 %v2741
    %v3440 = vunpack.c.h.b16 %v2741
    %v3441 = vunpack.c.l.b16 %v2742
    %v3442 = vunpack.c.l.b16 %v2743
    %v3443 = vunpack.c.h.b16 %v2743
    %v3444 = vunpack.c.l.b16 %v2744
    %v3445 = vunpack.c.h.b16 %v2744
    %v3446 = vunpack.c.l.b16 %v2745
    %v3447 = vunpack.c.h.b16 %v2745
    %v3448 = vunpack.c.l.b16 %v2746
    %v3449 = vunpack.c.l.b16 %v2747
    %v3450 = vunpack.c.h.b16 %v2747
    %v3451 = vunpack.c.l.b16 %v2748
    %v3452 = vunpack.c.h.b16 %v2748
    %v3453 = vunpack.c.l.b16 %v2749
    %v3454 = vunpack.c.h.b16 %v2749
    %v3455 = vunpack.c.l.b16 %v2750
    %v3456 = vunpack.c.l.b16 %v2751
    %v3457 = vunpack.c.h.b16 %v2751
    %v3458 = vunpack.c.l.b16 %v2752
    %v3459 = vunpack.c.h.b16 %v2752
    %v3460 = vunpack.c.l.b16 %v2753
    %v3461 = vunpack.c.h.b16 %v2753
    %v3462 = vunpack.c.l.b16 %v2754
    %v3463 = vunpack.c.l.b16 %v2755
    %v3464 = vunpack.c.h.b16 %v2755
    %v3465 = vunpack.c.l.b16 %v2756
    %v3466 = vunpack.c.h.b16 %v2756
    %v3467 = vunpack.c.l.b16 %v2757
    %v3468 = vunpack.c.h.b16 %v2757
    %v3469 = vunpack.c.l.b16 %v2758
    %v3470 = vunpack.c.l.b16 %v2759
    %v3471 = vunpack.c.h.b16 %v2759
    %v3472 = vunpack.c.l.b16 %v2760
    %v3473 = vunpack.c.h.b16 %v2760
    %v3474 = vunpack.c.l.b16 %v2761
    %v3475 = vunpack.c.h.b16 %v2761
    %v3476 = vunpack.c.l.b16 %v2762
    %v3477 = vunpack.c.l.b16 %v2763
    %v3478 = vunpack.c.h.b16 %v2763
    %v3479 = vunpack.c.l.b16 %v2764
    %v3480 = vunpack.c.h.b16 %v2764
    %v3481 = vunpack.c.l.b16 %v2765
    %v3482 = vunpack.c.h.b16 %v2765
    %v3483 = vunpack.c.l.b16 %v2766
    %v3484 = vunpack.c.l.b16 %v2767
    %v3485 = vunpack.c.h.b16 %v2767
    %v3486 = vunpack.c.l.b16 %v2768
    %v3487 = vunpack.c.h.b16 %v2768
    %v3488 = vunpack.c.l.b16 %v2769
    %v3489 = vunpack.c.h.b16 %v2769
    %v3490 = vunpack.c.l.b16 %v2770
    %v3491 = vunpack.c.l.b16 %v2771
    %v3492 = vunpack.c.h.b16 %v2771
    %v3493 = vunpack.c.l.b16 %v2772
    %v3494 = vunpack.c.h.b16 %v2772
    %v3495 = vunpack.c.l.b16 %v2773
    %v3496 = vunpack.c.h.b16 %v2773
    %v3497 = vunpack.c.l.b16 %v2774
    %v3498 = vunpack.c.l.b16 %v2775
    %v3499 = vunpack.c.h.b16 %v2775
    %v3500 = vunpack.c.l.b16 %v2776
    %v3501 = vunpack.c.h.b16 %v2776
    %v3502 = vunpack.c.l.b16 %v2777
    %v3503 = vunpack.c.h.b16 %v2777
    %v3504 = vunpack.c.l.b16 %v2778
    %v3505 = vunpack.c.l.b16 %v2779
    %v3506 = vunpack.c.h.b16 %v2779
    %v3507 = vunpack.c.l.b16 %v2780
    %v3508 = vunpack.c.h.b16 %v2780
    %v3509 = vunpack.c.l.b16 %v2781
    %v3510 = vunpack.c.h.b16 %v2781
    %v3511 = vunpack.c.l.b16 %v2782
    %v3512 = vunpack.c.l.b16 %v2783
    %v3513 = vunpack.c.h.b16 %v2783
    %v3514 = vunpack.c.l.b16 %v2784
    %v3515 = vunpack.c.h.b16 %v2784
    %v3516 = vunpack.c.l.b16 %v2785
    %v3517 = vunpack.c.h.b16 %v2785
    %v3518 = vunpack.c.l.b16 %v2786
    %v3519 = vunpack.c.l.b16 %v2787
    %v3520 = vunpack.c.h.b16 %v2787
    %v3521 = vunpack.c.l.b16 %v2788
    %v3522 = vunpack.c.h.b16 %v2788
    %v3523 = vunpack.c.l.b16 %v2789
    %v3524 = vunpack.c.h.b16 %v2789
    %v3525 = vunpack.c.l.b16 %v2790
    %v3526 = vunpack.c.l.b16 %v2791
    %v3527 = vunpack.c.h.b16 %v2791
    %v3528 = vunpack.c.l.b16 %v2792
    %v3529 = vunpack.c.h.b16 %v2792
    %v3530 = vunpack.c.l.b16 %v2793
    %v3531 = vunpack.c.h.b16 %v2793
    %v3532 = vunpack.c.l.b16 %v2794
    %v3533 = vunpack.c.l.b16 %v2795
    %v3534 = vunpack.c.h.b16 %v2795
    %v3535 = vunpack.c.l.b16 %v2796
    %v3536 = vunpack.c.h.b16 %v2796
    %v3537 = vunpack.c.l.b16 %v2797
    %v3538 = vunpack.c.h.b16 %v2797
    %v3539 = vunpack.c.l.b16 %v2798
    %v3540 = vpack.c.b16 %v3099, %v3092
    %v3541 = vpack.c.b16 %v3100, %v3093
    %v3542 = vpack.c.b16 %v3101, %v3094
    %v3543 = vpack.c.b16 %v3102, %v3095
    %v3544 = vpack.c.b16 %v3103, %v3096
    %v3545 = vpack.c.b16 %v3104, %v3097
    %v3546 = vpack.c.b16 %v3105, %v3098
    %v3547 = vpack.c.b16 %v3113, %v3106
    %v3548 = vpack.c.b16 %v3114, %v3107
    %v3549 = vpack.c.b16 %v3115, %v3108
    %v3550 = vpack.c.b16 %v3116, %v3109
    %v3551 = vpack.c.b16 %v3117, %v3110
    %v3552 = vpack.c.b16 %v3118, %v3111
    %v3553 = vpack.c.b16 %v3119, %v3112
    %v3554 = vpack.c.b16 %v3127, %v3120
    %v3555 = vpack.c.b16 %v3128, %v3121
    %v3556 = vpack.c.b16 %v3129, %v3122
    %v3557 = vpack.c.b16 %v3130, %v3123
    %v3558 = vpack.c.b16 %v3131, %v3124
    %v3559 = vpack.c.b16 %v3132, %v3125
    %v3560 = vpack.c.b16 %v3133, %v3126
    %v3561 = vpack.c.b16 %v3141, %v3134
    %v3562 = vpack.c.b16 %v3142, %v3135
    %v3563 = vpack.c.b16 %v3143, %v3136
    %v3564 = vpack.c.b16 %v3144, %v3137
    %v3565 = vpack.c.b16 %v3145, %v3138
    %v3566 = vpack.c.b16 %v3146, %v3139
    %v3567 = vpack.c.b16 %v3147, %v3140
    %v3568 = vpack.c.b16 %v3155, %v3148
    %v3569 = vpack.c.b16 %v3156, %v3149
    %v3570 = vpack.c.b16 %v3157, %v3150
    %v3571 = vpack.c.b16 %v3158, %v3151
    %v3572 = vpack.c.b16 %v3159, %v3152
    %v3573 = vpack.c.b16 %v3160, %v3153
    %v3574 = vpack.c.b16 %v3161, %v3154
    %v3575 = vpack.c.b16 %v3169, %v3162
    %v3576 = vpack.c.b16 %v3170, %v3163
    %v3577 = vpack.c.b16 %v3171, %v3164
    %v3578 = vpack.c.b16 %v3172, %v3165
    %v3579 = vpack.c.b16 %v3173, %v3166
    %v3580 = vpack.c.b16 %v3174, %v3167
    %v3581 = vpack.c.b16 %v3175, %v3168
    %v3582 = vpack.c.b16 %v3183, %v3176
    %v3583 = vpack.c.b16 %v3184, %v3177
    %v3584 = vpack.c.b16 %v3185, %v3178
    %v3585 = vpack.c.b16 %v3186, %v3179
    %v3586 = vpack.c.b16 %v3187, %v3180
    %v3587 = vpack.c.b16 %v3188, %v3181
    %v3588 = vpack.c.b16 %v3189, %v3182
    %v3589 = vpack.c.b16 %v3197, %v3190
    %v3590 = vpack.c.b16 %v3198, %v3191
    %v3591 = vpack.c.b16 %v3199, %v3192
    %v3592 = vpack.c.b16 %v3200, %v3193
    %v3593 = vpack.c.b16 %v3201, %v3194
    %v3594 = vpack.c.b16 %v3202, %v3195
    %v3595 = vpack.c.b16 %v3203, %v3196
    %v3596 = vpack.c.b16 %v3211, %v3204
    %v3597 = vpack.c.b16 %v3212, %v3205
    %v3598 = vpack.c.b16 %v3213, %v3206
    %v3599 = vpack.c.b16 %v3214, %v3207
    %v3600 = vpack.c.b16 %v3215, %v3208
    %v3601 = vpack.c.b16 %v3216, %v3209
    %v3602 = vpack.c.b16 %v3217, %v3210
    %v3603 = vpack.c.b16 %v3225, %v3218
    %v3604 = vpack.c.b16 %v3226, %v3219
    %v3605 = vpack.c.b16 %v3227, %v3220
    %v3606 = vpack.c.b16 %v3228, %v3221
    %v3607 = vpack.c.b16 %v3229, %v3222
    %v3608 = vpack.c.b16 %v3230, %v3223
    %v3609 = vpack.c.b16 %v3231, %v3224
    %v3610 = vpack.c.b16 %v3239, %v3232
    %v3611 = vpack.c.b16 %v3240, %v3233
    %v3612 = vpack.c.b16 %v3241, %v3234
    %v3613 = vpack.c.b16 %v3242, %v3235
    %v3614 = vpack.c.b16 %v3243, %v3236
    %v3615 = vpack.c.b16 %v3244, %v3237
    %v3616 = vpack.c.b16 %v3245, %v3238
    %v3617 = vpack.c.b16 %v3253, %v3246
    %v3618 = vpack.c.b16 %v3254, %v3247
    %v3619 = vpack.c.b16 %v3255, %v3248
    %v3620 = vpack.c.b16 %v3256, %v3249
    %v3621 = vpack.c.b16 %v3257, %v3250
    %v3622 = vpack.c.b16 %v3258, %v3251
    %v3623 = vpack.c.b16 %v3259, %v3252
    %v3624 = vpack.c.b16 %v3267, %v3260
    %v3625 = vpack.c.b16 %v3268, %v3261
    %v3626 = vpack.c.b16 %v3269, %v3262
    %v3627 = vpack.c.b16 %v3270, %v3263
    %v3628 = vpack.c.b16 %v3271, %v3264
    %v3629 = vpack.c.b16 %v3272, %v3265
    %v3630 = vpack.c.b16 %v3273, %v3266
    %v3631 = vpack.c.b16 %v3281, %v3274
    %v3632 = vpack.c.b16 %v3282, %v3275
    %v3633 = vpack.c.b16 %v3283, %v3276
    %v3634 = vpack.c.b16 %v3284, %v3277
    %v3635 = vpack.c.b16 %v3285, %v3278
    %v3636 = vpack.c.b16 %v3286, %v3279
    %v3637 = vpack.c.b16 %v3287, %v3280
    %v3638 = vpack.c.b16 %v3295, %v3288
    %v3639 = vpack.c.b16 %v3296, %v3289
    %v3640 = vpack.c.b16 %v3297, %v3290
    %v3641 = vpack.c.b16 %v3298, %v3291
    %v3642 = vpack.c.b16 %v3299, %v3292
    %v3643 = vpack.c.b16 %v3300, %v3293
    %v3644 = vpack.c.b16 %v3301, %v3294
    %v3645 = vpack.c.b16 %v3309, %v3302
    %v3646 = vpack.c.b16 %v3310, %v3303
    %v3647 = vpack.c.b16 %v3311, %v3304
    %v3648 = vpack.c.b16 %v3312, %v3305
    %v3649 = vpack.c.b16 %v3313, %v3306
    %v3650 = vpack.c.b16 %v3314, %v3307
    %v3651 = vpack.c.b16 %v3315, %v3308
    %v3652 = vpack.c.b16 %v3323, %v3316
    %v3653 = vpack.c.b16 %v3324, %v3317
    %v3654 = vpack.c.b16 %v3325, %v3318
    %v3655 = vpack.c.b16 %v3326, %v3319
    %v3656 = vpack.c.b16 %v3327, %v3320
    %v3657 = vpack.c.b16 %v3328, %v3321
    %v3658 = vpack.c.b16 %v3329, %v3322
    %v3659 = vpack.c.b16 %v3337, %v3330
    %v3660 = vpack.c.b16 %v3338, %v3331
    %v3661 = vpack.c.b16 %v3339, %v3332
    %v3662 = vpack.c.b16 %v3340, %v3333
    %v3663 = vpack.c.b16 %v3341, %v3334
    %v3664 = vpack.c.b16 %v3342, %v3335
    %v3665 = vpack.c.b16 %v3343, %v3336
    %v3666 = vpack.c.b16 %v3351, %v3344
    %v3667 = vpack.c.b16 %v3352, %v3345
    %v3668 = vpack.c.b16 %v3353, %v3346
    %v3669 = vpack.c.b16 %v3354, %v3347
    %v3670 = vpack.c.b16 %v3355, %v3348
    %v3671 = vpack.c.b16 %v3356, %v3349
    %v3672 = vpack.c.b16 %v3357, %v3350
    %v3673 = vpack.c.b16 %v3365, %v3358
    %v3674 = vpack.c.b16 %v3366, %v3359
    %v3675 = vpack.c.b16 %v3367, %v3360
    %v3676 = vpack.c.b16 %v3368, %v3361
    %v3677 = vpack.c.b16 %v3369, %v3362
    %v3678 = vpack.c.b16 %v3370, %v3363
    %v3679 = vpack.c.b16 %v3371, %v3364
    %v3680 = vpack.c.b16 %v3379, %v3372
    %v3681 = vpack.c.b16 %v3380, %v3373
    %v3682 = vpack.c.b16 %v3381, %v3374
    %v3683 = vpack.c.b16 %v3382, %v3375
    %v3684 = vpack.c.b16 %v3383, %v3376
    %v3685 = vpack.c.b16 %v3384, %v3377
    %v3686 = vpack.c.b16 %v3385, %v3378
    %v3687 = vpack.c.b16 %v3393, %v3386
    %v3688 = vpack.c.b16 %v3394, %v3387
    %v3689 = vpack.c.b16 %v3395, %v3388
    %v3690 = vpack.c.b16 %v3396, %v3389
    %v3691 = vpack.c.b16 %v3397, %v3390
    %v3692 = vpack.c.b16 %v3398, %v3391
    %v3693 = vpack.c.b16 %v3399, %v3392
    %v3694 = vpack.c.b16 %v3407, %v3400
    %v3695 = vpack.c.b16 %v3408, %v3401
    %v3696 = vpack.c.b16 %v3409, %v3402
    %v3697 = vpack.c.b16 %v3410, %v3403
    %v3698 = vpack.c.b16 %v3411, %v3404
    %v3699 = vpack.c.b16 %v3412, %v3405
    %v3700 = vpack.c.b16 %v3413, %v3406
    %v3701 = vpack.c.b16 %v3421, %v3414
    %v3702 = vpack.c.b16 %v3422, %v3415
    %v3703 = vpack.c.b16 %v3423, %v3416
    %v3704 = vpack.c.b16 %v3424, %v3417
    %v3705 = vpack.c.b16 %v3425, %v3418
    %v3706 = vpack.c.b16 %v3426, %v3419
    %v3707 = vpack.c.b16 %v3427, %v3420
    %v3708 = vpack.c.b16 %v3435, %v3428
    %v3709 = vpack.c.b16 %v3436, %v3429
    %v3710 = vpack.c.b16 %v3437, %v3430
    %v3711 = vpack.c.b16 %v3438, %v3431
    %v3712 = vpack.c.b16 %v3439, %v3432
    %v3713 = vpack.c.b16 %v3440, %v3433
    %v3714 = vpack.c.b16 %v3441, %v3434
    %v3715 = vpack.c.b16 %v3449, %v3442
    %v3716 = vpack.c.b16 %v3450, %v3443
    %v3717 = vpack.c.b16 %v3451, %v3444
    %v3718 = vpack.c.b16 %v3452, %v3445
    %v3719 = vpack.c.b16 %v3453, %v3446
    %v3720 = vpack.c.b16 %v3454, %v3447
    %v3721 = vpack.c.b16 %v3455, %v3448
    %v3722 = vpack.c.b16 %v3463, %v3456
    %v3723 = vpack.c.b16 %v3464, %v3457
    %v3724 = vpack.c.b16 %v3465, %v3458
    %v3725 = vpack.c.b16 %v3466, %v3459
    %v3726 = vpack.c.b16 %v3467, %v3460
    %v3727 = vpack.c.b16 %v3468, %v3461
    %v3728 = vpack.c.b16 %v3469, %v3462
    %v3729 = vpack.c.b16 %v3477, %v3470
    %v3730 = vpack.c.b16 %v3478, %v3471
    %v3731 = vpack.c.b16 %v3479, %v3472
    %v3732 = vpack.c.b16 %v3480, %v3473
    %v3733 = vpack.c.b16 %v3481, %v3474
    %v3734 = vpack.c.b16 %v3482, %v3475
    %v3735 = vpack.c.b16 %v3483, %v3476
    %v3736 = vpack.c.b16 %v3491, %v3484
    %v3737 = vpack.c.b16 %v3492, %v3485
    %v3738 = vpack.c.b16 %v3493, %v3486
    %v3739 = vpack.c.b16 %v3494, %v3487
    %v3740 = vpack.c.b16 %v3495, %v3488
    %v3741 = vpack.c.b16 %v3496, %v3489
    %v3742 = vpack.c.b16 %v3497, %v3490
    %v3743 = vpack.c.b16 %v3505, %v3498
    %v3744 = vpack.c.b16 %v3506, %v3499
    %v3745 = vpack.c.b16 %v3507, %v3500
    %v3746 = vpack.c.b16 %v3508, %v3501
    %v3747 = vpack.c.b16 %v3509, %v3502
    %v3748 = vpack.c.b16 %v3510, %v3503
    %v3749 = vpack.c.b16 %v3511, %v3504
    %v3750 = vpack.c.b16 %v3519, %v3512
    %v3751 = vpack.c.b16 %v3520, %v3513
    %v3752 = vpack.c.b16 %v3521, %v3514
    %v3753 = vpack.c.b16 %v3522, %v3515
    %v3754 = vpack.c.b16 %v3523, %v3516
    %v3755 = vpack.c.b16 %v3524, %v3517
    %v3756 = vpack.c.b16 %v3525, %v3518
    %v3757 = vpack.c.b16 %v3533, %v3526
    %v3758 = vpack.c.b16 %v3534, %v3527
    %v3759 = vpack.c.b16 %v3535, %v3528
    %v3760 = vpack.c.b16 %v3536, %v3529
    %v3761 = vpack.c.b16 %v3537, %v3530
    %v3762 = vpack.c.b16 %v3538, %v3531
    %v3763 = vpack.c.b16 %v3539, %v3532
    %3988 = vmatprep.subr.bf16.mxu0 %v3590
    %3989 = vmatpush1.bf16.msra.mxu0 %v3589
    %3990 = vmatprep.subr.bf16.mxu0 %v3583
    %3991 = vmatpush1.bf16.msra.mxu0 %v3582
    %3992 = vmatprep.subr.bf16.mxu0 %v3576
    %3993 = vmatpush1.bf16.msra.mxu0 %v3575
    %3994 = vmatprep.subr.bf16.mxu0 %v3569
    %3995 = vmatpush1.bf16.msra.mxu0 %v3568
    %3996 = vmatprep.subr.bf16.mxu0 %v3562
    %3997 = vmatpush1.bf16.msra.mxu0 %v3561
    %3998 = vmatprep.subr.bf16.mxu0 %v3555
    %3999 = vmatpush1.bf16.msra.mxu0 %v3554
    %4000 = vmatprep.subr.bf16.mxu0 %v3548
    %4001 = vmatpush1.bf16.msra.mxu0 %v3547
    %4002 = vmatprep.subr.bf16.mxu0 %v3541
    %4003 = vmatpush1.bf16.msra.mxu0 %v3540
    %4004 = vmatprep.subr.bf16.mxu0 %v3646
    %4005 = vmatpush2.bf16.msra.mxu0 %v3645
    %4006 = vmatprep.subr.bf16.mxu0 %v3639
    %4007 = vmatpush2.bf16.msra.mxu0 %v3638
    %4008 = vmatprep.subr.bf16.mxu0 %v3632
    %4009 = vmatpush2.bf16.msra.mxu0 %v3631
    %4010 = vmatprep.subr.bf16.mxu0 %v3625
    %4011 = vmatpush2.bf16.msra.mxu0 %v3624
    %4012 = vmatprep.subr.bf16.mxu0 %v3618
    %4013 = vmatpush2.bf16.msra.mxu0 %v3617
    %4014 = vmatprep.subr.bf16.mxu0 %v3611
    %4015 = vmatpush2.bf16.msra.mxu0 %v3610
    %4016 = vmatprep.subr.bf16.mxu0 %v3604
    %4017 = vmatpush2.bf16.msra.mxu0 %v3603
    %4018 = vmatprep.subr.bf16.mxu0 %v3597
    %4019 = vmatpush2.bf16.msra.mxu0 %v3596
    %4020 = vmatprep.mubr.bf16.mxu0 %v2540
    %4021 = vmatmul.mubr.bf16.gmra.mxu0 %v2539
    %v4022 = vpop.f32.mrf.mxu0
    %v4023 = vadd.f32 %v2804, %v4022
    %v4024 = vpop.f32.mrf.mxu0
    %v4025 = vadd.f32 %v2808, %v4024
    %v4026 = vpop.f32.mrf.mxu0
    %v4027 = vadd.f32 %v2804, %v4026
    %v4028 = vpop.f32.mrf.mxu0
    %v4029 = vadd.f32 %v2808, %v4028
    %4030 = vdwg.mxu0
    %4031 = vmatprep.subr.bf16.mxu0 %v3702
    %4032 = vmatpush1.bf16.msra.mxu0 %v3701
    %4033 = vmatprep.subr.bf16.mxu0 %v3695
    %4034 = vmatpush1.bf16.msra.mxu0 %v3694
    %4035 = vmatprep.subr.bf16.mxu0 %v3688
    %4036 = vmatpush1.bf16.msra.mxu0 %v3687
    %4037 = vmatprep.subr.bf16.mxu0 %v3681
    %4038 = vmatpush1.bf16.msra.mxu0 %v3680
    %4039 = vmatprep.subr.bf16.mxu0 %v3674
    %4040 = vmatpush1.bf16.msra.mxu0 %v3673
    %4041 = vmatprep.subr.bf16.mxu0 %v3667
    %4042 = vmatpush1.bf16.msra.mxu0 %v3666
    %4043 = vmatprep.subr.bf16.mxu0 %v3660
    %4044 = vmatpush1.bf16.msra.mxu0 %v3659
    %4045 = vmatprep.subr.bf16.mxu0 %v3653
    %4046 = vmatpush1.bf16.msra.mxu0 %v3652
    %4047 = vmatprep.subr.bf16.mxu0 %v3758
    %4048 = vmatpush2.bf16.msra.mxu0 %v3757
    %4049 = vmatprep.subr.bf16.mxu0 %v3751
    %4050 = vmatpush2.bf16.msra.mxu0 %v3750
    %4051 = vmatprep.subr.bf16.mxu0 %v3744
    %4052 = vmatpush2.bf16.msra.mxu0 %v3743
    %4053 = vmatprep.subr.bf16.mxu0 %v3737
    %4054 = vmatpush2.bf16.msra.mxu0 %v3736
    %4055 = vmatprep.subr.bf16.mxu0 %v3730
    %4056 = vmatpush2.bf16.msra.mxu0 %v3729
    %4057 = vmatprep.subr.bf16.mxu0 %v3723
    %4058 = vmatpush2.bf16.msra.mxu0 %v3722
    %4059 = vmatprep.subr.bf16.mxu0 %v3716
    %4060 = vmatpush2.bf16.msra.mxu0 %v3715
    %4061 = vmatprep.subr.bf16.mxu0 %v3709
    %4062 = vmatpush2.bf16.msra.mxu0 %v3708
    %4063 = vmatprep.mubr.bf16.mxu0 %v2542
    %4064 = vmatmul.mubr.bf16.gmra.mxu0 %v2541
    %v4065 = vpop.f32.mrf.mxu0
    %v4066 = vadd.f32 %v4023, %v4065
    %v4067 = vpop.f32.mrf.mxu0
    %v4068 = vadd.f32 %v4025, %v4067
    %v4069 = vpop.f32.mrf.mxu0
    %v4070 = vadd.f32 %v4027, %v4069
    %v4071 = vpop.f32.mrf.mxu0
    %v4072 = vadd.f32 %v4029, %v4071
    %4073 = vdwg.mxu0
    %4074 = vmatprep.subr.bf16.mxu0 %v3592
    %4075 = vmatpush1.bf16.msra.mxu0 %v3591
    %4076 = vmatprep.subr.bf16.mxu0 %v3585
    %4077 = vmatpush1.bf16.msra.mxu0 %v3584
    %4078 = vmatprep.subr.bf16.mxu0 %v3578
    %4079 = vmatpush1.bf16.msra.mxu0 %v3577
    %4080 = vmatprep.subr.bf16.mxu0 %v3571
    %4081 = vmatpush1.bf16.msra.mxu0 %v3570
    %4082 = vmatprep.subr.bf16.mxu0 %v3564
    %4083 = vmatpush1.bf16.msra.mxu0 %v3563
    %4084 = vmatprep.subr.bf16.mxu0 %v3557
    %4085 = vmatpush1.bf16.msra.mxu0 %v3556
    %4086 = vmatprep.subr.bf16.mxu0 %v3550
    %4087 = vmatpush1.bf16.msra.mxu0 %v3549
    %4088 = vmatprep.subr.bf16.mxu0 %v3543
    %4089 = vmatpush1.bf16.msra.mxu0 %v3542
    %4090 = vmatprep.subr.bf16.mxu0 %v3648
    %4091 = vmatpush2.bf16.msra.mxu0 %v3647
    %4092 = vmatprep.subr.bf16.mxu0 %v3641
    %4093 = vmatpush2.bf16.msra.mxu0 %v3640
    %4094 = vmatprep.subr.bf16.mxu0 %v3634
    %4095 = vmatpush2.bf16.msra.mxu0 %v3633
    %4096 = vmatprep.subr.bf16.mxu0 %v3627
    %4097 = vmatpush2.bf16.msra.mxu0 %v3626
    %4098 = vmatprep.subr.bf16.mxu0 %v3620
    %4099 = vmatpush2.bf16.msra.mxu0 %v3619
    %4100 = vmatprep.subr.bf16.mxu0 %v3613
    %4101 = vmatpush2.bf16.msra.mxu0 %v3612
    %4102 = vmatprep.subr.bf16.mxu0 %v3606
    %4103 = vmatpush2.bf16.msra.mxu0 %v3605
    %4104 = vmatprep.subr.bf16.mxu0 %v3599
    %4105 = vmatpush2.bf16.msra.mxu0 %v3598
    %4106 = vmatprep.mubr.bf16.mxu0 %v2540
    %4107 = vmatmul.mubr.bf16.gmra.mxu0 %v2539
    %v4108 = vpop.f32.mrf.mxu0
    %v4109 = vadd.f32 %v2812, %v4108
    %v4110 = vpop.f32.mrf.mxu0
    %v4111 = vadd.f32 %v2816, %v4110
    %v4112 = vpop.f32.mrf.mxu0
    %v4113 = vadd.f32 %v2812, %v4112
    %v4114 = vpop.f32.mrf.mxu0
    %v4115 = vadd.f32 %v2816, %v4114
    %4116 = vdwg.mxu0
    %4117 = vmatprep.subr.bf16.mxu0 %v3704
    %4118 = vmatpush1.bf16.msra.mxu0 %v3703
    %4119 = vmatprep.subr.bf16.mxu0 %v3697
    %4120 = vmatpush1.bf16.msra.mxu0 %v3696
    %4121 = vmatprep.subr.bf16.mxu0 %v3690
    %4122 = vmatpush1.bf16.msra.mxu0 %v3689
    %4123 = vmatprep.subr.bf16.mxu0 %v3683
    %4124 = vmatpush1.bf16.msra.mxu0 %v3682
    %4125 = vmatprep.subr.bf16.mxu0 %v3676
    %4126 = vmatpush1.bf16.msra.mxu0 %v3675
    %4127 = vmatprep.subr.bf16.mxu0 %v3669
    %4128 = vmatpush1.bf16.msra.mxu0 %v3668
    %4129 = vmatprep.subr.bf16.mxu0 %v3662
    %4130 = vmatpush1.bf16.msra.mxu0 %v3661
    %4131 = vmatprep.subr.bf16.mxu0 %v3655
    %4132 = vmatpush1.bf16.msra.mxu0 %v3654
    %4133 = vmatprep.subr.bf16.mxu0 %v3760
    %4134 = vmatpush2.bf16.msra.mxu0 %v3759
    %4135 = vmatprep.subr.bf16.mxu0 %v3753
    %4136 = vmatpush2.bf16.msra.mxu0 %v3752
    %4137 = vmatprep.subr.bf16.mxu0 %v3746
    %4138 = vmatpush2.bf16.msra.mxu0 %v3745
    %4139 = vmatprep.subr.bf16.mxu0 %v3739
    %4140 = vmatpush2.bf16.msra.mxu0 %v3738
    %4141 = vmatprep.subr.bf16.mxu0 %v3732
    %4142 = vmatpush2.bf16.msra.mxu0 %v3731
    %4143 = vmatprep.subr.bf16.mxu0 %v3725
    %4144 = vmatpush2.bf16.msra.mxu0 %v3724
    %4145 = vmatprep.subr.bf16.mxu0 %v3718
    %4146 = vmatpush2.bf16.msra.mxu0 %v3717
    %4147 = vmatprep.subr.bf16.mxu0 %v3711
    %4148 = vmatpush2.bf16.msra.mxu0 %v3710
    %4149 = vmatprep.mubr.bf16.mxu0 %v2542
    %4150 = vmatmul.mubr.bf16.gmra.mxu0 %v2541
    %v4151 = vpop.f32.mrf.mxu0
    %v4152 = vadd.f32 %v4109, %v4151
    %v4153 = vpop.f32.mrf.mxu0
    %v4154 = vadd.f32 %v4111, %v4153
    %v4155 = vpop.f32.mrf.mxu0
    %v4156 = vadd.f32 %v4113, %v4155
    %v4157 = vpop.f32.mrf.mxu0
    %v4158 = vadd.f32 %v4115, %v4157
    %4159 = vdwg.mxu0
    %4160 = vmatprep.subr.bf16.mxu0 %v3594
    %4161 = vmatpush1.bf16.msra.mxu0 %v3593
    %4162 = vmatprep.subr.bf16.mxu0 %v3587
    %4163 = vmatpush1.bf16.msra.mxu0 %v3586
    %4164 = vmatprep.subr.bf16.mxu0 %v3580
    %4165 = vmatpush1.bf16.msra.mxu0 %v3579
    %4166 = vmatprep.subr.bf16.mxu0 %v3573
    %4167 = vmatpush1.bf16.msra.mxu0 %v3572
    %4168 = vmatprep.subr.bf16.mxu0 %v3566
    %4169 = vmatpush1.bf16.msra.mxu0 %v3565
    %4170 = vmatprep.subr.bf16.mxu0 %v3559
    %4171 = vmatpush1.bf16.msra.mxu0 %v3558
    %4172 = vmatprep.subr.bf16.mxu0 %v3552
    %4173 = vmatpush1.bf16.msra.mxu0 %v3551
    %4174 = vmatprep.subr.bf16.mxu0 %v3545
    %4175 = vmatpush1.bf16.msra.mxu0 %v3544
    %4176 = vmatprep.subr.bf16.mxu0 %v3650
    %4177 = vmatpush2.bf16.msra.mxu0 %v3649
    %4178 = vmatprep.subr.bf16.mxu0 %v3643
    %4179 = vmatpush2.bf16.msra.mxu0 %v3642
    %4180 = vmatprep.subr.bf16.mxu0 %v3636
    %4181 = vmatpush2.bf16.msra.mxu0 %v3635
    %4182 = vmatprep.subr.bf16.mxu0 %v3629
    %4183 = vmatpush2.bf16.msra.mxu0 %v3628
    %4184 = vmatprep.subr.bf16.mxu0 %v3622
    %4185 = vmatpush2.bf16.msra.mxu0 %v3621
    %4186 = vmatprep.subr.bf16.mxu0 %v3615
    %4187 = vmatpush2.bf16.msra.mxu0 %v3614
    %4188 = vmatprep.subr.bf16.mxu0 %v3608
    %4189 = vmatpush2.bf16.msra.mxu0 %v3607
    %4190 = vmatprep.subr.bf16.mxu0 %v3601
    %4191 = vmatpush2.bf16.msra.mxu0 %v3600
    %4192 = vmatprep.mubr.bf16.mxu0 %v2540
    %4193 = vmatmul.mubr.bf16.gmra.mxu0 %v2539
    %v4194 = vpop.f32.mrf.mxu0
    %v4195 = vadd.f32 %v2820, %v4194
    %v4196 = vpop.f32.mrf.mxu0
    %v4197 = vadd.f32 %v2824, %v4196
    %v4198 = vpop.f32.mrf.mxu0
    %v4199 = vadd.f32 %v2820, %v4198
    %v4200 = vpop.f32.mrf.mxu0
    %v4201 = vadd.f32 %v2824, %v4200
    %4202 = vdwg.mxu0
    %4203 = vmatprep.subr.bf16.mxu0 %v3706
    %4204 = vmatpush1.bf16.msra.mxu0 %v3705
    %4205 = vmatprep.subr.bf16.mxu0 %v3699
    %4206 = vmatpush1.bf16.msra.mxu0 %v3698
    %4207 = vmatprep.subr.bf16.mxu0 %v3692
    %4208 = vmatpush1.bf16.msra.mxu0 %v3691
    %4209 = vmatprep.subr.bf16.mxu0 %v3685
    %4210 = vmatpush1.bf16.msra.mxu0 %v3684
    %4211 = vmatprep.subr.bf16.mxu0 %v3678
    %4212 = vmatpush1.bf16.msra.mxu0 %v3677
    %4213 = vmatprep.subr.bf16.mxu0 %v3671
    %4214 = vmatpush1.bf16.msra.mxu0 %v3670
    %4215 = vmatprep.subr.bf16.mxu0 %v3664
    %4216 = vmatpush1.bf16.msra.mxu0 %v3663
    %4217 = vmatprep.subr.bf16.mxu0 %v3657
    %4218 = vmatpush1.bf16.msra.mxu0 %v3656
    %4219 = vmatprep.subr.bf16.mxu0 %v3762
    %4220 = vmatpush2.bf16.msra.mxu0 %v3761
    %4221 = vmatprep.subr.bf16.mxu0 %v3755
    %4222 = vmatpush2.bf16.msra.mxu0 %v3754
    %4223 = vmatprep.subr.bf16.mxu0 %v3748
    %4224 = vmatpush2.bf16.msra.mxu0 %v3747
    %4225 = vmatprep.subr.bf16.mxu0 %v3741
    %4226 = vmatpush2.bf16.msra.mxu0 %v3740
    %4227 = vmatprep.subr.bf16.mxu0 %v3734
    %4228 = vmatpush2.bf16.msra.mxu0 %v3733
    %4229 = vmatprep.subr.bf16.mxu0 %v3727
    %4230 = vmatpush2.bf16.msra.mxu0 %v3726
    %4231 = vmatprep.subr.bf16.mxu0 %v3720
    %4232 = vmatpush2.bf16.msra.mxu0 %v3719
    %4233 = vmatprep.subr.bf16.mxu0 %v3713
    %4234 = vmatpush2.bf16.msra.mxu0 %v3712
    %4235 = vmatprep.mubr.bf16.mxu0 %v2542
    %4236 = vmatmul.mubr.bf16.gmra.mxu0 %v2541
    %v4237 = vpop.f32.mrf.mxu0
    %v4238 = vadd.f32 %v4195, %v4237
    %v4239 = vpop.f32.mrf.mxu0
    %v4240 = vadd.f32 %v4197, %v4239
    %v4241 = vpop.f32.mrf.mxu0
    %v4242 = vadd.f32 %v4199, %v4241
    %v4243 = vpop.f32.mrf.mxu0
    %v4244 = vadd.f32 %v4201, %v4243
    %4245 = vdwg.mxu0
    %4246 = vmatprep.subr.bf16.mxu0 0
    %4247 = vmatpush1.bf16.msra.mxu0 %v3595
    %4248 = vmatprep.subr.bf16.mxu0 0
    %4249 = vmatpush1.bf16.msra.mxu0 %v3588
    %4250 = vmatprep.subr.bf16.mxu0 0
    %4251 = vmatpush1.bf16.msra.mxu0 %v3581
    %4252 = vmatprep.subr.bf16.mxu0 0
    %4253 = vmatpush1.bf16.msra.mxu0 %v3574
    %4254 = vmatprep.subr.bf16.mxu0 0
    %4255 = vmatpush1.bf16.msra.mxu0 %v3567
    %4256 = vmatprep.subr.bf16.mxu0 0
    %4257 = vmatpush1.bf16.msra.mxu0 %v3560
    %4258 = vmatprep.subr.bf16.mxu0 0
    %4259 = vmatpush1.bf16.msra.mxu0 %v3553
    %4260 = vmatprep.subr.bf16.mxu0 0
    %4261 = vmatpush1.bf16.msra.mxu0 %v3546
    %4262 = vmatprep.subr.bf16.mxu0 0
    %4263 = vmatpush2.bf16.msra.mxu0 %v3651
    %4264 = vmatprep.subr.bf16.mxu0 0
    %4265 = vmatpush2.bf16.msra.mxu0 %v3644
    %4266 = vmatprep.subr.bf16.mxu0 0
    %4267 = vmatpush2.bf16.msra.mxu0 %v3637
    %4268 = vmatprep.subr.bf16.mxu0 0
    %4269 = vmatpush2.bf16.msra.mxu0 %v3630
    %4270 = vmatprep.subr.bf16.mxu0 0
    %4271 = vmatpush2.bf16.msra.mxu0 %v3623
    %4272 = vmatprep.subr.bf16.mxu0 0
    %4273 = vmatpush2.bf16.msra.mxu0 %v3616
    %4274 = vmatprep.subr.bf16.mxu0 0
    %4275 = vmatpush2.bf16.msra.mxu0 %v3609
    %4276 = vmatprep.subr.bf16.mxu0 0
    %4277 = vmatpush2.bf16.msra.mxu0 %v3602
    %4278 = vmatprep.mubr.bf16.mxu0 %v2540
    %4279 = vmatmul.mubr.bf16.gmra.mxu0 %v2539
    %v4280 = vpop.f32.mrf.mxu0
    %v4281 = vadd.f32 %v2828, %v4280
    %v4282 = vpop.f32.mrf.mxu0
    %v4283 = vpop.f32.mrf.mxu0
    %v4284 = vadd.f32 %v2828, %v4283
    %v4285 = vpop.f32.mrf.mxu0
    %4286 = vdwg.mxu0
    %4287 = vmatprep.subr.bf16.mxu0 0
    %4288 = vmatpush1.bf16.msra.mxu0 %v3707
    %4289 = vmatprep.subr.bf16.mxu0 0
    %4290 = vmatpush1.bf16.msra.mxu0 %v3700
    %4291 = vmatprep.subr.bf16.mxu0 0
    %4292 = vmatpush1.bf16.msra.mxu0 %v3693
    %4293 = vmatprep.subr.bf16.mxu0 0
    %4294 = vmatpush1.bf16.msra.mxu0 %v3686
    %4295 = vmatprep.subr.bf16.mxu0 0
    %4296 = vmatpush1.bf16.msra.mxu0 %v3679
    %4297 = vmatprep.subr.bf16.mxu0 0
    %4298 = vmatpush1.bf16.msra.mxu0 %v3672
    %4299 = vmatprep.subr.bf16.mxu0 0
    %4300 = vmatpush1.bf16.msra.mxu0 %v3665
    %4301 = vmatprep.subr.bf16.mxu0 0
    %4302 = vmatpush1.bf16.msra.mxu0 %v3658
    %4303 = vmatprep.subr.bf16.mxu0 0
    %4304 = vmatpush2.bf16.msra.mxu0 %v3763
    %4305 = vmatprep.subr.bf16.mxu0 0
    %4306 = vmatpush2.bf16.msra.mxu0 %v3756
    %4307 = vmatprep.subr.bf16.mxu0 0
    %4308 = vmatpush2.bf16.msra.mxu0 %v3749
    %4309 = vmatprep.subr.bf16.mxu0 0
    %4310 = vmatpush2.bf16.msra.mxu0 %v3742
    %4311 = vmatprep.subr.bf16.mxu0 0
    %4312 = vmatpush2.bf16.msra.mxu0 %v3735
    %4313 = vmatprep.subr.bf16.mxu0 0
    %4314 = vmatpush2.bf16.msra.mxu0 %v3728
    %4315 = vmatprep.subr.bf16.mxu0 0
    %4316 = vmatpush2.bf16.msra.mxu0 %v3721
    %4317 = vmatprep.subr.bf16.mxu0 0
    %4318 = vmatpush2.bf16.msra.mxu0 %v3714
    %4319 = vmatprep.mubr.bf16.mxu0 %v2542
    %4320 = vmatmul.mubr.bf16.gmra.mxu0 %v2541
    %v4321 = vpop.f32.mrf.mxu0
    %v4322 = vadd.f32 %v4281, %v4321
    %v4323 = vpop.f32.mrf.mxu0
    %v4324 = vpop.f32.mrf.mxu0
    %v4325 = vadd.f32 %v4284, %v4324
    %v4326 = vpop.f32.mrf.mxu0
    %4327 = vdwg.mxu0
    %v4328 = vxor.u32 %v4066, 2147483648
    %v4329 = vxor.u32 %v4068, 2147483648
    %v4330 = vxor.u32 %v4152, 2147483648
    %v4331 = vxor.u32 %v4154, 2147483648
    %v4332 = vxor.u32 %v4238, 2147483648
    %v4333 = vxor.u32 %v4240, 2147483648
    %v4334 = vxor.u32 %v4322, 2147483648
    %v4335 = vxor.u32 %v4070, 2147483648
    %v4336 = vxor.u32 %v4072, 2147483648
    %v4337 = vxor.u32 %v4156, 2147483648
    %v4338 = vxor.u32 %v4158, 2147483648
    %v4339 = vxor.u32 %v4242, 2147483648
    %v4340 = vxor.u32 %v4244, 2147483648
    %v4341 = vxor.u32 %v4325, 2147483648
    %v4342 = vmul.f32 %v4328, 1.442695
    %v4343 = vpow.pop %v4342
    %v4344 = vmul.f32 %v4329, 1.442695
    %v4345 = vpow.pop %v4344
    %v4346 = vmul.f32 %v4330, 1.442695
    %v4347 = vpow.pop %v4346
    %v4348 = vmul.f32 %v4331, 1.442695
    %v4349 = vpow.pop %v4348
    %v4350 = vmul.f32 %v4332, 1.442695
    %v4351 = vpow.pop %v4350
    %v4352 = vmul.f32 %v4333, 1.442695
    %v4353 = vpow.pop %v4352
    %v4354 = vmul.f32 %v4334, 1.442695
    %v4355 = vpow.pop %v4354
    %v4356 = vmul.f32 %v4335, 1.442695
    %v4357 = vpow.pop %v4356
    %v4358 = vmul.f32 %v4336, 1.442695
    %v4359 = vpow.pop %v4358
    %v4360 = vmul.f32 %v4337, 1.442695
    %v4361 = vpow.pop %v4360
    %v4362 = vmul.f32 %v4338, 1.442695
    %v4363 = vpow.pop %v4362
    %v4364 = vmul.f32 %v4339, 1.442695
    %v4365 = vpow.pop %v4364
    %v4366 = vmul.f32 %v4340, 1.442695
    %v4367 = vpow.pop %v4366
    %v4368 = vmul.f32 %v4341, 1.442695
    %v4369 = vpow.pop %v4368
    %v4370 = vadd.f32 %v4343, 1.0
    %v4371 = vadd.f32 %v4345, 1.0
    %v4372 = vadd.f32 %v4347, 1.0
    %v4373 = vadd.f32 %v4349, 1.0
    %v4374 = vadd.f32 %v4351, 1.0
    %v4375 = vadd.f32 %v4353, 1.0
    %v4376 = vadd.f32 %v4355, 1.0
    %v4377 = vadd.f32 %v4357, 1.0
    %v4378 = vadd.f32 %v4359, 1.0
    %v4379 = vadd.f32 %v4361, 1.0
    %v4380 = vadd.f32 %v4363, 1.0
    %v4381 = vadd.f32 %v4365, 1.0
    %v4382 = vadd.f32 %v4367, 1.0
    %v4383 = vadd.f32 %v4369, 1.0
    %v4384 = vrcp.pop %v4370
    %v4385 = vmul.f32 1.0, %v4384
    %v4386 = vrcp.pop %v4371
    %v4387 = vmul.f32 1.0, %v4386
    %v4388 = vrcp.pop %v4372
    %v4389 = vmul.f32 1.0, %v4388
    %v4390 = vrcp.pop %v4373
    %v4391 = vmul.f32 1.0, %v4390
    %v4392 = vrcp.pop %v4374
    %v4393 = vmul.f32 1.0, %v4392
    %v4394 = vrcp.pop %v4375
    %v4395 = vmul.f32 1.0, %v4394
    %v4396 = vrcp.pop %v4376
    %v4397 = vmul.f32 1.0, %v4396
    %v4398 = vrcp.pop %v4377
    %v4399 = vmul.f32 1.0, %v4398
    %v4400 = vrcp.pop %v4378
    %v4401 = vmul.f32 1.0, %v4400
    %v4402 = vrcp.pop %v4379
    %v4403 = vmul.f32 1.0, %v4402
    %v4404 = vrcp.pop %v4380
    %v4405 = vmul.f32 1.0, %v4404
    %v4406 = vrcp.pop %v4381
    %v4407 = vmul.f32 1.0, %v4406
    %v4408 = vrcp.pop %v4382
    %v4409 = vmul.f32 1.0, %v4408
    %v4410 = vrcp.pop %v4383
    %v4411 = vmul.f32 1.0, %v4410
    %4412 = vst [vmem:[#allocation13] sm:$0xff] %v4385
    %4413 = vst [vmem:[#allocation13 + $0x8] sm:$0xff] %v4387
    %4414 = vst [vmem:[#allocation13 + $0x10] sm:$0xff] %v4389
    %4415 = vst [vmem:[#allocation13 + $0x18] sm:$0xff] %v4391
    %4416 = vst [vmem:[#allocation13 + $0x20] sm:$0xff] %v4393
    %4417 = vst [vmem:[#allocation13 + $0x28] sm:$0xff] %v4395
    %4418 = vst [vmem:[#allocation13 + $0x30] sm:$0xff] %v4397
    %4419 = vst [vmem:[#allocation13 + $0x38] sm:$0xff] %v4399
    %4420 = vst [vmem:[#allocation13 + $0x40] sm:$0xff] %v4401
    %4421 = vst [vmem:[#allocation13 + $0x48] sm:$0xff] %v4403
    %4422 = vst [vmem:[#allocation13 + $0x50] sm:$0xff] %v4405
    %4423 = vst [vmem:[#allocation13 + $0x58] sm:$0xff] %v4407
    %4424 = vst [vmem:[#allocation13 + $0x60] sm:$0xff] %v4409
    %4425 = vst [vmem:[#allocation13 + $0x68] sm:$0xff] %v4411
    %4426 = vst [vmem:[#allocation14] sm:$0xff] %v2228
    %4427 = vst [vmem:[#allocation14 + $0x8] sm:$0xff] %v2229
    // Predicated region
    $region62: #{tpu_custom_call.1} parent=1 // pred_check
      _
    $region63: #{tpu_custom_call.1} parent=1 // pred_check_branch
      %4429 = sbr.rel (0) target = $region65
    $region64: #{tpu_custom_call.1} parent=1 // pred_region
      %s4431 = ssub.s32 1792, 1792
      %4432 = vsyncadd [#allocation4], %s4431
      %s4433 = sshll.u32 [#allocation13], 4
      %s4434 = int_to_ptr.vmem [resolvable:$true] %s4433
      %4439 = dma.vmem_to_hbm [thread:$0]  %s4434, 1792, %s9, [#allocation4], 896, 896, 56
    $region65: #{tpu_custom_call.1} parent=1 // pred_fallthru
      _
    // Predicated region
    $region66: #{tpu_custom_call.1} parent=1 // pred_check
      _
    $region67: #{tpu_custom_call.1} parent=1 // pred_check_branch
      %4441 = sbr.rel (0) target = $region69
    $region68: #{tpu_custom_call.1} parent=1 // pred_region
      %s4443 = ssub.s32 256, 256
      %4444 = vsyncadd [#allocation15], %s4443
      %s4445 = sshll.u32 [#allocation14], 4
      %s4446 = int_to_ptr.vmem [resolvable:$true] %s4445
      %4451 = dma.vmem_to_hbm [thread:$0]  %s4446, 256, %s10, [#allocation15], 128, 128, 8
    $region69: #{tpu_custom_call.1} parent=1 // pred_fallthru
      _
    // Predicated region
    $region70: #{tpu_custom_call.1} parent=1 // pred_check
      _
    $region71: #{tpu_custom_call.1} parent=1 // pred_check_branch
      %4453 = sbr.rel (0) target = $region73
    $region72: #{tpu_custom_call.1} parent=1 // pred_region
      %4454 = dma.done [#allocation4], 1792
    $region73: #{tpu_custom_call.1} parent=1 // pred_fallthru
      _
    // Predicated region
    $region74: #{tpu_custom_call.1} parent=1 // pred_check
      _
    $region75: #{tpu_custom_call.1} parent=1 // pred_check_branch
      %4456 = sbr.rel (0) target = $region77
    $region76: #{tpu_custom_call.1} parent=1 // pred_region
      %4457 = dma.done [#allocation15], 256
    $region77: #{tpu_custom_call.1} parent=1 // pred_fallthru
      _
    %4458 = vsyncpa [#allocation3], 1
    %4459 = vsyncpa [#allocation6], 1
    %4460 = vsyncpa [#allocation9], 1
    %4461 = vsyncpa [#allocation12], 1
    %4462 = vsyncpa [#allocation4], 1
    %4463 = vsyncpa [#allocation15], 1

</llo_original>
